<compile_context>
chip_gen: v5e
topology: v5e:2x2
jax: 0.10.0
libtpu: 0.0.40
codegen_flags: <defaults>
</compile_context>

<pallas_src>
import functools

import jax
import jax.numpy as jnp
import numpy as np
from jax.experimental import pallas as pl
from jax.experimental.pallas import tpu as pltpu


def _round_up(x, m):
    return (x + m - 1) // m * m


# ----------------------------------------------------------------------------
# Fused Pallas kernel (whole network per batch tile)
# ----------------------------------------------------------------------------
def _lenet5_kernel(x_ref, w1_ref, b1_ref, q1_ref, w2_ref, b2_ref, q2_ref,
                   w5_ref, b5_ref, w6_ref, b6_ref, w7_ref, b7_ref,
                   out_ref, pool1_ref, pool2_ref, *, bt):
    f32 = jnp.float32

    def sigmoid(v):
        # logistic(x) == 0.5*tanh(0.5*x) + 0.5 : one EUP tanh push, no divide.
        return 0.5 * jnp.tanh(0.5 * v) + 0.5

    # ---- conv1 (5x5, pad=2, Cin=1 -> Cout=6): one K=160 dot -----------------
    # Row shifts are lane-packed by the wrapper: x lanes = kh*32 + padded_col.
    # Output lanes = out_col*6 + out_chan (168 dense lanes).
    y1 = jnp.dot(x_ref[...], w1_ref[...], preferred_element_type=f32)
    y1 = sigmoid(y1 + b1_ref[...])                              # (28*bt, 168)

    # ---- pool2 (2x2 avg, fused) ---------------------------------------------
    # Width pool via lane matmul (0.25 factor folded, output padded to 128
    # lanes); height pool via row-block pair adds into VMEM scratch.
    y1 = jnp.dot(y1, q1_ref[...], preferred_element_type=f32)   # (28*bt, 128)
    for p in range(14):
        pool1_ref[p * bt:(p + 1) * bt, :] = (
            y1[(2 * p) * bt:(2 * p + 1) * bt, :]
            + y1[(2 * p + 1) * bt:(2 * p + 2) * bt, :])

    # ---- conv3 (5x5 valid, Cin=6 -> Cout=16): 5 banded K=128 dots -----------
    y2 = jnp.dot(pool1_ref[0:10 * bt, :], w2_ref[0],
                 preferred_element_type=f32)
    for kh in range(1, 5):
        y2 = y2 + jnp.dot(pool1_ref[kh * bt:(kh + 10) * bt, :], w2_ref[kh],
                          preferred_element_type=f32)
    y2 = sigmoid(y2 + b2_ref[...])                              # (10*bt, 160)

    # ---- pool4 (2x2 avg, fused) + NCHW flatten ------------------------------
    # Width pool -> 128 lanes, then height pool writes straight into the
    # lane-packed (bt, 5*128) flatten buffer consumed by linear5.
    y2 = jnp.dot(y2, q2_ref[...], preferred_element_type=f32)   # (10*bt, 128)
    for ip in range(5):
        pool2_ref[:, ip * 128:(ip + 1) * 128] = (
            y2[(2 * ip) * bt:(2 * ip + 1) * bt, :]
            + y2[(2 * ip + 1) * bt:(2 * ip + 2) * bt, :])

    # ---- linear5 (K=640) -> linear6 -> linear7 ------------------------------
    h = jnp.dot(pool2_ref[...], w5_ref[...], preferred_element_type=f32)
    h = sigmoid(h + b5_ref[...])
    h = sigmoid(jnp.dot(h, w6_ref[...], preferred_element_type=f32)
                + b6_ref[...])
    out = jnp.dot(h, w7_ref[...], preferred_element_type=f32) + b7_ref[...]
    out_ref[...] = out.astype(out_ref.dtype)


# ----------------------------------------------------------------------------
# Weight repacking (pure layout plumbing, done once under jit)
# ----------------------------------------------------------------------------
def _repack_params(params):
    f32 = jnp.float32
    w1, b1 = params["w1"].astype(f32), params["b1"].astype(f32)   # (6,1,5,5)
    w2, b2 = params["w2"].astype(f32), params["b2"].astype(f32)   # (16,6,5,5)
    w5, b5 = params["w5"].astype(f32), params["b5"].astype(f32)   # (120,400)
    w6, b6 = params["w6"].astype(f32), params["b6"].astype(f32)   # (84,120)
    w7, b7 = params["w7"].astype(f32), params["b7"].astype(f32)   # (10,84)

    # conv1 packed weights: w1p[kh*32 + a, j*6 + oc] = w1[oc,0,kh,a-j], 0<=a-j<5
    sel1 = (jnp.arange(32)[None, None, :]
            == jnp.arange(28)[:, None, None] + jnp.arange(5)[None, :, None])
    w1p = jnp.einsum('jwa,ohw->hajo', sel1.astype(f32),
                     w1[:, 0]).reshape(160, 168)
    b1t = jnp.tile(b1, 28)[None, :]                                  # (1,168)

    # conv3 banded weights: w2b[kh, a*6+ic, jo*16+oc] = w2[oc,ic,kh,a-jo];
    # rows zero-padded 84 -> 128 so the contraction is K=128-aligned.
    sel2 = (jnp.arange(14)[None, None, :]
            == jnp.arange(10)[:, None, None] + jnp.arange(5)[None, :, None])
    w2b = jnp.einsum('jwa,oihw->haijo', sel2.astype(f32),
                     w2).reshape(5, 84, 160)
    w2b = jnp.pad(w2b, ((0, 0), (0, 128 - 84), (0, 0)))              # (5,128,160)
    b2t = jnp.tile(b2, 10)[None, :]                                  # (1,160)

    # width-average matrices for the 2x2 pools (0.25 pool factor folded in),
    # output lanes zero-padded to 128 for unmasked, lane-dense scratch stores.
    def pool_cols(w_in, c, pad_to):
        cin = jnp.arange(w_in * c)
        cout = jnp.arange((w_in // 2) * c)
        keep = ((cin[:, None] % c == cout[None, :] % c)
                & (cin[:, None] // c // 2 == cout[None, :] // c))
        q = 0.25 * keep.astype(f32)
        return jnp.pad(q, ((0, 0), (0, pad_to - q.shape[1])))

    q1 = pool_cols(28, 6, 128)                                       # (168,128)
    q2 = pool_cols(10, 16, 128)                                      # (160,128)

    # linear5 with torch.nn.Flatten's NCHW (oc, ip, jp) ordering folded in;
    # rows zero-padded 80 -> 128 per pooled-row block, flattened to K=640.
    w5r = jnp.transpose(w5.reshape(120, 16, 5, 5),
                        (2, 3, 1, 0)).reshape(5, 80, 120)
    w5f = jnp.pad(w5r, ((0, 0), (0, 128 - 80), (0, 0))).reshape(640, 120)

    return (w1p, b1t, q1, w2b, b2t, q2, w5f, b5[None, :],
            w6.T, b6[None, :], w7.T, b7[None, :])


# ----------------------------------------------------------------------------
# Forward wrapper
# ----------------------------------------------------------------------------
def lenet5_forward(x, params, *, block_batch=32):
    """x: (B, 1, 28, 28) NCHW float32 -> logits (B, 10).

    block_batch: batch tile size (multiple of 8).  On v7x choose it so that
    ceil(B / block_batch) >= 2 to shard batch tiles across both TensorCores.
    """
    assert x.shape[1:] == (1, 28, 28), x.shape
    B = x.shape[0]
    bt = _round_up(min(block_batch, _round_up(B, 8)), 8)
    bp = _round_up(B, bt)
    t = bp // bt

    # Layout plumbing only: pad batch to a tile multiple, pad spatially by 2
    # (conv1 padding), lane-pack the 5 kernel-row shifts (lanes = kh*32 + col)
    # and interleave batch into rows (row = out_row * bt + batch_in_tile) so
    # every in-kernel slice is a contiguous static row block.
    xpad = jnp.pad(x[:, 0].astype(jnp.float32), ((0, bp - B), (2, 2), (2, 2)))
    ridx = jnp.arange(28)[:, None] + jnp.arange(5)[None, :]          # (28, 5)
    xp = xpad[:, ridx, :].reshape(bp, 28, 160)
    xp = xp.reshape(t, bt, 28, 160).transpose(0, 2, 1, 3).reshape(t * 28 * bt,
                                                                  160)

    ops = _repack_params(params)

    weight_specs = [pl.BlockSpec(a.shape, lambda i, nd=a.ndim: (0,) * nd)
                    for a in ops]

    grid_spec = pltpu.PrefetchScalarGridSpec(
        num_scalar_prefetch=0,
        grid=(t,),
        in_specs=[pl.BlockSpec((28 * bt, 160), lambda i: (i, 0))] + weight_specs,
        out_specs=pl.BlockSpec((bt, 10), lambda i: (i, 0)),
        scratch_shapes=[pltpu.VMEM((14 * bt, 128), jnp.float32),
                        pltpu.VMEM((bt, 640), jnp.float32)],
    )

    per_img_flops = 2 * (28 * 160 * 168 + 28 * 168 * 128 + 5 * 10 * 128 * 160
                         + 10 * 160 * 128 + 640 * 120 + 120 * 84 + 84 * 10)
    flops = bp * per_img_flops
    transc = bp * (28 * 168 + 10 * 160 + 120 + 84)
    bytes_acc = 4 * (xp.size + bp * 10 + sum(int(a.size) for a in ops))

    out = pl.pallas_call(
        functools.partial(_lenet5_kernel, bt=bt),
        out_shape=jax.ShapeDtypeStruct((bp, 10), jnp.float32),
        grid_spec=grid_spec,
        compiler_params=pltpu.CompilerParams(
            dimension_semantics=("parallel",)),
        cost_estimate=pl.CostEstimate(flops=flops, transcendentals=transc,
                                      bytes_accessed=bytes_acc),
    )(xp, *ops)
    return out[:B]


# ----------------------------------------------------------------------------
# Reference (pure JAX) for correctness check
# ----------------------------------------------------------------------------
def lenet5_reference(x, params):
    def conv(x, w, b, pad):
        y = jax.lax.conv_general_dilated(
            x, w, (1, 1), [(pad, pad), (pad, pad)],
            dimension_numbers=("NCHW", "OIHW", "NCHW"))
        return y + b[None, :, None, None]

    def pool(x):
        B, C, H, W = x.shape
        return x.reshape(B, C, H // 2, 2, W // 2, 2).mean(axis=(3, 5))

    y = pool(jax.nn.sigmoid(conv(x, params["w1"], params["b1"], 2)))
    y = pool(jax.nn.sigmoid(conv(y, params["w2"], params["b2"], 0)))
    y = y.reshape(x.shape[0], -1)
    y = jax.nn.sigmoid(y @ params["w5"].T + params["b5"])
    y = jax.nn.sigmoid(y @ params["w6"].T + params["b6"])
    return y @ params["w7"].T + params["b7"]


# ----------------------------------------------------------------------------
# Parameter init (deterministic, synthetic)
# ----------------------------------------------------------------------------
def init_params(key):
    def uniform(key, shape, fan_in):
        bound = 1.0 / np.sqrt(fan_in)
        return jax.random.uniform(key, shape, jnp.float32, -bound, bound)

    ks = jax.random.split(key, 10)
    return {
        "w1": uniform(ks[0], (6, 1, 5, 5), 1 * 5 * 5),
        "b1": uniform(ks[1], (6,), 1 * 5 * 5),
        "w2": uniform(ks[2], (16, 6, 5, 5), 6 * 5 * 5),
        "b2": uniform(ks[3], (16,), 6 * 5 * 5),
        "w5": uniform(ks[4], (120, 400), 400),
        "b5": uniform(ks[5], (120,), 400),
        "w6": uniform(ks[6], (84, 120), 120),
        "b6": uniform(ks[7], (84,), 120),
        "w7": uniform(ks[8], (10, 84), 84),
        "b7": uniform(ks[9], (10,), 84),
    }


if __name__ == "__main__":
    key = jax.random.PRNGKey(0)
    pkey, xkey, xkey2 = jax.random.split(key, 3)
    params = init_params(pkey)

    fwd = jax.jit(lenet5_forward)

    # LeNet-5 requires 28x28 spatial input so that the flatten is 5*5*16=400.
    x = jax.random.normal(xkey, (2, 1, 28, 28), jnp.float32)
    out = jax.block_until_ready(fwd(x, params))
    ref = jax.block_until_ready(lenet5_reference(x, params))
    assert out.shape == (2, 10), out.shape
    if not np.allclose(np.asarray(out), np.asarray(ref), atol=2e-3, rtol=2e-3):
        err = float(np.max(np.abs(np.asarray(out) - np.asarray(ref))))
        raise SystemExit("mismatch vs reference (max abs err = %g)" % err)

    # Second check exercising the multi-tile (grid t=2) path at block_batch=32.
    x2 = jax.random.normal(xkey2, (64, 1, 28, 28), jnp.float32)
    out2 = jax.block_until_ready(fwd(x2, params))
    ref2 = jax.block_until_ready(lenet5_reference(x2, params))
    assert out2.shape == (64, 10), out2.shape
    if not np.allclose(np.asarray(out2), np.asarray(ref2), atol=2e-3, rtol=2e-3):
        err = float(np.max(np.abs(np.asarray(out2) - np.asarray(ref2))))
        raise SystemExit("multi-tile mismatch vs reference (max abs err = %g)" % err)

    print("KERNEL_OK")
</pallas_src>

<mosaic_0001>
module attributes {stable_mosaic.version = 11 : i64} {
  func.func @_lenet5_kernel(%arg0: i32, %arg1: memref<224x160xf32, #tpu.memory_space<vmem>>, %arg2: memref<160x168xf32, #tpu.memory_space<vmem>>, %arg3: memref<1x168xf32, #tpu.memory_space<vmem>>, %arg4: memref<168x128xf32, #tpu.memory_space<vmem>>, %arg5: memref<5x128x160xf32, #tpu.memory_space<vmem>>, %arg6: memref<1x160xf32, #tpu.memory_space<vmem>>, %arg7: memref<160x128xf32, #tpu.memory_space<vmem>>, %arg8: memref<640x120xf32, #tpu.memory_space<vmem>>, %arg9: memref<1x120xf32, #tpu.memory_space<vmem>>, %arg10: memref<120x84xf32, #tpu.memory_space<vmem>>, %arg11: memref<1x84xf32, #tpu.memory_space<vmem>>, %arg12: memref<84x10xf32, #tpu.memory_space<vmem>>, %arg13: memref<1x10xf32, #tpu.memory_space<vmem>>, %arg14: memref<8x10xf32, #tpu.memory_space<vmem>>, %arg15: memref<112x128xf32, #tpu.memory_space<vmem>>, %arg16: memref<8x640xf32, #tpu.memory_space<vmem>>) attributes {dimension_semantics = [#tpu.dimension_semantics<parallel>], iteration_bounds = array<i64: 1>, scalar_prefetch = 0 : i64, scratch_operands = 2 : i64, tpu.core_type = #tpu.core_type<tc>, window_params = [{transform_indices = @transform_0, window_bounds = array<i64: 224, 160>}, {pipeline_mode = #tpu.pipeline_mode<synchronous>, transform_indices = @transform_1, window_bounds = array<i64: 160, 168>}, {pipeline_mode = #tpu.pipeline_mode<synchronous>, transform_indices = @transform_2, window_bounds = array<i64: 1, 168>}, {pipeline_mode = #tpu.pipeline_mode<synchronous>, transform_indices = @transform_3, window_bounds = array<i64: 168, 128>}, {pipeline_mode = #tpu.pipeline_mode<synchronous>, transform_indices = @transform_4, window_bounds = array<i64: 5, 128, 160>}, {pipeline_mode = #tpu.pipeline_mode<synchronous>, transform_indices = @transform_5, window_bounds = array<i64: 1, 160>}, {pipeline_mode = #tpu.pipeline_mode<synchronous>, transform_indices = @transform_6, window_bounds = array<i64: 160, 128>}, {pipeline_mode = #tpu.pipeline_mode<synchronous>, transform_indices = @transform_7, window_bounds = array<i64: 640, 120>}, {pipeline_mode = #tpu.pipeline_mode<synchronous>, transform_indices = @transform_8, window_bounds = array<i64: 1, 120>}, {pipeline_mode = #tpu.pipeline_mode<synchronous>, transform_indices = @transform_9, window_bounds = array<i64: 120, 84>}, {pipeline_mode = #tpu.pipeline_mode<synchronous>, transform_indices = @transform_10, window_bounds = array<i64: 1, 84>}, {pipeline_mode = #tpu.pipeline_mode<synchronous>, transform_indices = @transform_11, window_bounds = array<i64: 84, 10>}, {pipeline_mode = #tpu.pipeline_mode<synchronous>, transform_indices = @transform_12, window_bounds = array<i64: 1, 10>}, {transform_indices = @transform_13, window_bounds = array<i64: 8, 10>}]} {
    %c0 = arith.constant 0 : index
    %c0_0 = arith.constant 0 : index
    %0 = vector.load %arg1[%c0, %c0_0] : memref<224x160xf32, #tpu.memory_space<vmem>>, vector<224x160xf32>
    %c0_1 = arith.constant 0 : index
    %c0_2 = arith.constant 0 : index
    %1 = vector.load %arg2[%c0_1, %c0_2] : memref<160x168xf32, #tpu.memory_space<vmem>>, vector<160x168xf32>
    %cst = arith.constant dense<0.000000e+00> : vector<224x168xf32>
    %2 = tpu.matmul %0, %1, %cst {dimension_numbers = #tpu.dot_dimension_numbers<[1], [0], [0], [1], [0, 0, 1, 1], [], []>} : vector<224x160xf32>, vector<160x168xf32>, vector<224x168xf32> -> vector<224x168xf32>
    %c0_3 = arith.constant 0 : index
    %c0_4 = arith.constant 0 : index
    %3 = vector.load %arg3[%c0_3, %c0_4] : memref<1x168xf32, #tpu.memory_space<vmem>>, vector<1x168xf32>
    %4 = vector.broadcast %3 : vector<1x168xf32> to vector<224x168xf32>
    %5 = arith.addf %2, %4 : vector<224x168xf32>
    %cst_5 = arith.constant 5.000000e-01 : f32
    %6 = vector.broadcast %cst_5 : f32 to vector<224x168xf32>
    %7 = arith.mulf %6, %5 : vector<224x168xf32>
    %8 = math.tanh %7 : vector<224x168xf32>
    %cst_6 = arith.constant 5.000000e-01 : f32
    %9 = vector.broadcast %cst_6 : f32 to vector<224x168xf32>
    %10 = arith.mulf %9, %8 : vector<224x168xf32>
    %cst_7 = arith.constant 5.000000e-01 : f32
    %11 = vector.broadcast %cst_7 : f32 to vector<224x168xf32>
    %12 = arith.addf %10, %11 : vector<224x168xf32>
    %c0_8 = arith.constant 0 : index
    %c0_9 = arith.constant 0 : index
    %13 = vector.load %arg4[%c0_8, %c0_9] : memref<168x128xf32, #tpu.memory_space<vmem>>, vector<168x128xf32>
    %cst_10 = arith.constant dense<0.000000e+00> : vector<224x128xf32>
    %14 = tpu.matmul %12, %13, %cst_10 {dimension_numbers = #tpu.dot_dimension_numbers<[1], [0], [0], [1], [0, 0, 1, 1], [], []>} : vector<224x168xf32>, vector<168x128xf32>, vector<224x128xf32> -> vector<224x128xf32>
    %15 = vector.extract_strided_slice %14 {offsets = [0, 0], sizes = [8, 128], strides = [1, 1]} : vector<224x128xf32> to vector<8x128xf32>
    %16 = vector.extract_strided_slice %14 {offsets = [8, 0], sizes = [8, 128], strides = [1, 1]} : vector<224x128xf32> to vector<8x128xf32>
    %17 = arith.addf %15, %16 : vector<8x128xf32>
    %c0_11 = arith.constant 0 : index
    %c0_12 = arith.constant 0 : index
    %18 = vector.load %arg15[%c0_11, %c0_12] : memref<112x128xf32, #tpu.memory_space<vmem>>, vector<8x128xf32>
    tpu.vector_store %arg15[%c0_11, %c0_12], %17 {strides = array<i32>} : memref<112x128xf32, #tpu.memory_space<vmem>>, vector<8x128xf32>,
    %19 = vector.extract_strided_slice %14 {offsets = [16, 0], sizes = [8, 128], strides = [1, 1]} : vector<224x128xf32> to vector<8x128xf32>
    %20 = vector.extract_strided_slice %14 {offsets = [24, 0], sizes = [8, 128], strides = [1, 1]} : vector<224x128xf32> to vector<8x128xf32>
    %21 = arith.addf %19, %20 : vector<8x128xf32>
    %c8 = arith.constant 8 : index
    %c0_13 = arith.constant 0 : index
    %22 = vector.load %arg15[%c8, %c0_13] : memref<112x128xf32, #tpu.memory_space<vmem>>, vector<8x128xf32>
    tpu.vector_store %arg15[%c8, %c0_13], %21 {strides = array<i32>} : memref<112x128xf32, #tpu.memory_space<vmem>>, vector<8x128xf32>,
    %23 = vector.extract_strided_slice %14 {offsets = [32, 0], sizes = [8, 128], strides = [1, 1]} : vector<224x128xf32> to vector<8x128xf32>
    %24 = vector.extract_strided_slice %14 {offsets = [40, 0], sizes = [8, 128], strides = [1, 1]} : vector<224x128xf32> to vector<8x128xf32>
    %25 = arith.addf %23, %24 : vector<8x128xf32>
    %c16 = arith.constant 16 : index
    %c0_14 = arith.constant 0 : index
    %26 = vector.load %arg15[%c16, %c0_14] : memref<112x128xf32, #tpu.memory_space<vmem>>, vector<8x128xf32>
    tpu.vector_store %arg15[%c16, %c0_14], %25 {strides = array<i32>} : memref<112x128xf32, #tpu.memory_space<vmem>>, vector<8x128xf32>,
    %27 = vector.extract_strided_slice %14 {offsets = [48, 0], sizes = [8, 128], strides = [1, 1]} : vector<224x128xf32> to vector<8x128xf32>
    %28 = vector.extract_strided_slice %14 {offsets = [56, 0], sizes = [8, 128], strides = [1, 1]} : vector<224x128xf32> to vector<8x128xf32>
    %29 = arith.addf %27, %28 : vector<8x128xf32>
    %c24 = arith.constant 24 : index
    %c0_15 = arith.constant 0 : index
    %30 = vector.load %arg15[%c24, %c0_15] : memref<112x128xf32, #tpu.memory_space<vmem>>, vector<8x128xf32>
    tpu.vector_store %arg15[%c24, %c0_15], %29 {strides = array<i32>} : memref<112x128xf32, #tpu.memory_space<vmem>>, vector<8x128xf32>,
    %31 = vector.extract_strided_slice %14 {offsets = [64, 0], sizes = [8, 128], strides = [1, 1]} : vector<224x128xf32> to vector<8x128xf32>
    %32 = vector.extract_strided_slice %14 {offsets = [72, 0], sizes = [8, 128], strides = [1, 1]} : vector<224x128xf32> to vector<8x128xf32>
    %33 = arith.addf %31, %32 : vector<8x128xf32>
    %c32 = arith.constant 32 : index
    %c0_16 = arith.constant 0 : index
    %34 = vector.load %arg15[%c32, %c0_16] : memref<112x128xf32, #tpu.memory_space<vmem>>, vector<8x128xf32>
    tpu.vector_store %arg15[%c32, %c0_16], %33 {strides = array<i32>} : memref<112x128xf32, #tpu.memory_space<vmem>>, vector<8x128xf32>,
    %35 = vector.extract_strided_slice %14 {offsets = [80, 0], sizes = [8, 128], strides = [1, 1]} : vector<224x128xf32> to vector<8x128xf32>
    %36 = vector.extract_strided_slice %14 {offsets = [88, 0], sizes = [8, 128], strides = [1, 1]} : vector<224x128xf32> to vector<8x128xf32>
    %37 = arith.addf %35, %36 : vector<8x128xf32>
    %c40 = arith.constant 40 : index
    %c0_17 = arith.constant 0 : index
    %38 = vector.load %arg15[%c40, %c0_17] : memref<112x128xf32, #tpu.memory_space<vmem>>, vector<8x128xf32>
    tpu.vector_store %arg15[%c40, %c0_17], %37 {strides = array<i32>} : memref<112x128xf32, #tpu.memory_space<vmem>>, vector<8x128xf32>,
    %39 = vector.extract_strided_slice %14 {offsets = [96, 0], sizes = [8, 128], strides = [1, 1]} : vector<224x128xf32> to vector<8x128xf32>
    %40 = vector.extract_strided_slice %14 {offsets = [104, 0], sizes = [8, 128], strides = [1, 1]} : vector<224x128xf32> to vector<8x128xf32>
    %41 = arith.addf %39, %40 : vector<8x128xf32>
    %c48 = arith.constant 48 : index
    %c0_18 = arith.constant 0 : index
    %42 = vector.load %arg15[%c48, %c0_18] : memref<112x128xf32, #tpu.memory_space<vmem>>, vector<8x128xf32>
    tpu.vector_store %arg15[%c48, %c0_18], %41 {strides = array<i32>} : memref<112x128xf32, #tpu.memory_space<vmem>>, vector<8x128xf32>,
    %43 = vector.extract_strided_slice %14 {offsets = [112, 0], sizes = [8, 128], strides = [1, 1]} : vector<224x128xf32> to vector<8x128xf32>
    %44 = vector.extract_strided_slice %14 {offsets = [120, 0], sizes = [8, 128], strides = [1, 1]} : vector<224x128xf32> to vector<8x128xf32>
    %45 = arith.addf %43, %44 : vector<8x128xf32>
    %c56 = arith.constant 56 : index
    %c0_19 = arith.constant 0 : index
    %46 = vector.load %arg15[%c56, %c0_19] : memref<112x128xf32, #tpu.memory_space<vmem>>, vector<8x128xf32>
    tpu.vector_store %arg15[%c56, %c0_19], %45 {strides = array<i32>} : memref<112x128xf32, #tpu.memory_space<vmem>>, vector<8x128xf32>,
    %47 = vector.extract_strided_slice %14 {offsets = [128, 0], sizes = [8, 128], strides = [1, 1]} : vector<224x128xf32> to vector<8x128xf32>
    %48 = vector.extract_strided_slice %14 {offsets = [136, 0], sizes = [8, 128], strides = [1, 1]} : vector<224x128xf32> to vector<8x128xf32>
    %49 = arith.addf %47, %48 : vector<8x128xf32>
    %c64 = arith.constant 64 : index
    %c0_20 = arith.constant 0 : index
    %50 = vector.load %arg15[%c64, %c0_20] : memref<112x128xf32, #tpu.memory_space<vmem>>, vector<8x128xf32>
    tpu.vector_store %arg15[%c64, %c0_20], %49 {strides = array<i32>} : memref<112x128xf32, #tpu.memory_space<vmem>>, vector<8x128xf32>,
    %51 = vector.extract_strided_slice %14 {offsets = [144, 0], sizes = [8, 128], strides = [1, 1]} : vector<224x128xf32> to vector<8x128xf32>
    %52 = vector.extract_strided_slice %14 {offsets = [152, 0], sizes = [8, 128], strides = [1, 1]} : vector<224x128xf32> to vector<8x128xf32>
    %53 = arith.addf %51, %52 : vector<8x128xf32>
    %c72 = arith.constant 72 : index
    %c0_21 = arith.constant 0 : index
    %54 = vector.load %arg15[%c72, %c0_21] : memref<112x128xf32, #tpu.memory_space<vmem>>, vector<8x128xf32>
    tpu.vector_store %arg15[%c72, %c0_21], %53 {strides = array<i32>} : memref<112x128xf32, #tpu.memory_space<vmem>>, vector<8x128xf32>,
    %55 = vector.extract_strided_slice %14 {offsets = [160, 0], sizes = [8, 128], strides = [1, 1]} : vector<224x128xf32> to vector<8x128xf32>
    %56 = vector.extract_strided_slice %14 {offsets = [168, 0], sizes = [8, 128], strides = [1, 1]} : vector<224x128xf32> to vector<8x128xf32>
    %57 = arith.addf %55, %56 : vector<8x128xf32>
    %c80 = arith.constant 80 : index
    %c0_22 = arith.constant 0 : index
    %58 = vector.load %arg15[%c80, %c0_22] : memref<112x128xf32, #tpu.memory_space<vmem>>, vector<8x128xf32>
    tpu.vector_store %arg15[%c80, %c0_22], %57 {strides = array<i32>} : memref<112x128xf32, #tpu.memory_space<vmem>>, vector<8x128xf32>,
    %59 = vector.extract_strided_slice %14 {offsets = [176, 0], sizes = [8, 128], strides = [1, 1]} : vector<224x128xf32> to vector<8x128xf32>
    %60 = vector.extract_strided_slice %14 {offsets = [184, 0], sizes = [8, 128], strides = [1, 1]} : vector<224x128xf32> to vector<8x128xf32>
    %61 = arith.addf %59, %60 : vector<8x128xf32>
    %c88 = arith.constant 88 : index
    %c0_23 = arith.constant 0 : index
    %62 = vector.load %arg15[%c88, %c0_23] : memref<112x128xf32, #tpu.memory_space<vmem>>, vector<8x128xf32>
    tpu.vector_store %arg15[%c88, %c0_23], %61 {strides = array<i32>} : memref<112x128xf32, #tpu.memory_space<vmem>>, vector<8x128xf32>,
    %63 = vector.extract_strided_slice %14 {offsets = [192, 0], sizes = [8, 128], strides = [1, 1]} : vector<224x128xf32> to vector<8x128xf32>
    %64 = vector.extract_strided_slice %14 {offsets = [200, 0], sizes = [8, 128], strides = [1, 1]} : vector<224x128xf32> to vector<8x128xf32>
    %65 = arith.addf %63, %64 : vector<8x128xf32>
    %c96 = arith.constant 96 : index
    %c0_24 = arith.constant 0 : index
    %66 = vector.load %arg15[%c96, %c0_24] : memref<112x128xf32, #tpu.memory_space<vmem>>, vector<8x128xf32>
    tpu.vector_store %arg15[%c96, %c0_24], %65 {strides = array<i32>} : memref<112x128xf32, #tpu.memory_space<vmem>>, vector<8x128xf32>,
    %67 = vector.extract_strided_slice %14 {offsets = [208, 0], sizes = [8, 128], strides = [1, 1]} : vector<224x128xf32> to vector<8x128xf32>
    %68 = vector.extract_strided_slice %14 {offsets = [216, 0], sizes = [8, 128], strides = [1, 1]} : vector<224x128xf32> to vector<8x128xf32>
    %69 = arith.addf %67, %68 : vector<8x128xf32>
    %c104 = arith.constant 104 : index
    %c0_25 = arith.constant 0 : index
    %70 = vector.load %arg15[%c104, %c0_25] : memref<112x128xf32, #tpu.memory_space<vmem>>, vector<8x128xf32>
    tpu.vector_store %arg15[%c104, %c0_25], %69 {strides = array<i32>} : memref<112x128xf32, #tpu.memory_space<vmem>>, vector<8x128xf32>,
    %c0_26 = arith.constant 0 : index
    %c0_27 = arith.constant 0 : index
    %71 = vector.load %arg15[%c0_26, %c0_27] : memref<112x128xf32, #tpu.memory_space<vmem>>, vector<80x128xf32>
    %c0_28 = arith.constant 0 : index
    %c0_29 = arith.constant 0 : index
    %c0_30 = arith.constant 0 : index
    %72 = vector.load %arg5[%c0_28, %c0_29, %c0_30] : memref<5x128x160xf32, #tpu.memory_space<vmem>>, vector<1x128x160xf32>
    %73 = vector.shape_cast %72 : vector<1x128x160xf32> to vector<128x160xf32>
    %cst_31 = arith.constant dense<0.000000e+00> : vector<80x160xf32>
    %74 = tpu.matmul %71, %73, %cst_31 {dimension_numbers = #tpu.dot_dimension_numbers<[1], [0], [0], [1], [0, 0, 1, 1], [], []>} : vector<80x128xf32>, vector<128x160xf32>, vector<80x160xf32> -> vector<80x160xf32>
    %c8_32 = arith.constant 8 : index
    %c0_33 = arith.constant 0 : index
    %75 = vector.load %arg15[%c8_32, %c0_33] : memref<112x128xf32, #tpu.memory_space<vmem>>, vector<80x128xf32>
    %c1 = arith.constant 1 : index
    %c0_34 = arith.constant 0 : index
    %c0_35 = arith.constant 0 : index
    %76 = vector.load %arg5[%c1, %c0_34, %c0_35] : memref<5x128x160xf32, #tpu.memory_space<vmem>>, vector<1x128x160xf32>
    %77 = vector.shape_cast %76 : vector<1x128x160xf32> to vector<128x160xf32>
    %cst_36 = arith.constant dense<0.000000e+00> : vector<80x160xf32>
    %78 = tpu.matmul %75, %77, %cst_36 {dimension_numbers = #tpu.dot_dimension_numbers<[1], [0], [0], [1], [0, 0, 1, 1], [], []>} : vector<80x128xf32>, vector<128x160xf32>, vector<80x160xf32> -> vector<80x160xf32>
    %79 = arith.addf %74, %78 : vector<80x160xf32>
    %c16_37 = arith.constant 16 : index
    %c0_38 = arith.constant 0 : index
    %80 = vector.load %arg15[%c16_37, %c0_38] : memref<112x128xf32, #tpu.memory_space<vmem>>, vector<80x128xf32>
    %c2 = arith.constant 2 : index
    %c0_39 = arith.constant 0 : index
    %c0_40 = arith.constant 0 : index
    %81 = vector.load %arg5[%c2, %c0_39, %c0_40] : memref<5x128x160xf32, #tpu.memory_space<vmem>>, vector<1x128x160xf32>
    %82 = vector.shape_cast %81 : vector<1x128x160xf32> to vector<128x160xf32>
    %cst_41 = arith.constant dense<0.000000e+00> : vector<80x160xf32>
    %83 = tpu.matmul %80, %82, %cst_41 {dimension_numbers = #tpu.dot_dimension_numbers<[1], [0], [0], [1], [0, 0, 1, 1], [], []>} : vector<80x128xf32>, vector<128x160xf32>, vector<80x160xf32> -> vector<80x160xf32>
    %84 = arith.addf %79, %83 : vector<80x160xf32>
    %c24_42 = arith.constant 24 : index
    %c0_43 = arith.constant 0 : index
    %85 = vector.load %arg15[%c24_42, %c0_43] : memref<112x128xf32, #tpu.memory_space<vmem>>, vector<80x128xf32>
    %c3 = arith.constant 3 : index
    %c0_44 = arith.constant 0 : index
    %c0_45 = arith.constant 0 : index
    %86 = vector.load %arg5[%c3, %c0_44, %c0_45] : memref<5x128x160xf32, #tpu.memory_space<vmem>>, vector<1x128x160xf32>
    %87 = vector.shape_cast %86 : vector<1x128x160xf32> to vector<128x160xf32>
    %cst_46 = arith.constant dense<0.000000e+00> : vector<80x160xf32>
    %88 = tpu.matmul %85, %87, %cst_46 {dimension_numbers = #tpu.dot_dimension_numbers<[1], [0], [0], [1], [0, 0, 1, 1], [], []>} : vector<80x128xf32>, vector<128x160xf32>, vector<80x160xf32> -> vector<80x160xf32>
    %89 = arith.addf %84, %88 : vector<80x160xf32>
    %c32_47 = arith.constant 32 : index
    %c0_48 = arith.constant 0 : index
    %90 = vector.load %arg15[%c32_47, %c0_48] : memref<112x128xf32, #tpu.memory_space<vmem>>, vector<80x128xf32>
    %c4 = arith.constant 4 : index
    %c0_49 = arith.constant 0 : index
    %c0_50 = arith.constant 0 : index
    %91 = vector.load %arg5[%c4, %c0_49, %c0_50] : memref<5x128x160xf32, #tpu.memory_space<vmem>>, vector<1x128x160xf32>
    %92 = vector.shape_cast %91 : vector<1x128x160xf32> to vector<128x160xf32>
    %cst_51 = arith.constant dense<0.000000e+00> : vector<80x160xf32>
    %93 = tpu.matmul %90, %92, %cst_51 {dimension_numbers = #tpu.dot_dimension_numbers<[1], [0], [0], [1], [0, 0, 1, 1], [], []>} : vector<80x128xf32>, vector<128x160xf32>, vector<80x160xf32> -> vector<80x160xf32>
    %94 = arith.addf %89, %93 : vector<80x160xf32>
    %c0_52 = arith.constant 0 : index
    %c0_53 = arith.constant 0 : index
    %95 = vector.load %arg6[%c0_52, %c0_53] : memref<1x160xf32, #tpu.memory_space<vmem>>, vector<1x160xf32>
    %96 = vector.broadcast %95 : vector<1x160xf32> to vector<80x160xf32>
    %97 = arith.addf %94, %96 : vector<80x160xf32>
    %cst_54 = arith.constant 5.000000e-01 : f32
    %98 = vector.broadcast %cst_54 : f32 to vector<80x160xf32>
    %99 = arith.mulf %98, %97 : vector<80x160xf32>
    %100 = math.tanh %99 : vector<80x160xf32>
    %cst_55 = arith.constant 5.000000e-01 : f32
    %101 = vector.broadcast %cst_55 : f32 to vector<80x160xf32>
    %102 = arith.mulf %101, %100 : vector<80x160xf32>
    %cst_56 = arith.constant 5.000000e-01 : f32
    %103 = vector.broadcast %cst_56 : f32 to vector<80x160xf32>
    %104 = arith.addf %102, %103 : vector<80x160xf32>
    %c0_57 = arith.constant 0 : index
    %c0_58 = arith.constant 0 : index
    %105 = vector.load %arg7[%c0_57, %c0_58] : memref<160x128xf32, #tpu.memory_space<vmem>>, vector<160x128xf32>
    %cst_59 = arith.constant dense<0.000000e+00> : vector<80x128xf32>
    %106 = tpu.matmul %104, %105, %cst_59 {dimension_numbers = #tpu.dot_dimension_numbers<[1], [0], [0], [1], [0, 0, 1, 1], [], []>} : vector<80x160xf32>, vector<160x128xf32>, vector<80x128xf32> -> vector<80x128xf32>
    %107 = vector.extract_strided_slice %106 {offsets = [0, 0], sizes = [8, 128], strides = [1, 1]} : vector<80x128xf32> to vector<8x128xf32>
    %108 = vector.extract_strided_slice %106 {offsets = [8, 0], sizes = [8, 128], strides = [1, 1]} : vector<80x128xf32> to vector<8x128xf32>
    %109 = arith.addf %107, %108 : vector<8x128xf32>
    %c0_60 = arith.constant 0 : index
    %c0_61 = arith.constant 0 : index
    %110 = vector.load %arg16[%c0_60, %c0_61] : memref<8x640xf32, #tpu.memory_space<vmem>>, vector<8x128xf32>
    tpu.vector_store %arg16[%c0_60, %c0_61], %109 {strides = array<i32>} : memref<8x640xf32, #tpu.memory_space<vmem>>, vector<8x128xf32>,
    %111 = vector.extract_strided_slice %106 {offsets = [16, 0], sizes = [8, 128], strides = [1, 1]} : vector<80x128xf32> to vector<8x128xf32>
    %112 = vector.extract_strided_slice %106 {offsets = [24, 0], sizes = [8, 128], strides = [1, 1]} : vector<80x128xf32> to vector<8x128xf32>
    %113 = arith.addf %111, %112 : vector<8x128xf32>
    %c0_62 = arith.constant 0 : index
    %c128 = arith.constant 128 : index
    %114 = vector.load %arg16[%c0_62, %c128] : memref<8x640xf32, #tpu.memory_space<vmem>>, vector<8x128xf32>
    tpu.vector_store %arg16[%c0_62, %c128], %113 {strides = array<i32>} : memref<8x640xf32, #tpu.memory_space<vmem>>, vector<8x128xf32>,
    %115 = vector.extract_strided_slice %106 {offsets = [32, 0], sizes = [8, 128], strides = [1, 1]} : vector<80x128xf32> to vector<8x128xf32>
    %116 = vector.extract_strided_slice %106 {offsets = [40, 0], sizes = [8, 128], strides = [1, 1]} : vector<80x128xf32> to vector<8x128xf32>
    %117 = arith.addf %115, %116 : vector<8x128xf32>
    %c0_63 = arith.constant 0 : index
    %c256 = arith.constant 256 : index
    %118 = vector.load %arg16[%c0_63, %c256] : memref<8x640xf32, #tpu.memory_space<vmem>>, vector<8x128xf32>
    tpu.vector_store %arg16[%c0_63, %c256], %117 {strides = array<i32>} : memref<8x640xf32, #tpu.memory_space<vmem>>, vector<8x128xf32>,
    %119 = vector.extract_strided_slice %106 {offsets = [48, 0], sizes = [8, 128], strides = [1, 1]} : vector<80x128xf32> to vector<8x128xf32>
    %120 = vector.extract_strided_slice %106 {offsets = [56, 0], sizes = [8, 128], strides = [1, 1]} : vector<80x128xf32> to vector<8x128xf32>
    %121 = arith.addf %119, %120 : vector<8x128xf32>
    %c0_64 = arith.constant 0 : index
    %c384 = arith.constant 384 : index
    %122 = vector.load %arg16[%c0_64, %c384] : memref<8x640xf32, #tpu.memory_space<vmem>>, vector<8x128xf32>
    tpu.vector_store %arg16[%c0_64, %c384], %121 {strides = array<i32>} : memref<8x640xf32, #tpu.memory_space<vmem>>, vector<8x128xf32>,
    %123 = vector.extract_strided_slice %106 {offsets = [64, 0], sizes = [8, 128], strides = [1, 1]} : vector<80x128xf32> to vector<8x128xf32>
    %124 = vector.extract_strided_slice %106 {offsets = [72, 0], sizes = [8, 128], strides = [1, 1]} : vector<80x128xf32> to vector<8x128xf32>
    %125 = arith.addf %123, %124 : vector<8x128xf32>
    %c0_65 = arith.constant 0 : index
    %c512 = arith.constant 512 : index
    %126 = vector.load %arg16[%c0_65, %c512] : memref<8x640xf32, #tpu.memory_space<vmem>>, vector<8x128xf32>
    tpu.vector_store %arg16[%c0_65, %c512], %125 {strides = array<i32>} : memref<8x640xf32, #tpu.memory_space<vmem>>, vector<8x128xf32>,
    %c0_66 = arith.constant 0 : index
    %c0_67 = arith.constant 0 : index
    %127 = vector.load %arg16[%c0_66, %c0_67] : memref<8x640xf32, #tpu.memory_space<vmem>>, vector<8x640xf32>
    %c0_68 = arith.constant 0 : index
    %c0_69 = arith.constant 0 : index
    %128 = vector.load %arg8[%c0_68, %c0_69] : memref<640x120xf32, #tpu.memory_space<vmem>>, vector<640x120xf32>
    %cst_70 = arith.constant dense<0.000000e+00> : vector<8x120xf32>
    %129 = tpu.matmul %127, %128, %cst_70 {dimension_numbers = #tpu.dot_dimension_numbers<[1], [0], [0], [1], [0, 0, 1, 1], [], []>} : vector<8x640xf32>, vector<640x120xf32>, vector<8x120xf32> -> vector<8x120xf32>
    %c0_71 = arith.constant 0 : index
    %c0_72 = arith.constant 0 : index
    %130 = vector.load %arg9[%c0_71, %c0_72] : memref<1x120xf32, #tpu.memory_space<vmem>>, vector<1x120xf32>
    %131 = vector.broadcast %130 : vector<1x120xf32> to vector<8x120xf32>
    %132 = arith.addf %129, %131 : vector<8x120xf32>
    %cst_73 = arith.constant 5.000000e-01 : f32
    %133 = vector.broadcast %cst_73 : f32 to vector<8x120xf32>
    %134 = arith.mulf %133, %132 : vector<8x120xf32>
    %135 = math.tanh %134 : vector<8x120xf32>
    %cst_74 = arith.constant 5.000000e-01 : f32
    %136 = vector.broadcast %cst_74 : f32 to vector<8x120xf32>
    %137 = arith.mulf %136, %135 : vector<8x120xf32>
    %cst_75 = arith.constant 5.000000e-01 : f32
    %138 = vector.broadcast %cst_75 : f32 to vector<8x120xf32>
    %139 = arith.addf %137, %138 : vector<8x120xf32>
    %c0_76 = arith.constant 0 : index
    %c0_77 = arith.constant 0 : index
    %140 = vector.load %arg10[%c0_76, %c0_77] : memref<120x84xf32, #tpu.memory_space<vmem>>, vector<120x84xf32>
    %cst_78 = arith.constant dense<0.000000e+00> : vector<8x84xf32>
    %141 = tpu.matmul %139, %140, %cst_78 {dimension_numbers = #tpu.dot_dimension_numbers<[1], [0], [0], [1], [0, 0, 1, 1], [], []>} : vector<8x120xf32>, vector<120x84xf32>, vector<8x84xf32> -> vector<8x84xf32>
    %c0_79 = arith.constant 0 : index
    %c0_80 = arith.constant 0 : index
    %142 = vector.load %arg11[%c0_79, %c0_80] : memref<1x84xf32, #tpu.memory_space<vmem>>, vector<1x84xf32>
    %143 = vector.broadcast %142 : vector<1x84xf32> to vector<8x84xf32>
    %144 = arith.addf %141, %143 : vector<8x84xf32>
    %cst_81 = arith.constant 5.000000e-01 : f32
    %145 = vector.broadcast %cst_81 : f32 to vector<8x84xf32>
    %146 = arith.mulf %145, %144 : vector<8x84xf32>
    %147 = math.tanh %146 : vector<8x84xf32>
    %cst_82 = arith.constant 5.000000e-01 : f32
    %148 = vector.broadcast %cst_82 : f32 to vector<8x84xf32>
    %149 = arith.mulf %148, %147 : vector<8x84xf32>
    %cst_83 = arith.constant 5.000000e-01 : f32
    %150 = vector.broadcast %cst_83 : f32 to vector<8x84xf32>
    %151 = arith.addf %149, %150 : vector<8x84xf32>
    %c0_84 = arith.constant 0 : index
    %c0_85 = arith.constant 0 : index
    %152 = vector.load %arg12[%c0_84, %c0_85] : memref<84x10xf32, #tpu.memory_space<vmem>>, vector<84x10xf32>
    %cst_86 = arith.constant dense<0.000000e+00> : vector<8x10xf32>
    %153 = tpu.matmul %151, %152, %cst_86 {dimension_numbers = #tpu.dot_dimension_numbers<[1], [0], [0], [1], [0, 0, 1, 1], [], []>} : vector<8x84xf32>, vector<84x10xf32>, vector<8x10xf32> -> vector<8x10xf32>
    %c0_87 = arith.constant 0 : index
    %c0_88 = arith.constant 0 : index
    %154 = vector.load %arg13[%c0_87, %c0_88] : memref<1x10xf32, #tpu.memory_space<vmem>>, vector<1x10xf32>
    %155 = vector.broadcast %154 : vector<1x10xf32> to vector<8x10xf32>
    %156 = arith.addf %153, %155 : vector<8x10xf32>
    %c0_89 = arith.constant 0 : index
    %c0_90 = arith.constant 0 : index
    %157 = vector.load %arg14[%c0_89, %c0_90] : memref<8x10xf32, #tpu.memory_space<vmem>>, vector<8x10xf32>
    tpu.vector_store %arg14[%c0_89, %c0_90], %156 {strides = array<i32>} : memref<8x10xf32, #tpu.memory_space<vmem>>, vector<8x10xf32>,
    return
  }
  func.func @transform_0(%arg0: i32) -> (i32, i32) {
    %c0_i32 = arith.constant 0 : i32
    %c0_i32_0 = arith.constant 0 : i32
    return %arg0, %c0_i32 : i32, i32
  }
  func.func @transform_1(%arg0: i32) -> (i32, i32) {
    %c0_i32 = arith.constant 0 : i32
    %c0_i32_0 = arith.constant 0 : i32
    %c0_i32_1 = arith.constant 0 : i32
    return %c0_i32, %c0_i32_0 : i32, i32
  }
  func.func @transform_2(%arg0: i32) -> (i32, i32) {
    %c0_i32 = arith.constant 0 : i32
    %c0_i32_0 = arith.constant 0 : i32
    %c0_i32_1 = arith.constant 0 : i32
    return %c0_i32, %c0_i32_0 : i32, i32
  }
  func.func @transform_3(%arg0: i32) -> (i32, i32) {
    %c0_i32 = arith.constant 0 : i32
    %c0_i32_0 = arith.constant 0 : i32
    %c0_i32_1 = arith.constant 0 : i32
    return %c0_i32, %c0_i32_0 : i32, i32
  }
  func.func @transform_4(%arg0: i32) -> (i32, i32, i32) {
    %c0_i32 = arith.constant 0 : i32
    %c0_i32_0 = arith.constant 0 : i32
    %c0_i32_1 = arith.constant 0 : i32
    %c0_i32_2 = arith.constant 0 : i32
    return %c0_i32, %c0_i32_0, %c0_i32_1 : i32, i32, i32
  }
  func.func @transform_5(%arg0: i32) -> (i32, i32) {
    %c0_i32 = arith.constant 0 : i32
    %c0_i32_0 = arith.constant 0 : i32
    %c0_i32_1 = arith.constant 0 : i32
    return %c0_i32, %c0_i32_0 : i32, i32
  }
  func.func @transform_6(%arg0: i32) -> (i32, i32) {
    %c0_i32 = arith.constant 0 : i32
    %c0_i32_0 = arith.constant 0 : i32
    %c0_i32_1 = arith.constant 0 : i32
    return %c0_i32, %c0_i32_0 : i32, i32
  }
  func.func @transform_7(%arg0: i32) -> (i32, i32) {
    %c0_i32 = arith.constant 0 : i32
    %c0_i32_0 = arith.constant 0 : i32
    %c0_i32_1 = arith.constant 0 : i32
    return %c0_i32, %c0_i32_0 : i32, i32
  }
  func.func @transform_8(%arg0: i32) -> (i32, i32) {
    %c0_i32 = arith.constant 0 : i32
    %c0_i32_0 = arith.constant 0 : i32
    %c0_i32_1 = arith.constant 0 : i32
    return %c0_i32, %c0_i32_0 : i32, i32
  }
  func.func @transform_9(%arg0: i32) -> (i32, i32) {
    %c0_i32 = arith.constant 0 : i32
    %c0_i32_0 = arith.constant 0 : i32
    %c0_i32_1 = arith.constant 0 : i32
    return %c0_i32, %c0_i32_0 : i32, i32
  }
  func.func @transform_10(%arg0: i32) -> (i32, i32) {
    %c0_i32 = arith.constant 0 : i32
    %c0_i32_0 = arith.constant 0 : i32
    %c0_i32_1 = arith.constant 0 : i32
    return %c0_i32, %c0_i32_0 : i32, i32
  }
  func.func @transform_11(%arg0: i32) -> (i32, i32) {
    %c0_i32 = arith.constant 0 : i32
    %c0_i32_0 = arith.constant 0 : i32
    %c0_i32_1 = arith.constant 0 : i32
    return %c0_i32, %c0_i32_0 : i32, i32
  }
  func.func @transform_12(%arg0: i32) -> (i32, i32) {
    %c0_i32 = arith.constant 0 : i32
    %c0_i32_0 = arith.constant 0 : i32
    %c0_i32_1 = arith.constant 0 : i32
    return %c0_i32, %c0_i32_0 : i32, i32
  }
  func.func @transform_13(%arg0: i32) -> (i32, i32) {
    %c0_i32 = arith.constant 0 : i32
    %c0_i32_0 = arith.constant 0 : i32
    return %arg0, %c0_i32 : i32, i32
  }
}

</mosaic_0001>

<llo_original>
// kernel: tile.13
$region0: #{tile.13}
  #allocation0 [shape = 's32[1]{0}', space=sflag, size = 0x4, scoped, tag = 'scoped memory for tile.13']
  %s0 = inlined_call_operand.vmem [shape: f32[6], index: 0, kind: input, shape index: {}]
  %s1 = inlined_call_operand.vmem [shape: f32[28,6], index: 1, kind: output, shape index: {}]
  // Predicated region
  $region2: #{tile.13} parent=0 // pred_check
    _
  $region3: #{tile.13} parent=0 // pred_check_branch
    %3 = sbr.rel (0) target = $region5
  $region4: #{tile.13} parent=0 // pred_region
    _
  $region5: #{tile.13} parent=0 // pred_fallthru
    _
  %v4 = vld [vmem:[%s0] ss:$0 sm:$0xff]
  %5 = vst [vmem:[%s1] sm:$0xff] %v4
  %s6 = scalar_lea.vmem %s1, 8
  %7 = vst [vmem:[%s6] sm:$0xff] %v4
  %s8 = scalar_lea.vmem %s1, 16
  %9 = vst [vmem:[%s8] sm:$0xff] %v4
  %s10 = scalar_lea.vmem %s1, 24
  %11 = vst [vmem:[%s10] sm:$0xff] %v4

// kernel: tile.14
$region0: #{tile.14}
  %s0 = inlined_call_operand.vmem [shape: f32[28,6], index: 0, kind: input, shape index: {}]
  %s1 = inlined_call_operand.vmem [shape: f32[1,168], index: 1, kind: output, shape index: {}]
  $region1: #{tile.14} parent=0
    #allocation0 [shape = 'u8[8192]{0}', space=vmem, size = 0x2000, scoped, tag = 'scoped mem for output reshape']
    %v2 = vld [vmem:[%s0] sm:$0x1]
    %vm3 = vcmask 48128
    %4 = vst.msk [vmem:[#allocation0] sm:$0x1] %vm3, %v2
    %s5 = scalar_lea.vmem %s0, 21
    %v6 = vld [vmem:[%s5] sm:$0x1]
    %s7 = scalar_lea.vmem %s0, 21
    %v8 = vld [vmem:[%s7] sm:$0x1]
    %vm9 = vcmask 15360
    %v10 = vsel %vm9, %v8, %v6
    %11 = vrot.lane.b32.xlu0 %v10, 126
    %v12 = vpop.permute.xlu0 %11
    %vm13 = vcmask 31744
    %s14 = scalar_lea.vmem [#allocation0], 8
    %15 = vst.msk [vmem:[%s14] sm:$0x1] %vm13, %v12
    %vm16 = vcmask 1048560
    %17 = vst.msk [vmem:[#allocation0] sm:$0x1] %vm16, %v12
    %s18 = scalar_lea.vmem %s0, 20
    %v19 = vld [vmem:[%s18] sm:$0x1]
    %20 = vrot.lane.b32.xlu0 %v19, 120
    %v21 = vpop.permute.xlu0 %20
    %vm22 = vcmask 1032128
    %23 = vst.msk [vmem:[#allocation0] sm:$0x1] %vm22, %v21
    %s24 = scalar_lea.vmem %s0, 19
    %v25 = vld [vmem:[%s24] sm:$0x1]
    %26 = vrot.lane.b32.xlu0 %v25, 114
    %v27 = vpop.permute.xlu0 %26
    %vm28 = vcmask 982928
    %29 = vst.msk [vmem:[#allocation0] sm:$0x1] %vm28, %v27
    %s30 = scalar_lea.vmem %s0, 18
    %v31 = vld [vmem:[%s30] sm:$0x1]
    %32 = vrot.lane.b32.xlu0 %v31, 108
    %v33 = vpop.permute.xlu0 %32
    %vm34 = vcmask 933728
    %35 = vst.msk [vmem:[#allocation0] sm:$0x1] %vm34, %v33
    %s36 = scalar_lea.vmem %s0, 17
    %v37 = vld [vmem:[%s36] sm:$0x1]
    %38 = vrot.lane.b32.xlu0 %v37, 102
    %v39 = vpop.permute.xlu0 %38
    %vm40 = vcmask 884528
    %41 = vst.msk [vmem:[#allocation0] sm:$0x1] %vm40, %v39
    %s42 = scalar_lea.vmem %s0, 16
    %v43 = vld [vmem:[%s42] sm:$0x1]
    %44 = vrot.lane.b32.xlu0 %v43, 96
    %v45 = vpop.permute.xlu0 %44
    %vm46 = vcmask 835328
    %47 = vst.msk [vmem:[#allocation0] sm:$0x1] %vm46, %v45
    %s48 = scalar_lea.vmem %s0, 15
    %v49 = vld [vmem:[%s48] sm:$0x1]
    %50 = vrot.lane.b32.xlu0 %v49, 90
    %v51 = vpop.permute.xlu0 %50
    %vm52 = vcmask 786128
    %53 = vst.msk [vmem:[#allocation0] sm:$0x1] %vm52, %v51
    %s54 = scalar_lea.vmem %s0, 14
    %v55 = vld [vmem:[%s54] sm:$0x1]
    %56 = vrot.lane.b32.xlu0 %v55, 84
    %v57 = vpop.permute.xlu0 %56
    %vm58 = vcmask 736928
    %59 = vst.msk [vmem:[#allocation0] sm:$0x1] %vm58, %v57
    %s60 = scalar_lea.vmem %s0, 13
    %v61 = vld [vmem:[%s60] sm:$0x1]
    %62 = vrot.lane.b32.xlu0 %v61, 78
    %v63 = vpop.permute.xlu0 %62
    %vm64 = vcmask 687728
    %65 = vst.msk [vmem:[#allocation0] sm:$0x1] %vm64, %v63
    %s66 = scalar_lea.vmem %s0, 12
    %v67 = vld [vmem:[%s66] sm:$0x1]
    %68 = vrot.lane.b32.xlu0 %v67, 72
    %v69 = vpop.permute.xlu0 %68
    %vm70 = vcmask 638528
    %71 = vst.msk [vmem:[#allocation0] sm:$0x1] %vm70, %v69
    %s72 = scalar_lea.vmem %s0, 11
    %v73 = vld [vmem:[%s72] sm:$0x1]
    %74 = vrot.lane.b32.xlu0 %v73, 66
    %v75 = vpop.permute.xlu0 %74
    %vm76 = vcmask 589328
    %77 = vst.msk [vmem:[#allocation0] sm:$0x1] %vm76, %v75
    %s78 = scalar_lea.vmem %s0, 10
    %v79 = vld [vmem:[%s78] sm:$0x1]
    %80 = vrot.lane.b32.xlu0 %v79, 60
    %v81 = vpop.permute.xlu0 %80
    %vm82 = vcmask 540128
    %83 = vst.msk [vmem:[#allocation0] sm:$0x1] %vm82, %v81
    %s84 = scalar_lea.vmem %s0, 9
    %v85 = vld [vmem:[%s84] sm:$0x1]
    %86 = vrot.lane.b32.xlu0 %v85, 54
    %v87 = vpop.permute.xlu0 %86
    %vm88 = vcmask 490928
    %89 = vst.msk [vmem:[#allocation0] sm:$0x1] %vm88, %v87
    %s90 = scalar_lea.vmem %s0, 8
    %v91 = vld [vmem:[%s90] sm:$0x1]
    %92 = vrot.lane.b32.xlu0 %v91, 48
    %v93 = vpop.permute.xlu0 %92
    %vm94 = vcmask 441728
    %95 = vst.msk [vmem:[#allocation0] sm:$0x1] %vm94, %v93
    %s96 = scalar_lea.vmem %s0, 7
    %v97 = vld [vmem:[%s96] sm:$0x1]
    %98 = vrot.lane.b32.xlu0 %v97, 42
    %v99 = vpop.permute.xlu0 %98
    %vm100 = vcmask 392528
    %101 = vst.msk [vmem:[#allocation0] sm:$0x1] %vm100, %v99
    %s102 = scalar_lea.vmem %s0, 6
    %v103 = vld [vmem:[%s102] sm:$0x1]
    %104 = vrot.lane.b32.xlu0 %v103, 36
    %v105 = vpop.permute.xlu0 %104
    %vm106 = vcmask 343328
    %107 = vst.msk [vmem:[#allocation0] sm:$0x1] %vm106, %v105
    %s108 = scalar_lea.vmem %s0, 27
    %v109 = vld [vmem:[%s108] sm:$0x1]
    %110 = vrot.lane.b32.xlu0 %v109, 34
    %v111 = vpop.permute.xlu0 %110
    %vm112 = vcmask 326928
    %s113 = scalar_lea.vmem [#allocation0], 8
    %114 = vst.msk [vmem:[%s113] sm:$0x1] %vm112, %v111
    %s115 = scalar_lea.vmem %s0, 5
    %v116 = vld [vmem:[%s115] sm:$0x1]
    %117 = vrot.lane.b32.xlu0 %v116, 30
    %v118 = vpop.permute.xlu0 %117
    %vm119 = vcmask 294128
    %120 = vst.msk [vmem:[#allocation0] sm:$0x1] %vm119, %v118
    %s121 = scalar_lea.vmem %s0, 26
    %v122 = vld [vmem:[%s121] sm:$0x1]
    %123 = vrot.lane.b32.xlu0 %v122, 28
    %v124 = vpop.permute.xlu0 %123
    %vm125 = vcmask 277728
    %s126 = scalar_lea.vmem [#allocation0], 8
    %127 = vst.msk [vmem:[%s126] sm:$0x1] %vm125, %v124
    %s128 = scalar_lea.vmem %s0, 4
    %v129 = vld [vmem:[%s128] sm:$0x1]
    %130 = vrot.lane.b32.xlu0 %v129, 24
    %v131 = vpop.permute.xlu0 %130
    %vm132 = vcmask 244928
    %133 = vst.msk [vmem:[#allocation0] sm:$0x1] %vm132, %v131
    %s134 = scalar_lea.vmem %s0, 25
    %v135 = vld [vmem:[%s134] sm:$0x1]
    %136 = vrot.lane.b32.xlu0 %v135, 22
    %v137 = vpop.permute.xlu0 %136
    %vm138 = vcmask 228528
    %s139 = scalar_lea.vmem [#allocation0], 8
    %140 = vst.msk [vmem:[%s139] sm:$0x1] %vm138, %v137
    %s141 = scalar_lea.vmem %s0, 3
    %v142 = vld [vmem:[%s141] sm:$0x1]
    %143 = vrot.lane.b32.xlu0 %v142, 18
    %v144 = vpop.permute.xlu0 %143
    %vm145 = vcmask 195728
    %146 = vst.msk [vmem:[#allocation0] sm:$0x1] %vm145, %v144
    %s147 = scalar_lea.vmem %s0, 24
    %v148 = vld [vmem:[%s147] sm:$0x1]
    %149 = vrot.lane.b32.xlu0 %v148, 16
    %v150 = vpop.permute.xlu0 %149
    %vm151 = vcmask 179328
    %s152 = scalar_lea.vmem [#allocation0], 8
    %153 = vst.msk [vmem:[%s152] sm:$0x1] %vm151, %v150
    %s154 = scalar_lea.vmem %s0, 2
    %v155 = vld [vmem:[%s154] sm:$0x1]
    %156 = vrot.lane.b32.xlu0 %v155, 12
    %v157 = vpop.permute.xlu0 %156
    %vm158 = vcmask 146528
    %159 = vst.msk [vmem:[#allocation0] sm:$0x1] %vm158, %v157
    %s160 = scalar_lea.vmem %s0, 23
    %v161 = vld [vmem:[%s160] sm:$0x1]
    %162 = vrot.lane.b32.xlu0 %v161, 10
    %v163 = vpop.permute.xlu0 %162
    %vm164 = vcmask 130128
    %s165 = scalar_lea.vmem [#allocation0], 8
    %166 = vst.msk [vmem:[%s165] sm:$0x1] %vm164, %v163
    %s167 = scalar_lea.vmem %s0, 1
    %v168 = vld [vmem:[%s167] sm:$0x1]
    %169 = vrot.lane.b32.xlu0 %v168, 6
    %v170 = vpop.permute.xlu0 %169
    %vm171 = vcmask 97328
    %172 = vst.msk [vmem:[#allocation0] sm:$0x1] %vm171, %v170
    %s173 = scalar_lea.vmem %s0, 22
    %v174 = vld [vmem:[%s173] sm:$0x1]
    %175 = vrot.lane.b32.xlu0 %v174, 4
    %v176 = vpop.permute.xlu0 %175
    %vm177 = vcmask 80928
    %s178 = scalar_lea.vmem [#allocation0], 8
    %179 = vst.msk [vmem:[%s178] sm:$0x1] %vm177, %v176
    %s181 = ssub.s32 2, 1
    %v182 = vld [vmem:[#allocation0] sm:%s181]
    %s184 = ssub.s32 2, 1
    %185 = vst [vmem:[%s1] sm:%s184] %v182
    %s186 = scalar_lea.vmem [#allocation0], 8
    %v187 = vld [vmem:[%s186] sm:%s181]
    %s189 = ssub.s32 2, 1
    %s190 = scalar_lea.vmem %s1, 1
    %191 = vst [vmem:[%s190] sm:%s189] %v187

// kernel: tile.18
$region0: #{tile.18}
  #allocation0 [shape = 's32[1]{0}', space=sflag, size = 0x4, scoped, tag = 'scoped memory for tile.18']
  %s0 = inlined_call_operand.vmem [shape: f32[16], index: 0, kind: input, shape index: {}]
  %s1 = inlined_call_operand.vmem [shape: f32[10,16], index: 1, kind: output, shape index: {}]
  // Predicated region
  $region2: #{tile.18} parent=0 // pred_check
    _
  $region3: #{tile.18} parent=0 // pred_check_branch
    %3 = sbr.rel (0) target = $region5
  $region4: #{tile.18} parent=0 // pred_region
    _
  $region5: #{tile.18} parent=0 // pred_fallthru
    _
  %v4 = vld [vmem:[%s0] ss:$0 sm:$0xff]
  %5 = vst [vmem:[%s1] sm:$0xff] %v4
  %s6 = scalar_lea.vmem %s1, 8
  %7 = vst [vmem:[%s6] sm:$0xff] %v4

// kernel: tile.19
$region0: #{tile.19}
  %s0 = inlined_call_operand.vmem [shape: f32[10,16], index: 0, kind: input, shape index: {}]
  %s1 = inlined_call_operand.vmem [shape: f32[1,160], index: 1, kind: output, shape index: {}]
  $region1: #{tile.19} parent=0
    #allocation0 [shape = 'u8[8192]{0}', space=vmem, size = 0x2000, scoped, tag = 'scoped mem for output reshape']
    %s2 = smov 3
    %v3 = vld [vmem:[%s0] ss:$8 sm:%s2]
    %vm4 = vcmask 130048
    %5 = vst.msk [vmem:[#allocation0] ss:$8 sm:$0x3] %vm4, %v3
    %s6 = scalar_lea.vmem %s0, 7
    %v7 = vld [vmem:[%s6] sm:$0x1]
    %8 = vrot.lane.b32.xlu0 %v7, 112
    %v9 = vpop.permute.xlu0 %8
    %vm10 = vcmask 1048448
    %11 = vst.msk [vmem:[#allocation0] sm:$0x1] %vm10, %v9
    %s12 = scalar_lea.vmem %s0, 6
    %v13 = vld [vmem:[%s12] sm:$0x1]
    %14 = vrot.lane.b32.xlu0 %v13, 96
    %v15 = vpop.permute.xlu0 %14
    %vm16 = vcmask 917248
    %17 = vst.msk [vmem:[#allocation0] sm:$0x1] %vm16, %v15
    %s18 = scalar_lea.vmem %s0, 5
    %v19 = vld [vmem:[%s18] sm:$0x1]
    %20 = vrot.lane.b32.xlu0 %v19, 80
    %v21 = vpop.permute.xlu0 %20
    %vm22 = vcmask 786048
    %23 = vst.msk [vmem:[#allocation0] sm:$0x1] %vm22, %v21
    %s24 = scalar_lea.vmem %s0, 4
    %v25 = vld [vmem:[%s24] sm:$0x1]
    %26 = vrot.lane.b32.xlu0 %v25, 64
    %v27 = vpop.permute.xlu0 %26
    %vm28 = vcmask 654848
    %29 = vst.msk [vmem:[#allocation0] sm:$0x1] %vm28, %v27
    %s30 = scalar_lea.vmem %s0, 3
    %v31 = vld [vmem:[%s30] sm:$0x1]
    %32 = vrot.lane.b32.xlu0 %v31, 48
    %v33 = vpop.permute.xlu0 %32
    %vm34 = vcmask 523648
    %35 = vst.msk [vmem:[#allocation0] sm:$0x1] %vm34, %v33
    %s36 = scalar_lea.vmem %s0, 2
    %v37 = vld [vmem:[%s36] sm:$0x1]
    %38 = vrot.lane.b32.xlu0 %v37, 32
    %v39 = vpop.permute.xlu0 %38
    %vm40 = vcmask 392448
    %41 = vst.msk [vmem:[#allocation0] sm:$0x1] %vm40, %v39
    %s42 = scalar_lea.vmem %s0, 1
    %s43 = smov 3
    %v44 = vld [vmem:[%s42] ss:$8 sm:%s43]
    %45 = vrot.lane.b32.xlu0 %v44, 16
    %v46 = vpop.permute.xlu0 %45
    %vm47 = vcmask 261248
    %48 = vst.msk [vmem:[#allocation0] ss:$8 sm:$0x3] %vm47, %v46
    %s50 = ssub.s32 2, 1
    %v51 = vld [vmem:[#allocation0] sm:%s50]
    %s53 = ssub.s32 2, 1
    %54 = vst [vmem:[%s1] sm:%s53] %v51
    %s55 = scalar_lea.vmem [#allocation0], 8
    %v56 = vld [vmem:[%s55] sm:%s50]
    %s58 = ssub.s32 2, 1
    %s59 = scalar_lea.vmem %s1, 1
    %60 = vst [vmem:[%s59] sm:%s58] %v56

// kernel: lenet5_forward.1
$region0: #{lenet5_forward.1}
  #allocation0 [shape = 'u32[]', space=smem, size = 0x4, offset = 0x4, fixed_abs, tag = 'smem constant byte address 0x4 - core index']
  #allocation1 [shape = 'u32[72,128]{1,0:T(1,128)}', space=vmem, size = 0x9000, scoped, tag = 'internal scratch']
  #allocation2 [shape = 'f32[112,128]{1,0:T(8,128)}', space=vmem, size = 0xe000, scoped, tag = 'scratch operand']
  #allocation3 [shape = 'f32[8,640]{1,0:T(8,128)}', space=vmem, size = 0x5000, scoped, tag = 'scratch operand']
  %s0 = inlined_call_operand.vmem [shape: f32[224,160], index: 0, kind: input, shape index: {}]
  %s1 = inlined_call_operand.vmem [shape: f32[160,168], index: 1, kind: input, shape index: {}]
  %s2 = inlined_call_operand.vmem [shape: f32[1,168], index: 2, kind: input, shape index: {}]
  %s3 = inlined_call_operand.vmem [shape: f32[168,128], index: 3, kind: input, shape index: {}]
  %s4 = inlined_call_operand.vmem [shape: f32[5,128,160], index: 4, kind: input, shape index: {}]
  %s5 = inlined_call_operand.vmem [shape: f32[1,160], index: 5, kind: input, shape index: {}]
  %s6 = inlined_call_operand.vmem [shape: f32[160,128], index: 6, kind: input, shape index: {}]
  %s7 = inlined_call_operand.vmem [shape: f32[640,120], index: 7, kind: input, shape index: {}]
  %s8 = inlined_call_operand.vmem [shape: f32[1,120], index: 8, kind: input, shape index: {}]
  %s9 = inlined_call_operand.vmem [shape: f32[120,84], index: 9, kind: input, shape index: {}]
  %s10 = inlined_call_operand.vmem [shape: f32[1,84], index: 10, kind: input, shape index: {}]
  %s11 = inlined_call_operand.vmem [shape: f32[84,10], index: 11, kind: input, shape index: {}]
  %s12 = inlined_call_operand.vmem [shape: f32[1,10], index: 12, kind: input, shape index: {}]
  %s13 = inlined_call_operand.vmem [shape: f32[8,10], index: 13, kind: output, shape index: {}]
  %s14 = sld [smem:[#allocation0]]
  $region62: #{lenet5_forward.1} parent=0
    _
  %s16 = ssub.s32 1, %s14
  %s17 = scalar_select 0, %s16, %s14
  // Predicated region
  $region2: #{lenet5_forward.1} parent=0 // pred_check
    _
  $region3: #{lenet5_forward.1} parent=0 // pred_check_branch
    %19 = sbr.rel (0) target = $region5
  $region4: #{lenet5_forward.1} parent=0 // pred_region
    _
  $region5: #{lenet5_forward.1} parent=0 // pred_fallthru
    _
  // Predicated region
  $region6: #{lenet5_forward.1} parent=0 // pred_check
    _
  $region7: #{lenet5_forward.1} parent=0 // pred_check_branch
    %21 = sbr.rel (0) target = $region9
  $region8: #{lenet5_forward.1} parent=0 // pred_region
    _
  $region9: #{lenet5_forward.1} parent=0 // pred_fallthru
    _
  // Predicated region
  $region10: #{lenet5_forward.1} parent=0 // pred_check
    _
  $region11: #{lenet5_forward.1} parent=0 // pred_check_branch
    %23 = sbr.rel (0) target = $region13
  $region12: #{lenet5_forward.1} parent=0 // pred_region
    _
  $region13: #{lenet5_forward.1} parent=0 // pred_fallthru
    _
  // Predicated region
  $region14: #{lenet5_forward.1} parent=0 // pred_check
    _
  $region15: #{lenet5_forward.1} parent=0 // pred_check_branch
    %25 = sbr.rel (0) target = $region17
  $region16: #{lenet5_forward.1} parent=0 // pred_region
    _
  $region17: #{lenet5_forward.1} parent=0 // pred_fallthru
    _
  // Predicated region
  $region18: #{lenet5_forward.1} parent=0 // pred_check
    _
  $region19: #{lenet5_forward.1} parent=0 // pred_check_branch
    %27 = sbr.rel (0) target = $region21
  $region20: #{lenet5_forward.1} parent=0 // pred_region
    _
  $region21: #{lenet5_forward.1} parent=0 // pred_fallthru
    _
  // Predicated region
  $region22: #{lenet5_forward.1} parent=0 // pred_check
    _
  $region23: #{lenet5_forward.1} parent=0 // pred_check_branch
    %29 = sbr.rel (0) target = $region25
  $region24: #{lenet5_forward.1} parent=0 // pred_region
    _
  $region25: #{lenet5_forward.1} parent=0 // pred_fallthru
    _
  // Predicated region
  $region26: #{lenet5_forward.1} parent=0 // pred_check
    _
  $region27: #{lenet5_forward.1} parent=0 // pred_check_branch
    %31 = sbr.rel (0) target = $region29
  $region28: #{lenet5_forward.1} parent=0 // pred_region
    _
  $region29: #{lenet5_forward.1} parent=0 // pred_fallthru
    _
  // Predicated region
  $region30: #{lenet5_forward.1} parent=0 // pred_check
    _
  $region31: #{lenet5_forward.1} parent=0 // pred_check_branch
    %33 = sbr.rel (0) target = $region33
  $region32: #{lenet5_forward.1} parent=0 // pred_region
    _
  $region33: #{lenet5_forward.1} parent=0 // pred_fallthru
    _
  // Predicated region
  $region34: #{lenet5_forward.1} parent=0 // pred_check
    _
  $region35: #{lenet5_forward.1} parent=0 // pred_check_branch
    %35 = sbr.rel (0) target = $region37
  $region36: #{lenet5_forward.1} parent=0 // pred_region
    _
  $region37: #{lenet5_forward.1} parent=0 // pred_fallthru
    _
  // Predicated region
  $region38: #{lenet5_forward.1} parent=0 // pred_check
    _
  $region39: #{lenet5_forward.1} parent=0 // pred_check_branch
    %37 = sbr.rel (0) target = $region41
  $region40: #{lenet5_forward.1} parent=0 // pred_region
    _
  $region41: #{lenet5_forward.1} parent=0 // pred_fallthru
    _
  // Predicated region
  $region42: #{lenet5_forward.1} parent=0 // pred_check
    _
  $region43: #{lenet5_forward.1} parent=0 // pred_check_branch
    %39 = sbr.rel (0) target = $region45
  $region44: #{lenet5_forward.1} parent=0 // pred_region
    _
  $region45: #{lenet5_forward.1} parent=0 // pred_fallthru
    _
  // Predicated region
  $region46: #{lenet5_forward.1} parent=0 // pred_check
    _
  $region47: #{lenet5_forward.1} parent=0 // pred_check_branch
    %41 = sbr.rel (0) target = $region49
  $region48: #{lenet5_forward.1} parent=0 // pred_region
    _
  $region49: #{lenet5_forward.1} parent=0 // pred_fallthru
    _
  // Predicated region
  $region50: #{lenet5_forward.1} parent=0 // pred_check
    _
  $region51: #{lenet5_forward.1} parent=0 // pred_check_branch
    %43 = sbr.rel (0) target = $region53
  $region52: #{lenet5_forward.1} parent=0 // pred_region
    _
  $region53: #{lenet5_forward.1} parent=0 // pred_fallthru
    _
  %v44 = vld [vmem:[%s0] sm:$0xff]
  %v45 = vld [vmem:[%s0 + $0x8] sm:$0xff]
  %v46 = vld [vmem:[%s0 + $0x10] sm:$0xff]
  %v47 = vld [vmem:[%s0 + $0x18] sm:$0xff]
  %v48 = vld [vmem:[%s0 + $0x20] sm:$0xff]
  %v49 = vld [vmem:[%s0 + $0x28] sm:$0xff]
  %v50 = vld [vmem:[%s0 + $0x30] sm:$0xff]
  %v51 = vld [vmem:[%s0 + $0x38] sm:$0xff]
  %v52 = vld [vmem:[%s0 + $0x40] sm:$0xff]
  %v53 = vld [vmem:[%s0 + $0x48] sm:$0xff]
  %v54 = vld [vmem:[%s0 + $0x50] sm:$0xff]
  %v55 = vld [vmem:[%s0 + $0x58] sm:$0xff]
  %v56 = vld [vmem:[%s0 + $0x60] sm:$0xff]
  %v57 = vld [vmem:[%s0 + $0x68] sm:$0xff]
  %v58 = vld [vmem:[%s0 + $0x70] sm:$0xff]
  %v59 = vld [vmem:[%s0 + $0x78] sm:$0xff]
  %v60 = vld [vmem:[%s0 + $0x80] sm:$0xff]
  %v61 = vld [vmem:[%s0 + $0x88] sm:$0xff]
  %v62 = vld [vmem:[%s0 + $0x90] sm:$0xff]
  %v63 = vld [vmem:[%s0 + $0x98] sm:$0xff]
  %v64 = vld [vmem:[%s0 + $0xa0] sm:$0xff]
  %v65 = vld [vmem:[%s0 + $0xa8] sm:$0xff]
  %v66 = vld [vmem:[%s0 + $0xb0] sm:$0xff]
  %v67 = vld [vmem:[%s0 + $0xb8] sm:$0xff]
  %v68 = vld [vmem:[%s0 + $0xc0] sm:$0xff]
  %v69 = vld [vmem:[%s0 + $0xc8] sm:$0xff]
  %v70 = vld [vmem:[%s0 + $0xd0] sm:$0xff]
  %v71 = vld [vmem:[%s0 + $0xd8] sm:$0xff]
  %v72 = vld [vmem:[%s0 + $0xe0] sm:$0xff]
  %v73 = vld [vmem:[%s0 + $0xe8] sm:$0xff]
  %v74 = vld [vmem:[%s0 + $0xf0] sm:$0xff]
  %v75 = vld [vmem:[%s0 + $0xf8] sm:$0xff]
  %v76 = vld [vmem:[%s0 + $0x100] sm:$0xff]
  %v77 = vld [vmem:[%s0 + $0x108] sm:$0xff]
  %v78 = vld [vmem:[%s0 + $0x110] sm:$0xff]
  %v79 = vld [vmem:[%s0 + $0x118] sm:$0xff]
  %v80 = vld [vmem:[%s0 + $0x120] sm:$0xff]
  %v81 = vld [vmem:[%s0 + $0x128] sm:$0xff]
  %v82 = vld [vmem:[%s0 + $0x130] sm:$0xff]
  %v83 = vld [vmem:[%s0 + $0x138] sm:$0xff]
  %v84 = vld [vmem:[%s0 + $0x140] sm:$0xff]
  %v85 = vld [vmem:[%s0 + $0x148] sm:$0xff]
  %v86 = vld [vmem:[%s0 + $0x150] sm:$0xff]
  %v87 = vld [vmem:[%s0 + $0x158] sm:$0xff]
  %v88 = vld [vmem:[%s0 + $0x160] sm:$0xff]
  %v89 = vld [vmem:[%s0 + $0x168] sm:$0xff]
  %v90 = vld [vmem:[%s0 + $0x170] sm:$0xff]
  %v91 = vld [vmem:[%s0 + $0x178] sm:$0xff]
  %v92 = vld [vmem:[%s0 + $0x180] sm:$0xff]
  %v93 = vld [vmem:[%s0 + $0x188] sm:$0xff]
  %v94 = vld [vmem:[%s0 + $0x190] sm:$0xff]
  %v95 = vld [vmem:[%s0 + $0x198] sm:$0xff]
  %v96 = vld [vmem:[%s0 + $0x1a0] sm:$0xff]
  %v97 = vld [vmem:[%s0 + $0x1a8] sm:$0xff]
  %v98 = vld [vmem:[%s0 + $0x1b0] sm:$0xff]
  %v99 = vld [vmem:[%s0 + $0x1b8] sm:$0xff]
  %v100 = vld [vmem:[%s1] sm:$0xff]
  %v101 = vld [vmem:[%s1 + $0x8] sm:$0xff]
  %v102 = vld [vmem:[%s1 + $0x10] sm:$0xff]
  %v103 = vld [vmem:[%s1 + $0x18] sm:$0xff]
  %v104 = vld [vmem:[%s1 + $0x20] sm:$0xff]
  %v105 = vld [vmem:[%s1 + $0x28] sm:$0xff]
  %v106 = vld [vmem:[%s1 + $0x30] sm:$0xff]
  %v107 = vld [vmem:[%s1 + $0x38] sm:$0xff]
  %v108 = vld [vmem:[%s1 + $0x40] sm:$0xff]
  %v109 = vld [vmem:[%s1 + $0x48] sm:$0xff]
  %v110 = vld [vmem:[%s1 + $0x50] sm:$0xff]
  %v111 = vld [vmem:[%s1 + $0x58] sm:$0xff]
  %v112 = vld [vmem:[%s1 + $0x60] sm:$0xff]
  %v113 = vld [vmem:[%s1 + $0x68] sm:$0xff]
  %v114 = vld [vmem:[%s1 + $0x70] sm:$0xff]
  %v115 = vld [vmem:[%s1 + $0x78] sm:$0xff]
  %v116 = vld [vmem:[%s1 + $0x80] sm:$0xff]
  %v117 = vld [vmem:[%s1 + $0x88] sm:$0xff]
  %v118 = vld [vmem:[%s1 + $0x90] sm:$0xff]
  %v119 = vld [vmem:[%s1 + $0x98] sm:$0xff]
  %v120 = vld [vmem:[%s1 + $0xa0] sm:$0xff]
  %v121 = vld [vmem:[%s1 + $0xa8] sm:$0xff]
  %v122 = vld [vmem:[%s1 + $0xb0] sm:$0xff]
  %v123 = vld [vmem:[%s1 + $0xb8] sm:$0xff]
  %v124 = vld [vmem:[%s1 + $0xc0] sm:$0xff]
  %v125 = vld [vmem:[%s1 + $0xc8] sm:$0xff]
  %v126 = vld [vmem:[%s1 + $0xd0] sm:$0xff]
  %v127 = vld [vmem:[%s1 + $0xd8] sm:$0xff]
  %v128 = vld [vmem:[%s1 + $0xe0] sm:$0xff]
  %v129 = vld [vmem:[%s1 + $0xe8] sm:$0xff]
  %v130 = vld [vmem:[%s1 + $0xf0] sm:$0xff]
  %v131 = vld [vmem:[%s1 + $0xf8] sm:$0xff]
  %v132 = vld [vmem:[%s1 + $0x100] sm:$0xff]
  %v133 = vld [vmem:[%s1 + $0x108] sm:$0xff]
  %v134 = vld [vmem:[%s1 + $0x110] sm:$0xff]
  %v135 = vld [vmem:[%s1 + $0x118] sm:$0xff]
  %v136 = vld [vmem:[%s1 + $0x120] sm:$0xff]
  %v137 = vld [vmem:[%s1 + $0x128] sm:$0xff]
  %v138 = vld [vmem:[%s1 + $0x130] sm:$0xff]
  %v139 = vld [vmem:[%s1 + $0x138] sm:$0xff]
  %v140 = vld [vmem:[%s2] sm:$0x3]
  %v142 = vperm.slane %v140, 0
  %v143 = vperm.slane %v140, 1
  %vm146 = vcmask 261120
  %v148 = vsel %vm146, %v45, 0
  %v151 = vsel %vm146, %v47, 0
  %v154 = vsel %vm146, %v49, 0
  %v157 = vsel %vm146, %v51, 0
  %v160 = vsel %vm146, %v53, 0
  %v163 = vsel %vm146, %v55, 0
  %v166 = vsel %vm146, %v57, 0
  %v169 = vsel %vm146, %v59, 0
  %v172 = vsel %vm146, %v61, 0
  %v175 = vsel %vm146, %v63, 0
  %v178 = vsel %vm146, %v65, 0
  %v181 = vsel %vm146, %v67, 0
  %v184 = vsel %vm146, %v69, 0
  %v187 = vsel %vm146, %v71, 0
  %v190 = vsel %vm146, %v73, 0
  %v193 = vsel %vm146, %v75, 0
  %v196 = vsel %vm146, %v77, 0
  %v199 = vsel %vm146, %v79, 0
  %v202 = vsel %vm146, %v81, 0
  %v205 = vsel %vm146, %v83, 0
  %v208 = vsel %vm146, %v85, 0
  %v211 = vsel %vm146, %v87, 0
  %v214 = vsel %vm146, %v89, 0
  %v217 = vsel %vm146, %v91, 0
  %v220 = vsel %vm146, %v93, 0
  %v223 = vsel %vm146, %v95, 0
  %v226 = vsel %vm146, %v97, 0
  %v229 = vsel %vm146, %v99, 0
  %231 = vmatpush.msra.mxu0 %v130
  %232 = vmatpush.msra.mxu0 %v128
  %233 = vmatpush.msra.mxu0 %v126
  %234 = vmatpush.msra.mxu0 %v124
  %235 = vmatpush.msra.mxu0 %v122
  %236 = vmatpush.msra.mxu0 %v120
  %237 = vmatpush.msra.mxu0 %v118
  %238 = vmatpush.msra.mxu0 %v116
  %239 = vmatpush.msra.mxu0 %v114
  %240 = vmatpush.msra.mxu0 %v112
  %241 = vmatpush.msra.mxu0 %v110
  %242 = vmatpush.msra.mxu0 %v108
  %243 = vmatpush.msra.mxu0 %v106
  %244 = vmatpush.msra.mxu0 %v104
  %245 = vmatpush.msra.mxu0 %v102
  %246 = vmatpush.msra.mxu0 %v100
  %247 = vmatmul.f32.gmra.mxu0 %v44
  %v248 = vpop.f32.mrf.mxu0
  %v249 = vadd.f32 %v142, %v248
  %250 = vmatmul.f32.gmra.mxu0 %v46
  %v251 = vpop.f32.mrf.mxu0
  %v252 = vadd.f32 %v142, %v251
  %253 = vmatmul.f32.gmra.mxu0 %v48
  %v254 = vpop.f32.mrf.mxu0
  %v255 = vadd.f32 %v142, %v254
  %256 = vmatmul.f32.gmra.mxu0 %v50
  %v257 = vpop.f32.mrf.mxu0
  %v258 = vadd.f32 %v142, %v257
  %259 = vmatmul.f32.gmra.mxu0 %v52
  %v260 = vpop.f32.mrf.mxu0
  %v261 = vadd.f32 %v142, %v260
  %262 = vmatmul.f32.gmra.mxu0 %v54
  %v263 = vpop.f32.mrf.mxu0
  %v264 = vadd.f32 %v142, %v263
  %265 = vmatmul.f32.gmra.mxu0 %v56
  %v266 = vpop.f32.mrf.mxu0
  %v267 = vadd.f32 %v142, %v266
  %268 = vmatmul.f32.gmra.mxu0 %v58
  %v269 = vpop.f32.mrf.mxu0
  %v270 = vadd.f32 %v142, %v269
  %271 = vmatmul.f32.gmra.mxu0 %v60
  %v272 = vpop.f32.mrf.mxu0
  %v273 = vadd.f32 %v142, %v272
  %274 = vmatmul.f32.gmra.mxu0 %v62
  %v275 = vpop.f32.mrf.mxu0
  %v276 = vadd.f32 %v142, %v275
  %277 = vmatmul.f32.gmra.mxu0 %v64
  %v278 = vpop.f32.mrf.mxu0
  %v279 = vadd.f32 %v142, %v278
  %280 = vmatmul.f32.gmra.mxu0 %v66
  %v281 = vpop.f32.mrf.mxu0
  %v282 = vadd.f32 %v142, %v281
  %283 = vmatmul.f32.gmra.mxu0 %v68
  %v284 = vpop.f32.mrf.mxu0
  %v285 = vadd.f32 %v142, %v284
  %286 = vmatmul.f32.gmra.mxu0 %v70
  %v287 = vpop.f32.mrf.mxu0
  %v288 = vadd.f32 %v142, %v287
  %289 = vmatmul.f32.gmra.mxu0 %v72
  %v290 = vpop.f32.mrf.mxu0
  %v291 = vadd.f32 %v142, %v290
  %292 = vmatmul.f32.gmra.mxu0 %v74
  %v293 = vpop.f32.mrf.mxu0
  %v294 = vadd.f32 %v142, %v293
  %295 = vmatmul.f32.gmra.mxu0 %v76
  %v296 = vpop.f32.mrf.mxu0
  %v297 = vadd.f32 %v142, %v296
  %298 = vmatmul.f32.gmra.mxu0 %v78
  %v299 = vpop.f32.mrf.mxu0
  %v300 = vadd.f32 %v142, %v299
  %301 = vmatmul.f32.gmra.mxu0 %v80
  %v302 = vpop.f32.mrf.mxu0
  %v303 = vadd.f32 %v142, %v302
  %304 = vmatmul.f32.gmra.mxu0 %v82
  %v305 = vpop.f32.mrf.mxu0
  %v306 = vadd.f32 %v142, %v305
  %307 = vmatmul.f32.gmra.mxu0 %v84
  %v308 = vpop.f32.mrf.mxu0
  %v309 = vadd.f32 %v142, %v308
  %310 = vmatmul.f32.gmra.mxu0 %v86
  %v311 = vpop.f32.mrf.mxu0
  %v312 = vadd.f32 %v142, %v311
  %313 = vmatmul.f32.gmra.mxu0 %v88
  %v314 = vpop.f32.mrf.mxu0
  %v315 = vadd.f32 %v142, %v314
  %316 = vmatmul.f32.gmra.mxu0 %v90
  %v317 = vpop.f32.mrf.mxu0
  %v318 = vadd.f32 %v142, %v317
  %319 = vmatmul.f32.gmra.mxu0 %v92
  %v320 = vpop.f32.mrf.mxu0
  %v321 = vadd.f32 %v142, %v320
  %322 = vmatmul.f32.gmra.mxu0 %v94
  %v323 = vpop.f32.mrf.mxu0
  %v324 = vadd.f32 %v142, %v323
  %325 = vmatmul.f32.gmra.mxu0 %v96
  %v326 = vpop.f32.mrf.mxu0
  %v327 = vadd.f32 %v142, %v326
  %328 = vmatmul.f32.gmra.mxu0 %v98
  %v329 = vpop.f32.mrf.mxu0
  %v330 = vadd.f32 %v142, %v329
  %331 = vdwg.mxu0
  %332 = vmatpush.msra.mxu0 0.0
  %333 = vmatpush.msra.mxu0 0.0
  %334 = vmatpush.msra.mxu0 0.0
  %335 = vmatpush.msra.mxu0 0.0
  %336 = vmatpush.msra.mxu0 0.0
  %337 = vmatpush.msra.mxu0 0.0
  %338 = vmatpush.msra.mxu0 0.0
  %339 = vmatpush.msra.mxu0 0.0
  %340 = vmatpush.msra.mxu0 0.0
  %341 = vmatpush.msra.mxu0 0.0
  %342 = vmatpush.msra.mxu0 0.0
  %343 = vmatpush.msra.mxu0 0.0
  %344 = vmatpush.msra.mxu0 %v138
  %345 = vmatpush.msra.mxu0 %v136
  %346 = vmatpush.msra.mxu0 %v134
  %347 = vmatpush.msra.mxu0 %v132
  %348 = vmatmul.f32.gmra.mxu0 %v148
  %v349 = vpop.f32.mrf.mxu0
  %v350 = vadd.f32 %v249, %v349
  %351 = vmatmul.f32.gmra.mxu0 %v151
  %v352 = vpop.f32.mrf.mxu0
  %v353 = vadd.f32 %v252, %v352
  %354 = vmatmul.f32.gmra.mxu0 %v154
  %v355 = vpop.f32.mrf.mxu0
  %v356 = vadd.f32 %v255, %v355
  %357 = vmatmul.f32.gmra.mxu0 %v157
  %v358 = vpop.f32.mrf.mxu0
  %v359 = vadd.f32 %v258, %v358
  %360 = vmatmul.f32.gmra.mxu0 %v160
  %v361 = vpop.f32.mrf.mxu0
  %v362 = vadd.f32 %v261, %v361
  %363 = vmatmul.f32.gmra.mxu0 %v163
  %v364 = vpop.f32.mrf.mxu0
  %v365 = vadd.f32 %v264, %v364
  %366 = vmatmul.f32.gmra.mxu0 %v166
  %v367 = vpop.f32.mrf.mxu0
  %v368 = vadd.f32 %v267, %v367
  %369 = vmatmul.f32.gmra.mxu0 %v169
  %v370 = vpop.f32.mrf.mxu0
  %v371 = vadd.f32 %v270, %v370
  %372 = vmatmul.f32.gmra.mxu0 %v172
  %v373 = vpop.f32.mrf.mxu0
  %v374 = vadd.f32 %v273, %v373
  %375 = vmatmul.f32.gmra.mxu0 %v175
  %v376 = vpop.f32.mrf.mxu0
  %v377 = vadd.f32 %v276, %v376
  %378 = vmatmul.f32.gmra.mxu0 %v178
  %v379 = vpop.f32.mrf.mxu0
  %v380 = vadd.f32 %v279, %v379
  %381 = vmatmul.f32.gmra.mxu0 %v181
  %v382 = vpop.f32.mrf.mxu0
  %v383 = vadd.f32 %v282, %v382
  %384 = vmatmul.f32.gmra.mxu0 %v184
  %v385 = vpop.f32.mrf.mxu0
  %v386 = vadd.f32 %v285, %v385
  %387 = vmatmul.f32.gmra.mxu0 %v187
  %v388 = vpop.f32.mrf.mxu0
  %v389 = vadd.f32 %v288, %v388
  %390 = vmatmul.f32.gmra.mxu0 %v190
  %v391 = vpop.f32.mrf.mxu0
  %v392 = vadd.f32 %v291, %v391
  %393 = vmatmul.f32.gmra.mxu0 %v193
  %v394 = vpop.f32.mrf.mxu0
  %v395 = vadd.f32 %v294, %v394
  %396 = vmatmul.f32.gmra.mxu0 %v196
  %v397 = vpop.f32.mrf.mxu0
  %v398 = vadd.f32 %v297, %v397
  %399 = vmatmul.f32.gmra.mxu0 %v199
  %v400 = vpop.f32.mrf.mxu0
  %v401 = vadd.f32 %v300, %v400
  %402 = vmatmul.f32.gmra.mxu0 %v202
  %v403 = vpop.f32.mrf.mxu0
  %v404 = vadd.f32 %v303, %v403
  %405 = vmatmul.f32.gmra.mxu0 %v205
  %v406 = vpop.f32.mrf.mxu0
  %v407 = vadd.f32 %v306, %v406
  %408 = vmatmul.f32.gmra.mxu0 %v208
  %v409 = vpop.f32.mrf.mxu0
  %v410 = vadd.f32 %v309, %v409
  %411 = vmatmul.f32.gmra.mxu0 %v211
  %v412 = vpop.f32.mrf.mxu0
  %v413 = vadd.f32 %v312, %v412
  %414 = vmatmul.f32.gmra.mxu0 %v214
  %v415 = vpop.f32.mrf.mxu0
  %v416 = vadd.f32 %v315, %v415
  %417 = vmatmul.f32.gmra.mxu0 %v217
  %v418 = vpop.f32.mrf.mxu0
  %v419 = vadd.f32 %v318, %v418
  %420 = vmatmul.f32.gmra.mxu0 %v220
  %v421 = vpop.f32.mrf.mxu0
  %v422 = vadd.f32 %v321, %v421
  %423 = vmatmul.f32.gmra.mxu0 %v223
  %v424 = vpop.f32.mrf.mxu0
  %v425 = vadd.f32 %v324, %v424
  %426 = vmatmul.f32.gmra.mxu0 %v226
  %v427 = vpop.f32.mrf.mxu0
  %v428 = vadd.f32 %v327, %v427
  %429 = vmatmul.f32.gmra.mxu0 %v229
  %v430 = vpop.f32.mrf.mxu0
  %v431 = vadd.f32 %v330, %v430
  %432 = vdwg.mxu0
  %433 = vmatpush.msra.mxu0 %v131
  %434 = vmatpush.msra.mxu0 %v129
  %435 = vmatpush.msra.mxu0 %v127
  %436 = vmatpush.msra.mxu0 %v125
  %437 = vmatpush.msra.mxu0 %v123
  %438 = vmatpush.msra.mxu0 %v121
  %439 = vmatpush.msra.mxu0 %v119
  %440 = vmatpush.msra.mxu0 %v117
  %441 = vmatpush.msra.mxu0 %v115
  %442 = vmatpush.msra.mxu0 %v113
  %443 = vmatpush.msra.mxu0 %v111
  %444 = vmatpush.msra.mxu0 %v109
  %445 = vmatpush.msra.mxu0 %v107
  %446 = vmatpush.msra.mxu0 %v105
  %447 = vmatpush.msra.mxu0 %v103
  %448 = vmatpush.msra.mxu0 %v101
  %449 = vmatmul.f32.gmra.mxu0 %v44
  %v450 = vpop.f32.mrf.mxu0
  %v451 = vadd.f32 %v143, %v450
  %452 = vmatmul.f32.gmra.mxu0 %v46
  %v453 = vpop.f32.mrf.mxu0
  %v454 = vadd.f32 %v143, %v453
  %455 = vmatmul.f32.gmra.mxu0 %v48
  %v456 = vpop.f32.mrf.mxu0
  %v457 = vadd.f32 %v143, %v456
  %458 = vmatmul.f32.gmra.mxu0 %v50
  %v459 = vpop.f32.mrf.mxu0
  %v460 = vadd.f32 %v143, %v459
  %461 = vmatmul.f32.gmra.mxu0 %v52
  %v462 = vpop.f32.mrf.mxu0
  %v463 = vadd.f32 %v143, %v462
  %464 = vmatmul.f32.gmra.mxu0 %v54
  %v465 = vpop.f32.mrf.mxu0
  %v466 = vadd.f32 %v143, %v465
  %467 = vmatmul.f32.gmra.mxu0 %v56
  %v468 = vpop.f32.mrf.mxu0
  %v469 = vadd.f32 %v143, %v468
  %470 = vmatmul.f32.gmra.mxu0 %v58
  %v471 = vpop.f32.mrf.mxu0
  %v472 = vadd.f32 %v143, %v471
  %473 = vmatmul.f32.gmra.mxu0 %v60
  %v474 = vpop.f32.mrf.mxu0
  %v475 = vadd.f32 %v143, %v474
  %476 = vmatmul.f32.gmra.mxu0 %v62
  %v477 = vpop.f32.mrf.mxu0
  %v478 = vadd.f32 %v143, %v477
  %479 = vmatmul.f32.gmra.mxu0 %v64
  %v480 = vpop.f32.mrf.mxu0
  %v481 = vadd.f32 %v143, %v480
  %482 = vmatmul.f32.gmra.mxu0 %v66
  %v483 = vpop.f32.mrf.mxu0
  %v484 = vadd.f32 %v143, %v483
  %485 = vmatmul.f32.gmra.mxu0 %v68
  %v486 = vpop.f32.mrf.mxu0
  %v487 = vadd.f32 %v143, %v486
  %488 = vmatmul.f32.gmra.mxu0 %v70
  %v489 = vpop.f32.mrf.mxu0
  %v490 = vadd.f32 %v143, %v489
  %491 = vmatmul.f32.gmra.mxu0 %v72
  %v492 = vpop.f32.mrf.mxu0
  %v493 = vadd.f32 %v143, %v492
  %494 = vmatmul.f32.gmra.mxu0 %v74
  %v495 = vpop.f32.mrf.mxu0
  %v496 = vadd.f32 %v143, %v495
  %497 = vmatmul.f32.gmra.mxu0 %v76
  %v498 = vpop.f32.mrf.mxu0
  %v499 = vadd.f32 %v143, %v498
  %500 = vmatmul.f32.gmra.mxu0 %v78
  %v501 = vpop.f32.mrf.mxu0
  %v502 = vadd.f32 %v143, %v501
  %503 = vmatmul.f32.gmra.mxu0 %v80
  %v504 = vpop.f32.mrf.mxu0
  %v505 = vadd.f32 %v143, %v504
  %506 = vmatmul.f32.gmra.mxu0 %v82
  %v507 = vpop.f32.mrf.mxu0
  %v508 = vadd.f32 %v143, %v507
  %509 = vmatmul.f32.gmra.mxu0 %v84
  %v510 = vpop.f32.mrf.mxu0
  %v511 = vadd.f32 %v143, %v510
  %512 = vmatmul.f32.gmra.mxu0 %v86
  %v513 = vpop.f32.mrf.mxu0
  %v514 = vadd.f32 %v143, %v513
  %515 = vmatmul.f32.gmra.mxu0 %v88
  %v516 = vpop.f32.mrf.mxu0
  %v517 = vadd.f32 %v143, %v516
  %518 = vmatmul.f32.gmra.mxu0 %v90
  %v519 = vpop.f32.mrf.mxu0
  %v520 = vadd.f32 %v143, %v519
  %521 = vmatmul.f32.gmra.mxu0 %v92
  %v522 = vpop.f32.mrf.mxu0
  %v523 = vadd.f32 %v143, %v522
  %524 = vmatmul.f32.gmra.mxu0 %v94
  %v525 = vpop.f32.mrf.mxu0
  %v526 = vadd.f32 %v143, %v525
  %527 = vmatmul.f32.gmra.mxu0 %v96
  %v528 = vpop.f32.mrf.mxu0
  %v529 = vadd.f32 %v143, %v528
  %530 = vmatmul.f32.gmra.mxu0 %v98
  %v531 = vpop.f32.mrf.mxu0
  %v532 = vadd.f32 %v143, %v531
  %533 = vdwg.mxu0
  %534 = vmatpush.msra.mxu0 0.0
  %535 = vmatpush.msra.mxu0 0.0
  %536 = vmatpush.msra.mxu0 0.0
  %537 = vmatpush.msra.mxu0 0.0
  %538 = vmatpush.msra.mxu0 0.0
  %539 = vmatpush.msra.mxu0 0.0
  %540 = vmatpush.msra.mxu0 0.0
  %541 = vmatpush.msra.mxu0 0.0
  %542 = vmatpush.msra.mxu0 0.0
  %543 = vmatpush.msra.mxu0 0.0
  %544 = vmatpush.msra.mxu0 0.0
  %545 = vmatpush.msra.mxu0 0.0
  %546 = vmatpush.msra.mxu0 %v139
  %547 = vmatpush.msra.mxu0 %v137
  %548 = vmatpush.msra.mxu0 %v135
  %549 = vmatpush.msra.mxu0 %v133
  %550 = vmatmul.f32.gmra.mxu0 %v148
  %v551 = vpop.f32.mrf.mxu0
  %v552 = vadd.f32 %v451, %v551
  %553 = vmatmul.f32.gmra.mxu0 %v151
  %v554 = vpop.f32.mrf.mxu0
  %v555 = vadd.f32 %v454, %v554
  %556 = vmatmul.f32.gmra.mxu0 %v154
  %v557 = vpop.f32.mrf.mxu0
  %v558 = vadd.f32 %v457, %v557
  %559 = vmatmul.f32.gmra.mxu0 %v157
  %v560 = vpop.f32.mrf.mxu0
  %v561 = vadd.f32 %v460, %v560
  %562 = vmatmul.f32.gmra.mxu0 %v160
  %v563 = vpop.f32.mrf.mxu0
  %v564 = vadd.f32 %v463, %v563
  %565 = vmatmul.f32.gmra.mxu0 %v163
  %v566 = vpop.f32.mrf.mxu0
  %v567 = vadd.f32 %v466, %v566
  %568 = vmatmul.f32.gmra.mxu0 %v166
  %v569 = vpop.f32.mrf.mxu0
  %v570 = vadd.f32 %v469, %v569
  %571 = vmatmul.f32.gmra.mxu0 %v169
  %v572 = vpop.f32.mrf.mxu0
  %v573 = vadd.f32 %v472, %v572
  %574 = vmatmul.f32.gmra.mxu0 %v172
  %v575 = vpop.f32.mrf.mxu0
  %v576 = vadd.f32 %v475, %v575
  %577 = vmatmul.f32.gmra.mxu0 %v175
  %v578 = vpop.f32.mrf.mxu0
  %v579 = vadd.f32 %v478, %v578
  %580 = vmatmul.f32.gmra.mxu0 %v178
  %v581 = vpop.f32.mrf.mxu0
  %v582 = vadd.f32 %v481, %v581
  %583 = vmatmul.f32.gmra.mxu0 %v181
  %v584 = vpop.f32.mrf.mxu0
  %v585 = vadd.f32 %v484, %v584
  %586 = vmatmul.f32.gmra.mxu0 %v184
  %v587 = vpop.f32.mrf.mxu0
  %v588 = vadd.f32 %v487, %v587
  %589 = vmatmul.f32.gmra.mxu0 %v187
  %v590 = vpop.f32.mrf.mxu0
  %v591 = vadd.f32 %v490, %v590
  %592 = vmatmul.f32.gmra.mxu0 %v190
  %v593 = vpop.f32.mrf.mxu0
  %v594 = vadd.f32 %v493, %v593
  %595 = vmatmul.f32.gmra.mxu0 %v193
  %v596 = vpop.f32.mrf.mxu0
  %v597 = vadd.f32 %v496, %v596
  %598 = vmatmul.f32.gmra.mxu0 %v196
  %v599 = vpop.f32.mrf.mxu0
  %v600 = vadd.f32 %v499, %v599
  %601 = vmatmul.f32.gmra.mxu0 %v199
  %v602 = vpop.f32.mrf.mxu0
  %v603 = vadd.f32 %v502, %v602
  %604 = vmatmul.f32.gmra.mxu0 %v202
  %v605 = vpop.f32.mrf.mxu0
  %v606 = vadd.f32 %v505, %v605
  %607 = vmatmul.f32.gmra.mxu0 %v205
  %v608 = vpop.f32.mrf.mxu0
  %v609 = vadd.f32 %v508, %v608
  %610 = vmatmul.f32.gmra.mxu0 %v208
  %v611 = vpop.f32.mrf.mxu0
  %v612 = vadd.f32 %v511, %v611
  %613 = vmatmul.f32.gmra.mxu0 %v211
  %v614 = vpop.f32.mrf.mxu0
  %v615 = vadd.f32 %v514, %v614
  %616 = vmatmul.f32.gmra.mxu0 %v214
  %v617 = vpop.f32.mrf.mxu0
  %v618 = vadd.f32 %v517, %v617
  %619 = vmatmul.f32.gmra.mxu0 %v217
  %v620 = vpop.f32.mrf.mxu0
  %v621 = vadd.f32 %v520, %v620
  %622 = vmatmul.f32.gmra.mxu0 %v220
  %v623 = vpop.f32.mrf.mxu0
  %v624 = vadd.f32 %v523, %v623
  %625 = vmatmul.f32.gmra.mxu0 %v223
  %v626 = vpop.f32.mrf.mxu0
  %v627 = vadd.f32 %v526, %v626
  %628 = vmatmul.f32.gmra.mxu0 %v226
  %v629 = vpop.f32.mrf.mxu0
  %v630 = vadd.f32 %v529, %v629
  %631 = vmatmul.f32.gmra.mxu0 %v229
  %v632 = vpop.f32.mrf.mxu0
  %v633 = vadd.f32 %v532, %v632
  %634 = vdwg.mxu0
  %v635 = vmul.f32 %v350, 0.5
  %v636 = vmul.f32 %v552, 0.5
  %v637 = vmul.f32 %v353, 0.5
  %v638 = vmul.f32 %v555, 0.5
  %v639 = vmul.f32 %v356, 0.5
  %v640 = vmul.f32 %v558, 0.5
  %v641 = vmul.f32 %v359, 0.5
  %v642 = vmul.f32 %v561, 0.5
  %v643 = vmul.f32 %v362, 0.5
  %v644 = vmul.f32 %v564, 0.5
  %v645 = vmul.f32 %v365, 0.5
  %v646 = vmul.f32 %v567, 0.5
  %v647 = vmul.f32 %v368, 0.5
  %v648 = vmul.f32 %v570, 0.5
  %v649 = vmul.f32 %v371, 0.5
  %v650 = vmul.f32 %v573, 0.5
  %v651 = vmul.f32 %v374, 0.5
  %v652 = vmul.f32 %v576, 0.5
  %v653 = vmul.f32 %v377, 0.5
  %v654 = vmul.f32 %v579, 0.5
  %v655 = vmul.f32 %v380, 0.5
  %v656 = vmul.f32 %v582, 0.5
  %v657 = vmul.f32 %v383, 0.5
  %v658 = vmul.f32 %v585, 0.5
  %v659 = vmul.f32 %v386, 0.5
  %v660 = vmul.f32 %v588, 0.5
  %v661 = vmul.f32 %v389, 0.5
  %v662 = vmul.f32 %v591, 0.5
  %v663 = vmul.f32 %v392, 0.5
  %v664 = vmul.f32 %v594, 0.5
  %v665 = vmul.f32 %v395, 0.5
  %v666 = vmul.f32 %v597, 0.5
  %v667 = vmul.f32 %v398, 0.5
  %v668 = vmul.f32 %v600, 0.5
  %v669 = vmul.f32 %v401, 0.5
  %v670 = vmul.f32 %v603, 0.5
  %v671 = vmul.f32 %v404, 0.5
  %v672 = vmul.f32 %v606, 0.5
  %v673 = vmul.f32 %v407, 0.5
  %v674 = vmul.f32 %v609, 0.5
  %v675 = vmul.f32 %v410, 0.5
  %v676 = vmul.f32 %v612, 0.5
  %v677 = vmul.f32 %v413, 0.5
  %v678 = vmul.f32 %v615, 0.5
  %v679 = vmul.f32 %v416, 0.5
  %v680 = vmul.f32 %v618, 0.5
  %v681 = vmul.f32 %v419, 0.5
  %v682 = vmul.f32 %v621, 0.5
  %v683 = vmul.f32 %v422, 0.5
  %v684 = vmul.f32 %v624, 0.5
  %v685 = vmul.f32 %v425, 0.5
  %v686 = vmul.f32 %v627, 0.5
  %v687 = vmul.f32 %v428, 0.5
  %v688 = vmul.f32 %v630, 0.5
  %v689 = vmul.f32 %v431, 0.5
  %v690 = vmul.f32 %v633, 0.5
  %v691 = vtanh.pop %v635
  %v692 = vtanh.pop %v636
  %v693 = vtanh.pop %v637
  %v694 = vtanh.pop %v638
  %v695 = vtanh.pop %v639
  %v696 = vtanh.pop %v640
  %v697 = vtanh.pop %v641
  %v698 = vtanh.pop %v642
  %v699 = vtanh.pop %v643
  %v700 = vtanh.pop %v644
  %v701 = vtanh.pop %v645
  %v702 = vtanh.pop %v646
  %v703 = vtanh.pop %v647
  %v704 = vtanh.pop %v648
  %v705 = vtanh.pop %v649
  %v706 = vtanh.pop %v650
  %v707 = vtanh.pop %v651
  %v708 = vtanh.pop %v652
  %v709 = vtanh.pop %v653
  %v710 = vtanh.pop %v654
  %v711 = vtanh.pop %v655
  %v712 = vtanh.pop %v656
  %v713 = vtanh.pop %v657
  %v714 = vtanh.pop %v658
  %v715 = vtanh.pop %v659
  %v716 = vtanh.pop %v660
  %v717 = vtanh.pop %v661
  %v718 = vtanh.pop %v662
  %v719 = vtanh.pop %v663
  %v720 = vtanh.pop %v664
  %v721 = vtanh.pop %v665
  %v722 = vtanh.pop %v666
  %v723 = vtanh.pop %v667
  %v724 = vtanh.pop %v668
  %v725 = vtanh.pop %v669
  %v726 = vtanh.pop %v670
  %v727 = vtanh.pop %v671
  %v728 = vtanh.pop %v672
  %v729 = vtanh.pop %v673
  %v730 = vtanh.pop %v674
  %v731 = vtanh.pop %v675
  %v732 = vtanh.pop %v676
  %v733 = vtanh.pop %v677
  %v734 = vtanh.pop %v678
  %v735 = vtanh.pop %v679
  %v736 = vtanh.pop %v680
  %v737 = vtanh.pop %v681
  %v738 = vtanh.pop %v682
  %v739 = vtanh.pop %v683
  %v740 = vtanh.pop %v684
  %v741 = vtanh.pop %v685
  %v742 = vtanh.pop %v686
  %v743 = vtanh.pop %v687
  %v744 = vtanh.pop %v688
  %v745 = vtanh.pop %v689
  %v746 = vtanh.pop %v690
  %v747 = vmul.f32 %v691, 0.5
  %v748 = vmul.f32 %v692, 0.5
  %v749 = vmul.f32 %v693, 0.5
  %v750 = vmul.f32 %v694, 0.5
  %v751 = vmul.f32 %v695, 0.5
  %v752 = vmul.f32 %v696, 0.5
  %v753 = vmul.f32 %v697, 0.5
  %v754 = vmul.f32 %v698, 0.5
  %v755 = vmul.f32 %v699, 0.5
  %v756 = vmul.f32 %v700, 0.5
  %v757 = vmul.f32 %v701, 0.5
  %v758 = vmul.f32 %v702, 0.5
  %v759 = vmul.f32 %v703, 0.5
  %v760 = vmul.f32 %v704, 0.5
  %v761 = vmul.f32 %v705, 0.5
  %v762 = vmul.f32 %v706, 0.5
  %v763 = vmul.f32 %v707, 0.5
  %v764 = vmul.f32 %v708, 0.5
  %v765 = vmul.f32 %v709, 0.5
  %v766 = vmul.f32 %v710, 0.5
  %v767 = vmul.f32 %v711, 0.5
  %v768 = vmul.f32 %v712, 0.5
  %v769 = vmul.f32 %v713, 0.5
  %v770 = vmul.f32 %v714, 0.5
  %v771 = vmul.f32 %v715, 0.5
  %v772 = vmul.f32 %v716, 0.5
  %v773 = vmul.f32 %v717, 0.5
  %v774 = vmul.f32 %v718, 0.5
  %v775 = vmul.f32 %v719, 0.5
  %v776 = vmul.f32 %v720, 0.5
  %v777 = vmul.f32 %v721, 0.5
  %v778 = vmul.f32 %v722, 0.5
  %v779 = vmul.f32 %v723, 0.5
  %v780 = vmul.f32 %v724, 0.5
  %v781 = vmul.f32 %v725, 0.5
  %v782 = vmul.f32 %v726, 0.5
  %v783 = vmul.f32 %v727, 0.5
  %v784 = vmul.f32 %v728, 0.5
  %v785 = vmul.f32 %v729, 0.5
  %v786 = vmul.f32 %v730, 0.5
  %v787 = vmul.f32 %v731, 0.5
  %v788 = vmul.f32 %v732, 0.5
  %v789 = vmul.f32 %v733, 0.5
  %v790 = vmul.f32 %v734, 0.5
  %v791 = vmul.f32 %v735, 0.5
  %v792 = vmul.f32 %v736, 0.5
  %v793 = vmul.f32 %v737, 0.5
  %v794 = vmul.f32 %v738, 0.5
  %v795 = vmul.f32 %v739, 0.5
  %v796 = vmul.f32 %v740, 0.5
  %v797 = vmul.f32 %v741, 0.5
  %v798 = vmul.f32 %v742, 0.5
  %v799 = vmul.f32 %v743, 0.5
  %v800 = vmul.f32 %v744, 0.5
  %v801 = vmul.f32 %v745, 0.5
  %v802 = vmul.f32 %v746, 0.5
  %v803 = vadd.f32 %v747, 0.5
  %v804 = vadd.f32 %v748, 0.5
  %v805 = vadd.f32 %v749, 0.5
  %v806 = vadd.f32 %v750, 0.5
  %v807 = vadd.f32 %v751, 0.5
  %v808 = vadd.f32 %v752, 0.5
  %v809 = vadd.f32 %v753, 0.5
  %v810 = vadd.f32 %v754, 0.5
  %v811 = vadd.f32 %v755, 0.5
  %v812 = vadd.f32 %v756, 0.5
  %v813 = vadd.f32 %v757, 0.5
  %v814 = vadd.f32 %v758, 0.5
  %v815 = vadd.f32 %v759, 0.5
  %v816 = vadd.f32 %v760, 0.5
  %v817 = vadd.f32 %v761, 0.5
  %v818 = vadd.f32 %v762, 0.5
  %v819 = vadd.f32 %v763, 0.5
  %v820 = vadd.f32 %v764, 0.5
  %v821 = vadd.f32 %v765, 0.5
  %v822 = vadd.f32 %v766, 0.5
  %v823 = vadd.f32 %v767, 0.5
  %v824 = vadd.f32 %v768, 0.5
  %v825 = vadd.f32 %v769, 0.5
  %v826 = vadd.f32 %v770, 0.5
  %v827 = vadd.f32 %v771, 0.5
  %v828 = vadd.f32 %v772, 0.5
  %v829 = vadd.f32 %v773, 0.5
  %v830 = vadd.f32 %v774, 0.5
  %v831 = vadd.f32 %v775, 0.5
  %v832 = vadd.f32 %v776, 0.5
  %v833 = vadd.f32 %v777, 0.5
  %v834 = vadd.f32 %v778, 0.5
  %v835 = vadd.f32 %v779, 0.5
  %v836 = vadd.f32 %v780, 0.5
  %v837 = vadd.f32 %v781, 0.5
  %v838 = vadd.f32 %v782, 0.5
  %v839 = vadd.f32 %v783, 0.5
  %v840 = vadd.f32 %v784, 0.5
  %v841 = vadd.f32 %v785, 0.5
  %v842 = vadd.f32 %v786, 0.5
  %v843 = vadd.f32 %v787, 0.5
  %v844 = vadd.f32 %v788, 0.5
  %v845 = vadd.f32 %v789, 0.5
  %v846 = vadd.f32 %v790, 0.5
  %v847 = vadd.f32 %v791, 0.5
  %v848 = vadd.f32 %v792, 0.5
  %v849 = vadd.f32 %v793, 0.5
  %v850 = vadd.f32 %v794, 0.5
  %v851 = vadd.f32 %v795, 0.5
  %v852 = vadd.f32 %v796, 0.5
  %v853 = vadd.f32 %v797, 0.5
  %v854 = vadd.f32 %v798, 0.5
  %v855 = vadd.f32 %v799, 0.5
  %v856 = vadd.f32 %v800, 0.5
  %v857 = vadd.f32 %v801, 0.5
  %v858 = vadd.f32 %v802, 0.5
  %v859 = vld [vmem:[%s3] sm:$0xff]
  %v860 = vld [vmem:[%s3 + $0x8] sm:$0xff]
  %v861 = vld [vmem:[%s3 + $0x10] sm:$0xff]
  %v862 = vld [vmem:[%s3 + $0x18] sm:$0xff]
  %v863 = vld [vmem:[%s3 + $0x20] sm:$0xff]
  %v864 = vld [vmem:[%s3 + $0x28] sm:$0xff]
  %v865 = vld [vmem:[%s3 + $0x30] sm:$0xff]
  %v866 = vld [vmem:[%s3 + $0x38] sm:$0xff]
  %v867 = vld [vmem:[%s3 + $0x40] sm:$0xff]
  %v868 = vld [vmem:[%s3 + $0x48] sm:$0xff]
  %v869 = vld [vmem:[%s3 + $0x50] sm:$0xff]
  %v870 = vld [vmem:[%s3 + $0x58] sm:$0xff]
  %v871 = vld [vmem:[%s3 + $0x60] sm:$0xff]
  %v872 = vld [vmem:[%s3 + $0x68] sm:$0xff]
  %v873 = vld [vmem:[%s3 + $0x70] sm:$0xff]
  %v874 = vld [vmem:[%s3 + $0x78] sm:$0xff]
  %v875 = vld [vmem:[%s3 + $0x80] sm:$0xff]
  %v876 = vld [vmem:[%s3 + $0x88] sm:$0xff]
  %v877 = vld [vmem:[%s3 + $0x90] sm:$0xff]
  %v878 = vld [vmem:[%s3 + $0x98] sm:$0xff]
  %v879 = vld [vmem:[%s3 + $0xa0] sm:$0xff]
  %vm880 = vcmask 326656
  %v882 = vsel %vm880, %v804, 0
  %v885 = vsel %vm880, %v806, 0
  %v888 = vsel %vm880, %v808, 0
  %v891 = vsel %vm880, %v810, 0
  %v894 = vsel %vm880, %v812, 0
  %v897 = vsel %vm880, %v814, 0
  %v900 = vsel %vm880, %v816, 0
  %v903 = vsel %vm880, %v818, 0
  %v906 = vsel %vm880, %v820, 0
  %v909 = vsel %vm880, %v822, 0
  %v912 = vsel %vm880, %v824, 0
  %v915 = vsel %vm880, %v826, 0
  %v918 = vsel %vm880, %v828, 0
  %v921 = vsel %vm880, %v830, 0
  %v924 = vsel %vm880, %v832, 0
  %v927 = vsel %vm880, %v834, 0
  %v930 = vsel %vm880, %v836, 0
  %v933 = vsel %vm880, %v838, 0
  %v936 = vsel %vm880, %v840, 0
  %v939 = vsel %vm880, %v842, 0
  %v942 = vsel %vm880, %v844, 0
  %v945 = vsel %vm880, %v846, 0
  %v948 = vsel %vm880, %v848, 0
  %v951 = vsel %vm880, %v850, 0
  %v954 = vsel %vm880, %v852, 0
  %v957 = vsel %vm880, %v854, 0
  %v960 = vsel %vm880, %v856, 0
  %v963 = vsel %vm880, %v858, 0
  %965 = vmatpush.msra.mxu0 %v874
  %966 = vmatpush.msra.mxu0 %v873
  %967 = vmatpush.msra.mxu0 %v872
  %968 = vmatpush.msra.mxu0 %v871
  %969 = vmatpush.msra.mxu0 %v870
  %970 = vmatpush.msra.mxu0 %v869
  %971 = vmatpush.msra.mxu0 %v868
  %972 = vmatpush.msra.mxu0 %v867
  %973 = vmatpush.msra.mxu0 %v866
  %974 = vmatpush.msra.mxu0 %v865
  %975 = vmatpush.msra.mxu0 %v864
  %976 = vmatpush.msra.mxu0 %v863
  %977 = vmatpush.msra.mxu0 %v862
  %978 = vmatpush.msra.mxu0 %v861
  %979 = vmatpush.msra.mxu0 %v860
  %980 = vmatpush.msra.mxu0 %v859
  %981 = vmatmul.f32.gmra.mxu0 %v803
  %v982 = vpop.f32.mrf.mxu0
  %v983 = vadd.f32 0.0, %v982
  %984 = vmatmul.f32.gmra.mxu0 %v805
  %v985 = vpop.f32.mrf.mxu0
  %v986 = vadd.f32 0.0, %v985
  %987 = vmatmul.f32.gmra.mxu0 %v807
  %v988 = vpop.f32.mrf.mxu0
  %v989 = vadd.f32 0.0, %v988
  %990 = vmatmul.f32.gmra.mxu0 %v809
  %v991 = vpop.f32.mrf.mxu0
  %v992 = vadd.f32 0.0, %v991
  %993 = vmatmul.f32.gmra.mxu0 %v811
  %v994 = vpop.f32.mrf.mxu0
  %v995 = vadd.f32 0.0, %v994
  %996 = vmatmul.f32.gmra.mxu0 %v813
  %v997 = vpop.f32.mrf.mxu0
  %v998 = vadd.f32 0.0, %v997
  %999 = vmatmul.f32.gmra.mxu0 %v815
  %v1000 = vpop.f32.mrf.mxu0
  %v1001 = vadd.f32 0.0, %v1000
  %1002 = vmatmul.f32.gmra.mxu0 %v817
  %v1003 = vpop.f32.mrf.mxu0
  %v1004 = vadd.f32 0.0, %v1003
  %1005 = vmatmul.f32.gmra.mxu0 %v819
  %v1006 = vpop.f32.mrf.mxu0
  %v1007 = vadd.f32 0.0, %v1006
  %1008 = vmatmul.f32.gmra.mxu0 %v821
  %v1009 = vpop.f32.mrf.mxu0
  %v1010 = vadd.f32 0.0, %v1009
  %1011 = vmatmul.f32.gmra.mxu0 %v823
  %v1012 = vpop.f32.mrf.mxu0
  %v1013 = vadd.f32 0.0, %v1012
  %1014 = vmatmul.f32.gmra.mxu0 %v825
  %v1015 = vpop.f32.mrf.mxu0
  %v1016 = vadd.f32 0.0, %v1015
  %1017 = vmatmul.f32.gmra.mxu0 %v827
  %v1018 = vpop.f32.mrf.mxu0
  %v1019 = vadd.f32 0.0, %v1018
  %1020 = vmatmul.f32.gmra.mxu0 %v829
  %v1021 = vpop.f32.mrf.mxu0
  %v1022 = vadd.f32 0.0, %v1021
  %1023 = vmatmul.f32.gmra.mxu0 %v831
  %v1024 = vpop.f32.mrf.mxu0
  %v1025 = vadd.f32 0.0, %v1024
  %1026 = vmatmul.f32.gmra.mxu0 %v833
  %v1027 = vpop.f32.mrf.mxu0
  %v1028 = vadd.f32 0.0, %v1027
  %1029 = vmatmul.f32.gmra.mxu0 %v835
  %v1030 = vpop.f32.mrf.mxu0
  %v1031 = vadd.f32 0.0, %v1030
  %1032 = vmatmul.f32.gmra.mxu0 %v837
  %v1033 = vpop.f32.mrf.mxu0
  %v1034 = vadd.f32 0.0, %v1033
  %1035 = vmatmul.f32.gmra.mxu0 %v839
  %v1036 = vpop.f32.mrf.mxu0
  %v1037 = vadd.f32 0.0, %v1036
  %1038 = vmatmul.f32.gmra.mxu0 %v841
  %v1039 = vpop.f32.mrf.mxu0
  %v1040 = vadd.f32 0.0, %v1039
  %1041 = vmatmul.f32.gmra.mxu0 %v843
  %v1042 = vpop.f32.mrf.mxu0
  %v1043 = vadd.f32 0.0, %v1042
  %1044 = vmatmul.f32.gmra.mxu0 %v845
  %v1045 = vpop.f32.mrf.mxu0
  %v1046 = vadd.f32 0.0, %v1045
  %1047 = vmatmul.f32.gmra.mxu0 %v847
  %v1048 = vpop.f32.mrf.mxu0
  %v1049 = vadd.f32 0.0, %v1048
  %1050 = vmatmul.f32.gmra.mxu0 %v849
  %v1051 = vpop.f32.mrf.mxu0
  %v1052 = vadd.f32 0.0, %v1051
  %1053 = vmatmul.f32.gmra.mxu0 %v851
  %v1054 = vpop.f32.mrf.mxu0
  %v1055 = vadd.f32 0.0, %v1054
  %1056 = vmatmul.f32.gmra.mxu0 %v853
  %v1057 = vpop.f32.mrf.mxu0
  %v1058 = vadd.f32 0.0, %v1057
  %1059 = vmatmul.f32.gmra.mxu0 %v855
  %v1060 = vpop.f32.mrf.mxu0
  %v1061 = vadd.f32 0.0, %v1060
  %1062 = vmatmul.f32.gmra.mxu0 %v857
  %v1063 = vpop.f32.mrf.mxu0
  %v1064 = vadd.f32 0.0, %v1063
  %1065 = vdwg.mxu0
  %1066 = vmatpush.msra.mxu0 0.0
  %1067 = vmatpush.msra.mxu0 0.0
  %1068 = vmatpush.msra.mxu0 0.0
  %1069 = vmatpush.msra.mxu0 0.0
  %1070 = vmatpush.msra.mxu0 0.0
  %1071 = vmatpush.msra.mxu0 0.0
  %1072 = vmatpush.msra.mxu0 0.0
  %1073 = vmatpush.msra.mxu0 0.0
  %1074 = vmatpush.msra.mxu0 0.0
  %1075 = vmatpush.msra.mxu0 0.0
  %1076 = vmatpush.msra.mxu0 0.0
  %1077 = vmatpush.msra.mxu0 %v879
  %1078 = vmatpush.msra.mxu0 %v878
  %1079 = vmatpush.msra.mxu0 %v877
  %1080 = vmatpush.msra.mxu0 %v876
  %1081 = vmatpush.msra.mxu0 %v875
  %1082 = vmatmul.f32.gmra.mxu0 %v882
  %v1083 = vpop.f32.mrf.mxu0
  %v1084 = vadd.f32 %v983, %v1083
  %1085 = vmatmul.f32.gmra.mxu0 %v885
  %v1086 = vpop.f32.mrf.mxu0
  %v1087 = vadd.f32 %v986, %v1086
  %1088 = vmatmul.f32.gmra.mxu0 %v888
  %v1089 = vpop.f32.mrf.mxu0
  %v1090 = vadd.f32 %v989, %v1089
  %1091 = vmatmul.f32.gmra.mxu0 %v891
  %v1092 = vpop.f32.mrf.mxu0
  %v1093 = vadd.f32 %v992, %v1092
  %1094 = vmatmul.f32.gmra.mxu0 %v894
  %v1095 = vpop.f32.mrf.mxu0
  %v1096 = vadd.f32 %v995, %v1095
  %1097 = vmatmul.f32.gmra.mxu0 %v897
  %v1098 = vpop.f32.mrf.mxu0
  %v1099 = vadd.f32 %v998, %v1098
  %1100 = vmatmul.f32.gmra.mxu0 %v900
  %v1101 = vpop.f32.mrf.mxu0
  %v1102 = vadd.f32 %v1001, %v1101
  %1103 = vmatmul.f32.gmra.mxu0 %v903
  %v1104 = vpop.f32.mrf.mxu0
  %v1105 = vadd.f32 %v1004, %v1104
  %1106 = vmatmul.f32.gmra.mxu0 %v906
  %v1107 = vpop.f32.mrf.mxu0
  %v1108 = vadd.f32 %v1007, %v1107
  %1109 = vmatmul.f32.gmra.mxu0 %v909
  %v1110 = vpop.f32.mrf.mxu0
  %v1111 = vadd.f32 %v1010, %v1110
  %1112 = vmatmul.f32.gmra.mxu0 %v912
  %v1113 = vpop.f32.mrf.mxu0
  %v1114 = vadd.f32 %v1013, %v1113
  %1115 = vmatmul.f32.gmra.mxu0 %v915
  %v1116 = vpop.f32.mrf.mxu0
  %v1117 = vadd.f32 %v1016, %v1116
  %1118 = vmatmul.f32.gmra.mxu0 %v918
  %v1119 = vpop.f32.mrf.mxu0
  %v1120 = vadd.f32 %v1019, %v1119
  %1121 = vmatmul.f32.gmra.mxu0 %v921
  %v1122 = vpop.f32.mrf.mxu0
  %v1123 = vadd.f32 %v1022, %v1122
  %1124 = vmatmul.f32.gmra.mxu0 %v924
  %v1125 = vpop.f32.mrf.mxu0
  %v1126 = vadd.f32 %v1025, %v1125
  %1127 = vmatmul.f32.gmra.mxu0 %v927
  %v1128 = vpop.f32.mrf.mxu0
  %v1129 = vadd.f32 %v1028, %v1128
  %1130 = vmatmul.f32.gmra.mxu0 %v930
  %v1131 = vpop.f32.mrf.mxu0
  %v1132 = vadd.f32 %v1031, %v1131
  %1133 = vmatmul.f32.gmra.mxu0 %v933
  %v1134 = vpop.f32.mrf.mxu0
  %v1135 = vadd.f32 %v1034, %v1134
  %1136 = vmatmul.f32.gmra.mxu0 %v936
  %v1137 = vpop.f32.mrf.mxu0
  %v1138 = vadd.f32 %v1037, %v1137
  %1139 = vmatmul.f32.gmra.mxu0 %v939
  %v1140 = vpop.f32.mrf.mxu0
  %v1141 = vadd.f32 %v1040, %v1140
  %1142 = vmatmul.f32.gmra.mxu0 %v942
  %v1143 = vpop.f32.mrf.mxu0
  %v1144 = vadd.f32 %v1043, %v1143
  %1145 = vmatmul.f32.gmra.mxu0 %v945
  %v1146 = vpop.f32.mrf.mxu0
  %v1147 = vadd.f32 %v1046, %v1146
  %1148 = vmatmul.f32.gmra.mxu0 %v948
  %v1149 = vpop.f32.mrf.mxu0
  %v1150 = vadd.f32 %v1049, %v1149
  %1151 = vmatmul.f32.gmra.mxu0 %v951
  %v1152 = vpop.f32.mrf.mxu0
  %v1153 = vadd.f32 %v1052, %v1152
  %1154 = vmatmul.f32.gmra.mxu0 %v954
  %v1155 = vpop.f32.mrf.mxu0
  %v1156 = vadd.f32 %v1055, %v1155
  %1157 = vmatmul.f32.gmra.mxu0 %v957
  %v1158 = vpop.f32.mrf.mxu0
  %v1159 = vadd.f32 %v1058, %v1158
  %1160 = vmatmul.f32.gmra.mxu0 %v960
  %v1161 = vpop.f32.mrf.mxu0
  %v1162 = vadd.f32 %v1061, %v1161
  %1163 = vmatmul.f32.gmra.mxu0 %v963
  %v1164 = vpop.f32.mrf.mxu0
  %v1165 = vadd.f32 %v1064, %v1164
  %1166 = vdwg.mxu0
  %v1167 = vadd.f32 %v1084, %v1087
  %1168 = vst [vmem:[#allocation2] sm:$0xff] %v1167
  %v1169 = vadd.f32 %v1090, %v1093
  %1170 = vst [vmem:[#allocation2 + $0x8] sm:$0xff] %v1169
  %v1171 = vadd.f32 %v1096, %v1099
  %1172 = vst [vmem:[#allocation2 + $0x10] sm:$0xff] %v1171
  %v1173 = vadd.f32 %v1102, %v1105
  %1174 = vst [vmem:[#allocation2 + $0x18] sm:$0xff] %v1173
  %v1175 = vadd.f32 %v1108, %v1111
  %1176 = vst [vmem:[#allocation2 + $0x20] sm:$0xff] %v1175
  %v1177 = vadd.f32 %v1114, %v1117
  %1178 = vst [vmem:[#allocation2 + $0x28] sm:$0xff] %v1177
  %v1179 = vadd.f32 %v1120, %v1123
  %1180 = vst [vmem:[#allocation2 + $0x30] sm:$0xff] %v1179
  %v1181 = vadd.f32 %v1126, %v1129
  %1182 = vst [vmem:[#allocation2 + $0x38] sm:$0xff] %v1181
  %v1183 = vadd.f32 %v1132, %v1135
  %1184 = vst [vmem:[#allocation2 + $0x40] sm:$0xff] %v1183
  %v1185 = vadd.f32 %v1138, %v1141
  %1186 = vst [vmem:[#allocation2 + $0x48] sm:$0xff] %v1185
  %v1187 = vadd.f32 %v1144, %v1147
  %1188 = vst [vmem:[#allocation2 + $0x50] sm:$0xff] %v1187
  %v1189 = vadd.f32 %v1150, %v1153
  %1190 = vst [vmem:[#allocation2 + $0x58] sm:$0xff] %v1189
  %v1191 = vadd.f32 %v1156, %v1159
  %1192 = vst [vmem:[#allocation2 + $0x60] sm:$0xff] %v1191
  %v1193 = vadd.f32 %v1162, %v1165
  %1194 = vst [vmem:[#allocation2 + $0x68] sm:$0xff] %v1193
  %v1195 = vld [vmem:[#allocation2] sm:$0xff]
  %v1196 = vld [vmem:[#allocation2 + $0x8] sm:$0xff]
  %v1197 = vld [vmem:[#allocation2 + $0x10] sm:$0xff]
  %v1198 = vld [vmem:[#allocation2 + $0x18] sm:$0xff]
  %v1199 = vld [vmem:[#allocation2 + $0x20] sm:$0xff]
  %v1200 = vld [vmem:[#allocation2 + $0x28] sm:$0xff]
  %v1201 = vld [vmem:[#allocation2 + $0x30] sm:$0xff]
  %v1202 = vld [vmem:[#allocation2 + $0x38] sm:$0xff]
  %v1203 = vld [vmem:[#allocation2 + $0x40] sm:$0xff]
  %v1204 = vld [vmem:[#allocation2 + $0x48] sm:$0xff]
  %v1205 = vld [vmem:[%s4] sm:$0xff]
  %v1206 = vld [vmem:[%s4 + $0x8] sm:$0xff]
  %v1207 = vld [vmem:[%s4 + $0x10] sm:$0xff]
  %v1208 = vld [vmem:[%s4 + $0x18] sm:$0xff]
  %v1209 = vld [vmem:[%s4 + $0x20] sm:$0xff]
  %v1210 = vld [vmem:[%s4 + $0x28] sm:$0xff]
  %v1211 = vld [vmem:[%s4 + $0x30] sm:$0xff]
  %v1212 = vld [vmem:[%s4 + $0x38] sm:$0xff]
  %v1213 = vld [vmem:[%s4 + $0x40] sm:$0xff]
  %v1214 = vld [vmem:[%s4 + $0x48] sm:$0xff]
  %v1215 = vld [vmem:[%s4 + $0x50] sm:$0xff]
  %v1216 = vld [vmem:[%s4 + $0x58] sm:$0xff]
  %v1217 = vld [vmem:[%s4 + $0x60] sm:$0xff]
  %v1218 = vld [vmem:[%s4 + $0x68] sm:$0xff]
  %v1219 = vld [vmem:[%s4 + $0x70] sm:$0xff]
  %v1220 = vld [vmem:[%s4 + $0x78] sm:$0xff]
  %v1221 = vld [vmem:[%s4 + $0x80] sm:$0xff]
  %v1222 = vld [vmem:[%s4 + $0x88] sm:$0xff]
  %v1223 = vld [vmem:[%s4 + $0x90] sm:$0xff]
  %v1224 = vld [vmem:[%s4 + $0x98] sm:$0xff]
  %v1225 = vld [vmem:[%s4 + $0xa0] sm:$0xff]
  %v1226 = vld [vmem:[%s4 + $0xa8] sm:$0xff]
  %v1227 = vld [vmem:[%s4 + $0xb0] sm:$0xff]
  %v1228 = vld [vmem:[%s4 + $0xb8] sm:$0xff]
  %v1229 = vld [vmem:[%s4 + $0xc0] sm:$0xff]
  %v1230 = vld [vmem:[%s4 + $0xc8] sm:$0xff]
  %v1231 = vld [vmem:[%s4 + $0xd0] sm:$0xff]
  %v1232 = vld [vmem:[%s4 + $0xd8] sm:$0xff]
  %v1233 = vld [vmem:[%s4 + $0xe0] sm:$0xff]
  %v1234 = vld [vmem:[%s4 + $0xe8] sm:$0xff]
  %v1235 = vld [vmem:[%s4 + $0xf0] sm:$0xff]
  %v1236 = vld [vmem:[%s4 + $0xf8] sm:$0xff]
  %v1237 = vld [vmem:[#allocation2 + $0x50] sm:$0xff]
  %s1238 = scalar_lea.vmem %s4, 256
  %v1239 = vld [vmem:[%s1238] sm:$0xff]
  %v1240 = vld [vmem:[%s1238 + $0x8] sm:$0xff]
  %v1241 = vld [vmem:[%s1238 + $0x10] sm:$0xff]
  %v1242 = vld [vmem:[%s1238 + $0x18] sm:$0xff]
  %v1243 = vld [vmem:[%s1238 + $0x20] sm:$0xff]
  %v1244 = vld [vmem:[%s1238 + $0x28] sm:$0xff]
  %v1245 = vld [vmem:[%s1238 + $0x30] sm:$0xff]
  %v1246 = vld [vmem:[%s1238 + $0x38] sm:$0xff]
  %v1247 = vld [vmem:[%s1238 + $0x40] sm:$0xff]
  %v1248 = vld [vmem:[%s1238 + $0x48] sm:$0xff]
  %v1249 = vld [vmem:[%s1238 + $0x50] sm:$0xff]
  %v1250 = vld [vmem:[%s1238 + $0x58] sm:$0xff]
  %v1251 = vld [vmem:[%s1238 + $0x60] sm:$0xff]
  %v1252 = vld [vmem:[%s1238 + $0x68] sm:$0xff]
  %v1253 = vld [vmem:[%s1238 + $0x70] sm:$0xff]
  %v1254 = vld [vmem:[%s1238 + $0x78] sm:$0xff]
  %v1255 = vld [vmem:[%s1238 + $0x80] sm:$0xff]
  %v1256 = vld [vmem:[%s1238 + $0x88] sm:$0xff]
  %v1257 = vld [vmem:[%s1238 + $0x90] sm:$0xff]
  %v1258 = vld [vmem:[%s1238 + $0x98] sm:$0xff]
  %v1259 = vld [vmem:[%s1238 + $0xa0] sm:$0xff]
  %v1260 = vld [vmem:[%s1238 + $0xa8] sm:$0xff]
  %v1261 = vld [vmem:[%s1238 + $0xb0] sm:$0xff]
  %v1262 = vld [vmem:[%s1238 + $0xb8] sm:$0xff]
  %v1263 = vld [vmem:[%s1238 + $0xc0] sm:$0xff]
  %v1264 = vld [vmem:[%s1238 + $0xc8] sm:$0xff]
  %v1265 = vld [vmem:[%s1238 + $0xd0] sm:$0xff]
  %v1266 = vld [vmem:[%s1238 + $0xd8] sm:$0xff]
  %v1267 = vld [vmem:[%s1238 + $0xe0] sm:$0xff]
  %v1268 = vld [vmem:[%s1238 + $0xe8] sm:$0xff]
  %v1269 = vld [vmem:[%s1238 + $0xf0] sm:$0xff]
  %v1270 = vld [vmem:[%s1238 + $0xf8] sm:$0xff]
  %1271 = vmatpush.msra.mxu0 %v1269
  %1272 = vmatpush.msra.mxu0 %v1267
  %1273 = vmatpush.msra.mxu0 %v1265
  %1274 = vmatpush.msra.mxu0 %v1263
  %1275 = vmatpush.msra.mxu0 %v1261
  %1276 = vmatpush.msra.mxu0 %v1259
  %1277 = vmatpush.msra.mxu0 %v1257
  %1278 = vmatpush.msra.mxu0 %v1255
  %1279 = vmatpush.msra.mxu0 %v1253
  %1280 = vmatpush.msra.mxu0 %v1251
  %1281 = vmatpush.msra.mxu0 %v1249
  %1282 = vmatpush.msra.mxu0 %v1247
  %1283 = vmatpush.msra.mxu0 %v1245
  %1284 = vmatpush.msra.mxu0 %v1243
  %1285 = vmatpush.msra.mxu0 %v1241
  %1286 = vmatpush.msra.mxu0 %v1239
  %1287 = vmatmul.f32.gmra.mxu0 %v1196
  %v1288 = vpop.f32.mrf.mxu0
  %v1289 = vadd.f32 0.0, %v1288
  %1290 = vmatmul.f32.gmra.mxu0 %v1197
  %v1291 = vpop.f32.mrf.mxu0
  %v1292 = vadd.f32 0.0, %v1291
  %1293 = vmatmul.f32.gmra.mxu0 %v1198
  %v1294 = vpop.f32.mrf.mxu0
  %v1295 = vadd.f32 0.0, %v1294
  %1296 = vmatmul.f32.gmra.mxu0 %v1199
  %v1297 = vpop.f32.mrf.mxu0
  %v1298 = vadd.f32 0.0, %v1297
  %1299 = vmatmul.f32.gmra.mxu0 %v1200
  %v1300 = vpop.f32.mrf.mxu0
  %v1301 = vadd.f32 0.0, %v1300
  %1302 = vmatmul.f32.gmra.mxu0 %v1201
  %v1303 = vpop.f32.mrf.mxu0
  %v1304 = vadd.f32 0.0, %v1303
  %1305 = vmatmul.f32.gmra.mxu0 %v1202
  %v1306 = vpop.f32.mrf.mxu0
  %v1307 = vadd.f32 0.0, %v1306
  %1308 = vmatmul.f32.gmra.mxu0 %v1203
  %v1309 = vpop.f32.mrf.mxu0
  %v1310 = vadd.f32 0.0, %v1309
  %1311 = vmatmul.f32.gmra.mxu0 %v1204
  %v1312 = vpop.f32.mrf.mxu0
  %v1313 = vadd.f32 0.0, %v1312
  %1314 = vmatmul.f32.gmra.mxu0 %v1237
  %v1315 = vpop.f32.mrf.mxu0
  %v1316 = vadd.f32 0.0, %v1315
  %1317 = vdwg.mxu0
  %1318 = vmatpush.msra.mxu0 %v1270
  %1319 = vmatpush.msra.mxu0 %v1268
  %1320 = vmatpush.msra.mxu0 %v1266
  %1321 = vmatpush.msra.mxu0 %v1264
  %1322 = vmatpush.msra.mxu0 %v1262
  %1323 = vmatpush.msra.mxu0 %v1260
  %1324 = vmatpush.msra.mxu0 %v1258
  %1325 = vmatpush.msra.mxu0 %v1256
  %1326 = vmatpush.msra.mxu0 %v1254
  %1327 = vmatpush.msra.mxu0 %v1252
  %1328 = vmatpush.msra.mxu0 %v1250
  %1329 = vmatpush.msra.mxu0 %v1248
  %1330 = vmatpush.msra.mxu0 %v1246
  %1331 = vmatpush.msra.mxu0 %v1244
  %1332 = vmatpush.msra.mxu0 %v1242
  %1333 = vmatpush.msra.mxu0 %v1240
  %1334 = vmatmul.f32.gmra.mxu0 %v1196
  %v1335 = vpop.f32.mrf.mxu0
  %v1336 = vadd.f32 0.0, %v1335
  %1337 = vmatmul.f32.gmra.mxu0 %v1197
  %v1338 = vpop.f32.mrf.mxu0
  %v1339 = vadd.f32 0.0, %v1338
  %1340 = vmatmul.f32.gmra.mxu0 %v1198
  %v1341 = vpop.f32.mrf.mxu0
  %v1342 = vadd.f32 0.0, %v1341
  %1343 = vmatmul.f32.gmra.mxu0 %v1199
  %v1344 = vpop.f32.mrf.mxu0
  %v1345 = vadd.f32 0.0, %v1344
  %1346 = vmatmul.f32.gmra.mxu0 %v1200
  %v1347 = vpop.f32.mrf.mxu0
  %v1348 = vadd.f32 0.0, %v1347
  %1349 = vmatmul.f32.gmra.mxu0 %v1201
  %v1350 = vpop.f32.mrf.mxu0
  %v1351 = vadd.f32 0.0, %v1350
  %1352 = vmatmul.f32.gmra.mxu0 %v1202
  %v1353 = vpop.f32.mrf.mxu0
  %v1354 = vadd.f32 0.0, %v1353
  %1355 = vmatmul.f32.gmra.mxu0 %v1203
  %v1356 = vpop.f32.mrf.mxu0
  %v1357 = vadd.f32 0.0, %v1356
  %1358 = vmatmul.f32.gmra.mxu0 %v1204
  %v1359 = vpop.f32.mrf.mxu0
  %v1360 = vadd.f32 0.0, %v1359
  %1361 = vmatmul.f32.gmra.mxu0 %v1237
  %v1362 = vpop.f32.mrf.mxu0
  %v1363 = vadd.f32 0.0, %v1362
  %1364 = vdwg.mxu0
  %1365 = vmatpush.msra.mxu0 %v1235
  %1366 = vmatpush.msra.mxu0 %v1233
  %1367 = vmatpush.msra.mxu0 %v1231
  %1368 = vmatpush.msra.mxu0 %v1229
  %1369 = vmatpush.msra.mxu0 %v1227
  %1370 = vmatpush.msra.mxu0 %v1225
  %1371 = vmatpush.msra.mxu0 %v1223
  %1372 = vmatpush.msra.mxu0 %v1221
  %1373 = vmatpush.msra.mxu0 %v1219
  %1374 = vmatpush.msra.mxu0 %v1217
  %1375 = vmatpush.msra.mxu0 %v1215
  %1376 = vmatpush.msra.mxu0 %v1213
  %1377 = vmatpush.msra.mxu0 %v1211
  %1378 = vmatpush.msra.mxu0 %v1209
  %1379 = vmatpush.msra.mxu0 %v1207
  %1380 = vmatpush.msra.mxu0 %v1205
  %1381 = vmatmul.f32.gmra.mxu0 %v1195
  %v1382 = vpop.f32.mrf.mxu0
  %v1383 = vadd.f32 %v1289, %v1382
  %1384 = vmatmul.f32.gmra.mxu0 %v1196
  %v1385 = vpop.f32.mrf.mxu0
  %v1386 = vadd.f32 %v1292, %v1385
  %1387 = vmatmul.f32.gmra.mxu0 %v1197
  %v1388 = vpop.f32.mrf.mxu0
  %v1389 = vadd.f32 %v1295, %v1388
  %1390 = vmatmul.f32.gmra.mxu0 %v1198
  %v1391 = vpop.f32.mrf.mxu0
  %v1392 = vadd.f32 %v1298, %v1391
  %1393 = vmatmul.f32.gmra.mxu0 %v1199
  %v1394 = vpop.f32.mrf.mxu0
  %v1395 = vadd.f32 %v1301, %v1394
  %1396 = vmatmul.f32.gmra.mxu0 %v1200
  %v1397 = vpop.f32.mrf.mxu0
  %v1398 = vadd.f32 %v1304, %v1397
  %1399 = vmatmul.f32.gmra.mxu0 %v1201
  %v1400 = vpop.f32.mrf.mxu0
  %v1401 = vadd.f32 %v1307, %v1400
  %1402 = vmatmul.f32.gmra.mxu0 %v1202
  %v1403 = vpop.f32.mrf.mxu0
  %v1404 = vadd.f32 %v1310, %v1403
  %1405 = vmatmul.f32.gmra.mxu0 %v1203
  %v1406 = vpop.f32.mrf.mxu0
  %v1407 = vadd.f32 %v1313, %v1406
  %1408 = vmatmul.f32.gmra.mxu0 %v1204
  %v1409 = vpop.f32.mrf.mxu0
  %v1410 = vadd.f32 %v1316, %v1409
  %1411 = vdwg.mxu0
  %1412 = vmatpush.msra.mxu0 %v1236
  %1413 = vmatpush.msra.mxu0 %v1234
  %1414 = vmatpush.msra.mxu0 %v1232
  %1415 = vmatpush.msra.mxu0 %v1230
  %1416 = vmatpush.msra.mxu0 %v1228
  %1417 = vmatpush.msra.mxu0 %v1226
  %1418 = vmatpush.msra.mxu0 %v1224
  %1419 = vmatpush.msra.mxu0 %v1222
  %1420 = vmatpush.msra.mxu0 %v1220
  %1421 = vmatpush.msra.mxu0 %v1218
  %1422 = vmatpush.msra.mxu0 %v1216
  %1423 = vmatpush.msra.mxu0 %v1214
  %1424 = vmatpush.msra.mxu0 %v1212
  %1425 = vmatpush.msra.mxu0 %v1210
  %1426 = vmatpush.msra.mxu0 %v1208
  %1427 = vmatpush.msra.mxu0 %v1206
  %1428 = vmatmul.f32.gmra.mxu0 %v1195
  %v1429 = vpop.f32.mrf.mxu0
  %v1430 = vadd.f32 %v1336, %v1429
  %1431 = vmatmul.f32.gmra.mxu0 %v1196
  %v1432 = vpop.f32.mrf.mxu0
  %v1433 = vadd.f32 %v1339, %v1432
  %1434 = vmatmul.f32.gmra.mxu0 %v1197
  %v1435 = vpop.f32.mrf.mxu0
  %v1436 = vadd.f32 %v1342, %v1435
  %1437 = vmatmul.f32.gmra.mxu0 %v1198
  %v1438 = vpop.f32.mrf.mxu0
  %v1439 = vadd.f32 %v1345, %v1438
  %1440 = vmatmul.f32.gmra.mxu0 %v1199
  %v1441 = vpop.f32.mrf.mxu0
  %v1442 = vadd.f32 %v1348, %v1441
  %1443 = vmatmul.f32.gmra.mxu0 %v1200
  %v1444 = vpop.f32.mrf.mxu0
  %v1445 = vadd.f32 %v1351, %v1444
  %1446 = vmatmul.f32.gmra.mxu0 %v1201
  %v1447 = vpop.f32.mrf.mxu0
  %v1448 = vadd.f32 %v1354, %v1447
  %1449 = vmatmul.f32.gmra.mxu0 %v1202
  %v1450 = vpop.f32.mrf.mxu0
  %v1451 = vadd.f32 %v1357, %v1450
  %1452 = vmatmul.f32.gmra.mxu0 %v1203
  %v1453 = vpop.f32.mrf.mxu0
  %v1454 = vadd.f32 %v1360, %v1453
  %1455 = vmatmul.f32.gmra.mxu0 %v1204
  %v1456 = vpop.f32.mrf.mxu0
  %v1457 = vadd.f32 %v1363, %v1456
  %1458 = vdwg.mxu0
  %v1459 = vld [vmem:[#allocation2 + $0x10] sm:$0xff]
  %v1460 = vld [vmem:[#allocation2 + $0x18] sm:$0xff]
  %v1461 = vld [vmem:[#allocation2 + $0x20] sm:$0xff]
  %v1462 = vld [vmem:[#allocation2 + $0x28] sm:$0xff]
  %v1463 = vld [vmem:[#allocation2 + $0x30] sm:$0xff]
  %v1464 = vld [vmem:[#allocation2 + $0x38] sm:$0xff]
  %v1465 = vld [vmem:[#allocation2 + $0x40] sm:$0xff]
  %v1466 = vld [vmem:[#allocation2 + $0x48] sm:$0xff]
  %v1467 = vld [vmem:[#allocation2 + $0x50] sm:$0xff]
  %v1468 = vld [vmem:[#allocation2 + $0x58] sm:$0xff]
  %s1469 = scalar_lea.vmem %s4, 512
  %v1470 = vld [vmem:[%s1469] sm:$0xff]
  %v1471 = vld [vmem:[%s1469 + $0x8] sm:$0xff]
  %v1472 = vld [vmem:[%s1469 + $0x10] sm:$0xff]
  %v1473 = vld [vmem:[%s1469 + $0x18] sm:$0xff]
  %v1474 = vld [vmem:[%s1469 + $0x20] sm:$0xff]
  %v1475 = vld [vmem:[%s1469 + $0x28] sm:$0xff]
  %v1476 = vld [vmem:[%s1469 + $0x30] sm:$0xff]
  %v1477 = vld [vmem:[%s1469 + $0x38] sm:$0xff]
  %v1478 = vld [vmem:[%s1469 + $0x40] sm:$0xff]
  %v1479 = vld [vmem:[%s1469 + $0x48] sm:$0xff]
  %v1480 = vld [vmem:[%s1469 + $0x50] sm:$0xff]
  %v1481 = vld [vmem:[%s1469 + $0x58] sm:$0xff]
  %v1482 = vld [vmem:[%s1469 + $0x60] sm:$0xff]
  %v1483 = vld [vmem:[%s1469 + $0x68] sm:$0xff]
  %v1484 = vld [vmem:[%s1469 + $0x70] sm:$0xff]
  %v1485 = vld [vmem:[%s1469 + $0x78] sm:$0xff]
  %v1486 = vld [vmem:[%s1469 + $0x80] sm:$0xff]
  %v1487 = vld [vmem:[%s1469 + $0x88] sm:$0xff]
  %v1488 = vld [vmem:[%s1469 + $0x90] sm:$0xff]
  %v1489 = vld [vmem:[%s1469 + $0x98] sm:$0xff]
  %v1490 = vld [vmem:[%s1469 + $0xa0] sm:$0xff]
  %v1491 = vld [vmem:[%s1469 + $0xa8] sm:$0xff]
  %v1492 = vld [vmem:[%s1469 + $0xb0] sm:$0xff]
  %v1493 = vld [vmem:[%s1469 + $0xb8] sm:$0xff]
  %v1494 = vld [vmem:[%s1469 + $0xc0] sm:$0xff]
  %v1495 = vld [vmem:[%s1469 + $0xc8] sm:$0xff]
  %v1496 = vld [vmem:[%s1469 + $0xd0] sm:$0xff]
  %v1497 = vld [vmem:[%s1469 + $0xd8] sm:$0xff]
  %v1498 = vld [vmem:[%s1469 + $0xe0] sm:$0xff]
  %v1499 = vld [vmem:[%s1469 + $0xe8] sm:$0xff]
  %v1500 = vld [vmem:[%s1469 + $0xf0] sm:$0xff]
  %v1501 = vld [vmem:[%s1469 + $0xf8] sm:$0xff]
  %1502 = vmatpush.msra.mxu0 %v1500
  %1503 = vmatpush.msra.mxu0 %v1498
  %1504 = vmatpush.msra.mxu0 %v1496
  %1505 = vmatpush.msra.mxu0 %v1494
  %1506 = vmatpush.msra.mxu0 %v1492
  %1507 = vmatpush.msra.mxu0 %v1490
  %1508 = vmatpush.msra.mxu0 %v1488
  %1509 = vmatpush.msra.mxu0 %v1486
  %1510 = vmatpush.msra.mxu0 %v1484
  %1511 = vmatpush.msra.mxu0 %v1482
  %1512 = vmatpush.msra.mxu0 %v1480
  %1513 = vmatpush.msra.mxu0 %v1478
  %1514 = vmatpush.msra.mxu0 %v1476
  %1515 = vmatpush.msra.mxu0 %v1474
  %1516 = vmatpush.msra.mxu0 %v1472
  %1517 = vmatpush.msra.mxu0 %v1470
  %1518 = vmatmul.f32.gmra.mxu0 %v1459
  %v1519 = vpop.f32.mrf.mxu0
  %v1520 = vadd.f32 0.0, %v1519
  %1521 = vmatmul.f32.gmra.mxu0 %v1460
  %v1522 = vpop.f32.mrf.mxu0
  %v1523 = vadd.f32 0.0, %v1522
  %1524 = vmatmul.f32.gmra.mxu0 %v1461
  %v1525 = vpop.f32.mrf.mxu0
  %v1526 = vadd.f32 0.0, %v1525
  %1527 = vmatmul.f32.gmra.mxu0 %v1462
  %v1528 = vpop.f32.mrf.mxu0
  %v1529 = vadd.f32 0.0, %v1528
  %1530 = vmatmul.f32.gmra.mxu0 %v1463
  %v1531 = vpop.f32.mrf.mxu0
  %v1532 = vadd.f32 0.0, %v1531
  %1533 = vmatmul.f32.gmra.mxu0 %v1464
  %v1534 = vpop.f32.mrf.mxu0
  %v1535 = vadd.f32 0.0, %v1534
  %1536 = vmatmul.f32.gmra.mxu0 %v1465
  %v1537 = vpop.f32.mrf.mxu0
  %v1538 = vadd.f32 0.0, %v1537
  %1539 = vmatmul.f32.gmra.mxu0 %v1466
  %v1540 = vpop.f32.mrf.mxu0
  %v1541 = vadd.f32 0.0, %v1540
  %1542 = vmatmul.f32.gmra.mxu0 %v1467
  %v1543 = vpop.f32.mrf.mxu0
  %v1544 = vadd.f32 0.0, %v1543
  %1545 = vmatmul.f32.gmra.mxu0 %v1468
  %v1546 = vpop.f32.mrf.mxu0
  %v1547 = vadd.f32 0.0, %v1546
  %1548 = vdwg.mxu0
  %1549 = vmatpush.msra.mxu0 %v1501
  %1550 = vmatpush.msra.mxu0 %v1499
  %1551 = vmatpush.msra.mxu0 %v1497
  %1552 = vmatpush.msra.mxu0 %v1495
  %1553 = vmatpush.msra.mxu0 %v1493
  %1554 = vmatpush.msra.mxu0 %v1491
  %1555 = vmatpush.msra.mxu0 %v1489
  %1556 = vmatpush.msra.mxu0 %v1487
  %1557 = vmatpush.msra.mxu0 %v1485
  %1558 = vmatpush.msra.mxu0 %v1483
  %1559 = vmatpush.msra.mxu0 %v1481
  %1560 = vmatpush.msra.mxu0 %v1479
  %1561 = vmatpush.msra.mxu0 %v1477
  %1562 = vmatpush.msra.mxu0 %v1475
  %1563 = vmatpush.msra.mxu0 %v1473
  %1564 = vmatpush.msra.mxu0 %v1471
  %1565 = vmatmul.f32.gmra.mxu0 %v1459
  %v1566 = vpop.f32.mrf.mxu0
  %v1567 = vadd.f32 0.0, %v1566
  %1568 = vmatmul.f32.gmra.mxu0 %v1460
  %v1569 = vpop.f32.mrf.mxu0
  %v1570 = vadd.f32 0.0, %v1569
  %1571 = vmatmul.f32.gmra.mxu0 %v1461
  %v1572 = vpop.f32.mrf.mxu0
  %v1573 = vadd.f32 0.0, %v1572
  %1574 = vmatmul.f32.gmra.mxu0 %v1462
  %v1575 = vpop.f32.mrf.mxu0
  %v1576 = vadd.f32 0.0, %v1575
  %1577 = vmatmul.f32.gmra.mxu0 %v1463
  %v1578 = vpop.f32.mrf.mxu0
  %v1579 = vadd.f32 0.0, %v1578
  %1580 = vmatmul.f32.gmra.mxu0 %v1464
  %v1581 = vpop.f32.mrf.mxu0
  %v1582 = vadd.f32 0.0, %v1581
  %1583 = vmatmul.f32.gmra.mxu0 %v1465
  %v1584 = vpop.f32.mrf.mxu0
  %v1585 = vadd.f32 0.0, %v1584
  %1586 = vmatmul.f32.gmra.mxu0 %v1466
  %v1587 = vpop.f32.mrf.mxu0
  %v1588 = vadd.f32 0.0, %v1587
  %1589 = vmatmul.f32.gmra.mxu0 %v1467
  %v1590 = vpop.f32.mrf.mxu0
  %v1591 = vadd.f32 0.0, %v1590
  %1592 = vmatmul.f32.gmra.mxu0 %v1468
  %v1593 = vpop.f32.mrf.mxu0
  %v1594 = vadd.f32 0.0, %v1593
  %1595 = vdwg.mxu0
  %v1596 = vadd.f32 %v1383, %v1520
  %v1597 = vadd.f32 %v1430, %v1567
  %v1598 = vadd.f32 %v1386, %v1523
  %v1599 = vadd.f32 %v1433, %v1570
  %v1600 = vadd.f32 %v1389, %v1526
  %v1601 = vadd.f32 %v1436, %v1573
  %v1602 = vadd.f32 %v1392, %v1529
  %v1603 = vadd.f32 %v1439, %v1576
  %v1604 = vadd.f32 %v1395, %v1532
  %v1605 = vadd.f32 %v1442, %v1579
  %v1606 = vadd.f32 %v1398, %v1535
  %v1607 = vadd.f32 %v1445, %v1582
  %v1608 = vadd.f32 %v1401, %v1538
  %v1609 = vadd.f32 %v1448, %v1585
  %v1610 = vadd.f32 %v1404, %v1541
  %v1611 = vadd.f32 %v1451, %v1588
  %v1612 = vadd.f32 %v1407, %v1544
  %v1613 = vadd.f32 %v1454, %v1591
  %v1614 = vadd.f32 %v1410, %v1547
  %v1615 = vadd.f32 %v1457, %v1594
  %v1616 = vld [vmem:[#allocation2 + $0x18] sm:$0xff]
  %v1617 = vld [vmem:[#allocation2 + $0x20] sm:$0xff]
  %v1618 = vld [vmem:[#allocation2 + $0x28] sm:$0xff]
  %v1619 = vld [vmem:[#allocation2 + $0x30] sm:$0xff]
  %v1620 = vld [vmem:[#allocation2 + $0x38] sm:$0xff]
  %v1621 = vld [vmem:[#allocation2 + $0x40] sm:$0xff]
  %v1622 = vld [vmem:[#allocation2 + $0x48] sm:$0xff]
  %v1623 = vld [vmem:[#allocation2 + $0x50] sm:$0xff]
  %v1624 = vld [vmem:[#allocation2 + $0x58] sm:$0xff]
  %v1625 = vld [vmem:[#allocation2 + $0x60] sm:$0xff]
  %s1626 = scalar_lea.vmem %s4, 768
  %v1627 = vld [vmem:[%s1626] sm:$0xff]
  %v1628 = vld [vmem:[%s1626 + $0x8] sm:$0xff]
  %v1629 = vld [vmem:[%s1626 + $0x10] sm:$0xff]
  %v1630 = vld [vmem:[%s1626 + $0x18] sm:$0xff]
  %v1631 = vld [vmem:[%s1626 + $0x20] sm:$0xff]
  %v1632 = vld [vmem:[%s1626 + $0x28] sm:$0xff]
  %v1633 = vld [vmem:[%s1626 + $0x30] sm:$0xff]
  %v1634 = vld [vmem:[%s1626 + $0x38] sm:$0xff]
  %v1635 = vld [vmem:[%s1626 + $0x40] sm:$0xff]
  %v1636 = vld [vmem:[%s1626 + $0x48] sm:$0xff]
  %v1637 = vld [vmem:[%s1626 + $0x50] sm:$0xff]
  %v1638 = vld [vmem:[%s1626 + $0x58] sm:$0xff]
  %v1639 = vld [vmem:[%s1626 + $0x60] sm:$0xff]
  %v1640 = vld [vmem:[%s1626 + $0x68] sm:$0xff]
  %v1641 = vld [vmem:[%s1626 + $0x70] sm:$0xff]
  %v1642 = vld [vmem:[%s1626 + $0x78] sm:$0xff]
  %v1643 = vld [vmem:[%s1626 + $0x80] sm:$0xff]
  %v1644 = vld [vmem:[%s1626 + $0x88] sm:$0xff]
  %v1645 = vld [vmem:[%s1626 + $0x90] sm:$0xff]
  %v1646 = vld [vmem:[%s1626 + $0x98] sm:$0xff]
  %v1647 = vld [vmem:[%s1626 + $0xa0] sm:$0xff]
  %v1648 = vld [vmem:[%s1626 + $0xa8] sm:$0xff]
  %v1649 = vld [vmem:[%s1626 + $0xb0] sm:$0xff]
  %v1650 = vld [vmem:[%s1626 + $0xb8] sm:$0xff]
  %v1651 = vld [vmem:[%s1626 + $0xc0] sm:$0xff]
  %v1652 = vld [vmem:[%s1626 + $0xc8] sm:$0xff]
  %v1653 = vld [vmem:[%s1626 + $0xd0] sm:$0xff]
  %v1654 = vld [vmem:[%s1626 + $0xd8] sm:$0xff]
  %v1655 = vld [vmem:[%s1626 + $0xe0] sm:$0xff]
  %v1656 = vld [vmem:[%s1626 + $0xe8] sm:$0xff]
  %v1657 = vld [vmem:[%s1626 + $0xf0] sm:$0xff]
  %v1658 = vld [vmem:[%s1626 + $0xf8] sm:$0xff]
  %1659 = vmatpush.msra.mxu0 %v1657
  %1660 = vmatpush.msra.mxu0 %v1655
  %1661 = vmatpush.msra.mxu0 %v1653
  %1662 = vmatpush.msra.mxu0 %v1651
  %1663 = vmatpush.msra.mxu0 %v1649
  %1664 = vmatpush.msra.mxu0 %v1647
  %1665 = vmatpush.msra.mxu0 %v1645
  %1666 = vmatpush.msra.mxu0 %v1643
  %1667 = vmatpush.msra.mxu0 %v1641
  %1668 = vmatpush.msra.mxu0 %v1639
  %1669 = vmatpush.msra.mxu0 %v1637
  %1670 = vmatpush.msra.mxu0 %v1635
  %1671 = vmatpush.msra.mxu0 %v1633
  %1672 = vmatpush.msra.mxu0 %v1631
  %1673 = vmatpush.msra.mxu0 %v1629
  %1674 = vmatpush.msra.mxu0 %v1627
  %1675 = vmatmul.f32.gmra.mxu0 %v1616
  %v1676 = vpop.f32.mrf.mxu0
  %v1677 = vadd.f32 0.0, %v1676
  %1678 = vmatmul.f32.gmra.mxu0 %v1617
  %v1679 = vpop.f32.mrf.mxu0
  %v1680 = vadd.f32 0.0, %v1679
  %1681 = vmatmul.f32.gmra.mxu0 %v1618
  %v1682 = vpop.f32.mrf.mxu0
  %v1683 = vadd.f32 0.0, %v1682
  %1684 = vmatmul.f32.gmra.mxu0 %v1619
  %v1685 = vpop.f32.mrf.mxu0
  %v1686 = vadd.f32 0.0, %v1685
  %1687 = vmatmul.f32.gmra.mxu0 %v1620
  %v1688 = vpop.f32.mrf.mxu0
  %v1689 = vadd.f32 0.0, %v1688
  %1690 = vmatmul.f32.gmra.mxu0 %v1621
  %v1691 = vpop.f32.mrf.mxu0
  %v1692 = vadd.f32 0.0, %v1691
  %1693 = vmatmul.f32.gmra.mxu0 %v1622
  %v1694 = vpop.f32.mrf.mxu0
  %v1695 = vadd.f32 0.0, %v1694
  %1696 = vmatmul.f32.gmra.mxu0 %v1623
  %v1697 = vpop.f32.mrf.mxu0
  %v1698 = vadd.f32 0.0, %v1697
  %1699 = vmatmul.f32.gmra.mxu0 %v1624
  %v1700 = vpop.f32.mrf.mxu0
  %v1701 = vadd.f32 0.0, %v1700
  %1702 = vmatmul.f32.gmra.mxu0 %v1625
  %v1703 = vpop.f32.mrf.mxu0
  %v1704 = vadd.f32 0.0, %v1703
  %1705 = vdwg.mxu0
  %1706 = vmatpush.msra.mxu0 %v1658
  %1707 = vmatpush.msra.mxu0 %v1656
  %1708 = vmatpush.msra.mxu0 %v1654
  %1709 = vmatpush.msra.mxu0 %v1652
  %1710 = vmatpush.msra.mxu0 %v1650
  %1711 = vmatpush.msra.mxu0 %v1648
  %1712 = vmatpush.msra.mxu0 %v1646
  %1713 = vmatpush.msra.mxu0 %v1644
  %1714 = vmatpush.msra.mxu0 %v1642
  %1715 = vmatpush.msra.mxu0 %v1640
  %1716 = vmatpush.msra.mxu0 %v1638
  %1717 = vmatpush.msra.mxu0 %v1636
  %1718 = vmatpush.msra.mxu0 %v1634
  %1719 = vmatpush.msra.mxu0 %v1632
  %1720 = vmatpush.msra.mxu0 %v1630
  %1721 = vmatpush.msra.mxu0 %v1628
  %1722 = vmatmul.f32.gmra.mxu0 %v1616
  %v1723 = vpop.f32.mrf.mxu0
  %v1724 = vadd.f32 0.0, %v1723
  %1725 = vmatmul.f32.gmra.mxu0 %v1617
  %v1726 = vpop.f32.mrf.mxu0
  %v1727 = vadd.f32 0.0, %v1726
  %1728 = vmatmul.f32.gmra.mxu0 %v1618
  %v1729 = vpop.f32.mrf.mxu0
  %v1730 = vadd.f32 0.0, %v1729
  %1731 = vmatmul.f32.gmra.mxu0 %v1619
  %v1732 = vpop.f32.mrf.mxu0
  %v1733 = vadd.f32 0.0, %v1732
  %1734 = vmatmul.f32.gmra.mxu0 %v1620
  %v1735 = vpop.f32.mrf.mxu0
  %v1736 = vadd.f32 0.0, %v1735
  %1737 = vmatmul.f32.gmra.mxu0 %v1621
  %v1738 = vpop.f32.mrf.mxu0
  %v1739 = vadd.f32 0.0, %v1738
  %1740 = vmatmul.f32.gmra.mxu0 %v1622
  %v1741 = vpop.f32.mrf.mxu0
  %v1742 = vadd.f32 0.0, %v1741
  %1743 = vmatmul.f32.gmra.mxu0 %v1623
  %v1744 = vpop.f32.mrf.mxu0
  %v1745 = vadd.f32 0.0, %v1744
  %1746 = vmatmul.f32.gmra.mxu0 %v1624
  %v1747 = vpop.f32.mrf.mxu0
  %v1748 = vadd.f32 0.0, %v1747
  %1749 = vmatmul.f32.gmra.mxu0 %v1625
  %v1750 = vpop.f32.mrf.mxu0
  %v1751 = vadd.f32 0.0, %v1750
  %1752 = vdwg.mxu0
  %v1753 = vadd.f32 %v1596, %v1677
  %v1754 = vadd.f32 %v1597, %v1724
  %v1755 = vadd.f32 %v1598, %v1680
  %v1756 = vadd.f32 %v1599, %v1727
  %v1757 = vadd.f32 %v1600, %v1683
  %v1758 = vadd.f32 %v1601, %v1730
  %v1759 = vadd.f32 %v1602, %v1686
  %v1760 = vadd.f32 %v1603, %v1733
  %v1761 = vadd.f32 %v1604, %v1689
  %v1762 = vadd.f32 %v1605, %v1736
  %v1763 = vadd.f32 %v1606, %v1692
  %v1764 = vadd.f32 %v1607, %v1739
  %v1765 = vadd.f32 %v1608, %v1695
  %v1766 = vadd.f32 %v1609, %v1742
  %v1767 = vadd.f32 %v1610, %v1698
  %v1768 = vadd.f32 %v1611, %v1745
  %v1769 = vadd.f32 %v1612, %v1701
  %v1770 = vadd.f32 %v1613, %v1748
  %v1771 = vadd.f32 %v1614, %v1704
  %v1772 = vadd.f32 %v1615, %v1751
  %v1773 = vld [vmem:[#allocation2 + $0x20] sm:$0xff]
  %v1774 = vld [vmem:[#allocation2 + $0x28] sm:$0xff]
  %v1775 = vld [vmem:[#allocation2 + $0x30] sm:$0xff]
  %v1776 = vld [vmem:[#allocation2 + $0x38] sm:$0xff]
  %v1777 = vld [vmem:[#allocation2 + $0x40] sm:$0xff]
  %v1778 = vld [vmem:[#allocation2 + $0x48] sm:$0xff]
  %v1779 = vld [vmem:[#allocation2 + $0x50] sm:$0xff]
  %v1780 = vld [vmem:[#allocation2 + $0x58] sm:$0xff]
  %v1781 = vld [vmem:[#allocation2 + $0x60] sm:$0xff]
  %v1782 = vld [vmem:[#allocation2 + $0x68] sm:$0xff]
  %s1783 = scalar_lea.vmem %s4, 1024
  %v1784 = vld [vmem:[%s1783] sm:$0xff]
  %v1785 = vld [vmem:[%s1783 + $0x8] sm:$0xff]
  %v1786 = vld [vmem:[%s1783 + $0x10] sm:$0xff]
  %v1787 = vld [vmem:[%s1783 + $0x18] sm:$0xff]
  %v1788 = vld [vmem:[%s1783 + $0x20] sm:$0xff]
  %v1789 = vld [vmem:[%s1783 + $0x28] sm:$0xff]
  %v1790 = vld [vmem:[%s1783 + $0x30] sm:$0xff]
  %v1791 = vld [vmem:[%s1783 + $0x38] sm:$0xff]
  %v1792 = vld [vmem:[%s1783 + $0x40] sm:$0xff]
  %v1793 = vld [vmem:[%s1783 + $0x48] sm:$0xff]
  %v1794 = vld [vmem:[%s1783 + $0x50] sm:$0xff]
  %v1795 = vld [vmem:[%s1783 + $0x58] sm:$0xff]
  %v1796 = vld [vmem:[%s1783 + $0x60] sm:$0xff]
  %v1797 = vld [vmem:[%s1783 + $0x68] sm:$0xff]
  %v1798 = vld [vmem:[%s1783 + $0x70] sm:$0xff]
  %v1799 = vld [vmem:[%s1783 + $0x78] sm:$0xff]
  %v1800 = vld [vmem:[%s1783 + $0x80] sm:$0xff]
  %v1801 = vld [vmem:[%s1783 + $0x88] sm:$0xff]
  %v1802 = vld [vmem:[%s1783 + $0x90] sm:$0xff]
  %v1803 = vld [vmem:[%s1783 + $0x98] sm:$0xff]
  %v1804 = vld [vmem:[%s1783 + $0xa0] sm:$0xff]
  %v1805 = vld [vmem:[%s1783 + $0xa8] sm:$0xff]
  %v1806 = vld [vmem:[%s1783 + $0xb0] sm:$0xff]
  %v1807 = vld [vmem:[%s1783 + $0xb8] sm:$0xff]
  %v1808 = vld [vmem:[%s1783 + $0xc0] sm:$0xff]
  %v1809 = vld [vmem:[%s1783 + $0xc8] sm:$0xff]
  %v1810 = vld [vmem:[%s1783 + $0xd0] sm:$0xff]
  %v1811 = vld [vmem:[%s1783 + $0xd8] sm:$0xff]
  %v1812 = vld [vmem:[%s1783 + $0xe0] sm:$0xff]
  %v1813 = vld [vmem:[%s1783 + $0xe8] sm:$0xff]
  %v1814 = vld [vmem:[%s1783 + $0xf0] sm:$0xff]
  %v1815 = vld [vmem:[%s1783 + $0xf8] sm:$0xff]
  %1816 = vmatpush.msra.mxu0 %v1814
  %1817 = vmatpush.msra.mxu0 %v1812
  %1818 = vmatpush.msra.mxu0 %v1810
  %1819 = vmatpush.msra.mxu0 %v1808
  %1820 = vmatpush.msra.mxu0 %v1806
  %1821 = vmatpush.msra.mxu0 %v1804
  %1822 = vmatpush.msra.mxu0 %v1802
  %1823 = vmatpush.msra.mxu0 %v1800
  %1824 = vmatpush.msra.mxu0 %v1798
  %1825 = vmatpush.msra.mxu0 %v1796
  %1826 = vmatpush.msra.mxu0 %v1794
  %1827 = vmatpush.msra.mxu0 %v1792
  %1828 = vmatpush.msra.mxu0 %v1790
  %1829 = vmatpush.msra.mxu0 %v1788
  %1830 = vmatpush.msra.mxu0 %v1786
  %1831 = vmatpush.msra.mxu0 %v1784
  %1832 = vmatmul.f32.gmra.mxu0 %v1773
  %v1833 = vpop.f32.mrf.mxu0
  %v1834 = vadd.f32 0.0, %v1833
  %1835 = vmatmul.f32.gmra.mxu0 %v1774
  %v1836 = vpop.f32.mrf.mxu0
  %v1837 = vadd.f32 0.0, %v1836
  %1838 = vmatmul.f32.gmra.mxu0 %v1775
  %v1839 = vpop.f32.mrf.mxu0
  %v1840 = vadd.f32 0.0, %v1839
  %1841 = vmatmul.f32.gmra.mxu0 %v1776
  %v1842 = vpop.f32.mrf.mxu0
  %v1843 = vadd.f32 0.0, %v1842
  %1844 = vmatmul.f32.gmra.mxu0 %v1777
  %v1845 = vpop.f32.mrf.mxu0
  %v1846 = vadd.f32 0.0, %v1845
  %1847 = vmatmul.f32.gmra.mxu0 %v1778
  %v1848 = vpop.f32.mrf.mxu0
  %v1849 = vadd.f32 0.0, %v1848
  %1850 = vmatmul.f32.gmra.mxu0 %v1779
  %v1851 = vpop.f32.mrf.mxu0
  %v1852 = vadd.f32 0.0, %v1851
  %1853 = vmatmul.f32.gmra.mxu0 %v1780
  %v1854 = vpop.f32.mrf.mxu0
  %v1855 = vadd.f32 0.0, %v1854
  %1856 = vmatmul.f32.gmra.mxu0 %v1781
  %v1857 = vpop.f32.mrf.mxu0
  %v1858 = vadd.f32 0.0, %v1857
  %1859 = vmatmul.f32.gmra.mxu0 %v1782
  %v1860 = vpop.f32.mrf.mxu0
  %v1861 = vadd.f32 0.0, %v1860
  %1862 = vdwg.mxu0
  %1863 = vmatpush.msra.mxu0 %v1815
  %1864 = vmatpush.msra.mxu0 %v1813
  %1865 = vmatpush.msra.mxu0 %v1811
  %1866 = vmatpush.msra.mxu0 %v1809
  %1867 = vmatpush.msra.mxu0 %v1807
  %1868 = vmatpush.msra.mxu0 %v1805
  %1869 = vmatpush.msra.mxu0 %v1803
  %1870 = vmatpush.msra.mxu0 %v1801
  %1871 = vmatpush.msra.mxu0 %v1799
  %1872 = vmatpush.msra.mxu0 %v1797
  %1873 = vmatpush.msra.mxu0 %v1795
  %1874 = vmatpush.msra.mxu0 %v1793
  %1875 = vmatpush.msra.mxu0 %v1791
  %1876 = vmatpush.msra.mxu0 %v1789
  %1877 = vmatpush.msra.mxu0 %v1787
  %1878 = vmatpush.msra.mxu0 %v1785
  %1879 = vmatmul.f32.gmra.mxu0 %v1773
  %v1880 = vpop.f32.mrf.mxu0
  %v1881 = vadd.f32 0.0, %v1880
  %1882 = vmatmul.f32.gmra.mxu0 %v1774
  %v1883 = vpop.f32.mrf.mxu0
  %v1884 = vadd.f32 0.0, %v1883
  %1885 = vmatmul.f32.gmra.mxu0 %v1775
  %v1886 = vpop.f32.mrf.mxu0
  %v1887 = vadd.f32 0.0, %v1886
  %1888 = vmatmul.f32.gmra.mxu0 %v1776
  %v1889 = vpop.f32.mrf.mxu0
  %v1890 = vadd.f32 0.0, %v1889
  %1891 = vmatmul.f32.gmra.mxu0 %v1777
  %v1892 = vpop.f32.mrf.mxu0
  %v1893 = vadd.f32 0.0, %v1892
  %1894 = vmatmul.f32.gmra.mxu0 %v1778
  %v1895 = vpop.f32.mrf.mxu0
  %v1896 = vadd.f32 0.0, %v1895
  %1897 = vmatmul.f32.gmra.mxu0 %v1779
  %v1898 = vpop.f32.mrf.mxu0
  %v1899 = vadd.f32 0.0, %v1898
  %1900 = vmatmul.f32.gmra.mxu0 %v1780
  %v1901 = vpop.f32.mrf.mxu0
  %v1902 = vadd.f32 0.0, %v1901
  %1903 = vmatmul.f32.gmra.mxu0 %v1781
  %v1904 = vpop.f32.mrf.mxu0
  %v1905 = vadd.f32 0.0, %v1904
  %1906 = vmatmul.f32.gmra.mxu0 %v1782
  %v1907 = vpop.f32.mrf.mxu0
  %v1908 = vadd.f32 0.0, %v1907
  %1909 = vdwg.mxu0
  %v1910 = vadd.f32 %v1753, %v1834
  %v1911 = vadd.f32 %v1754, %v1881
  %v1912 = vadd.f32 %v1755, %v1837
  %v1913 = vadd.f32 %v1756, %v1884
  %v1914 = vadd.f32 %v1757, %v1840
  %v1915 = vadd.f32 %v1758, %v1887
  %v1916 = vadd.f32 %v1759, %v1843
  %v1917 = vadd.f32 %v1760, %v1890
  %v1918 = vadd.f32 %v1761, %v1846
  %v1919 = vadd.f32 %v1762, %v1893
  %v1920 = vadd.f32 %v1763, %v1849
  %v1921 = vadd.f32 %v1764, %v1896
  %v1922 = vadd.f32 %v1765, %v1852
  %v1923 = vadd.f32 %v1766, %v1899
  %v1924 = vadd.f32 %v1767, %v1855
  %v1925 = vadd.f32 %v1768, %v1902
  %v1926 = vadd.f32 %v1769, %v1858
  %v1927 = vadd.f32 %v1770, %v1905
  %v1928 = vadd.f32 %v1771, %v1861
  %v1929 = vadd.f32 %v1772, %v1908
  %v1930 = vld [vmem:[%s5] sm:$0x3]
  %v1932 = vperm.slane %v1930, 0
  %v1933 = vperm.slane %v1930, 1
  %v1936 = vadd.f32 %v1910, %v1932
  %v1937 = vadd.f32 %v1911, %v1933
  %v1938 = vadd.f32 %v1912, %v1932
  %v1939 = vadd.f32 %v1913, %v1933
  %v1940 = vadd.f32 %v1914, %v1932
  %v1941 = vadd.f32 %v1915, %v1933
  %v1942 = vadd.f32 %v1916, %v1932
  %v1943 = vadd.f32 %v1917, %v1933
  %v1944 = vadd.f32 %v1918, %v1932
  %v1945 = vadd.f32 %v1919, %v1933
  %v1946 = vadd.f32 %v1920, %v1932
  %v1947 = vadd.f32 %v1921, %v1933
  %v1948 = vadd.f32 %v1922, %v1932
  %v1949 = vadd.f32 %v1923, %v1933
  %v1950 = vadd.f32 %v1924, %v1932
  %v1951 = vadd.f32 %v1925, %v1933
  %v1952 = vadd.f32 %v1926, %v1932
  %v1953 = vadd.f32 %v1927, %v1933
  %v1954 = vadd.f32 %v1928, %v1932
  %v1955 = vadd.f32 %v1929, %v1933
  %v1956 = vmul.f32 %v1936, 0.5
  %v1957 = vmul.f32 %v1937, 0.5
  %v1958 = vmul.f32 %v1938, 0.5
  %v1959 = vmul.f32 %v1939, 0.5
  %v1960 = vmul.f32 %v1940, 0.5
  %v1961 = vmul.f32 %v1941, 0.5
  %v1962 = vmul.f32 %v1942, 0.5
  %v1963 = vmul.f32 %v1943, 0.5
  %v1964 = vmul.f32 %v1944, 0.5
  %v1965 = vmul.f32 %v1945, 0.5
  %v1966 = vmul.f32 %v1946, 0.5
  %v1967 = vmul.f32 %v1947, 0.5
  %v1968 = vmul.f32 %v1948, 0.5
  %v1969 = vmul.f32 %v1949, 0.5
  %v1970 = vmul.f32 %v1950, 0.5
  %v1971 = vmul.f32 %v1951, 0.5
  %v1972 = vmul.f32 %v1952, 0.5
  %v1973 = vmul.f32 %v1953, 0.5
  %v1974 = vmul.f32 %v1954, 0.5
  %v1975 = vmul.f32 %v1955, 0.5
  %v1976 = vtanh.pop %v1956
  %v1977 = vtanh.pop %v1957
  %v1978 = vtanh.pop %v1958
  %v1979 = vtanh.pop %v1959
  %v1980 = vtanh.pop %v1960
  %v1981 = vtanh.pop %v1961
  %v1982 = vtanh.pop %v1962
  %v1983 = vtanh.pop %v1963
  %v1984 = vtanh.pop %v1964
  %v1985 = vtanh.pop %v1965
  %v1986 = vtanh.pop %v1966
  %v1987 = vtanh.pop %v1967
  %v1988 = vtanh.pop %v1968
  %v1989 = vtanh.pop %v1969
  %v1990 = vtanh.pop %v1970
  %v1991 = vtanh.pop %v1971
  %v1992 = vtanh.pop %v1972
  %v1993 = vtanh.pop %v1973
  %v1994 = vtanh.pop %v1974
  %v1995 = vtanh.pop %v1975
  %v1996 = vmul.f32 %v1976, 0.5
  %v1997 = vmul.f32 %v1977, 0.5
  %v1998 = vmul.f32 %v1978, 0.5
  %v1999 = vmul.f32 %v1979, 0.5
  %v2000 = vmul.f32 %v1980, 0.5
  %v2001 = vmul.f32 %v1981, 0.5
  %v2002 = vmul.f32 %v1982, 0.5
  %v2003 = vmul.f32 %v1983, 0.5
  %v2004 = vmul.f32 %v1984, 0.5
  %v2005 = vmul.f32 %v1985, 0.5
  %v2006 = vmul.f32 %v1986, 0.5
  %v2007 = vmul.f32 %v1987, 0.5
  %v2008 = vmul.f32 %v1988, 0.5
  %v2009 = vmul.f32 %v1989, 0.5
  %v2010 = vmul.f32 %v1990, 0.5
  %v2011 = vmul.f32 %v1991, 0.5
  %v2012 = vmul.f32 %v1992, 0.5
  %v2013 = vmul.f32 %v1993, 0.5
  %v2014 = vmul.f32 %v1994, 0.5
  %v2015 = vmul.f32 %v1995, 0.5
  %v2016 = vadd.f32 %v1996, 0.5
  %v2017 = vadd.f32 %v1997, 0.5
  %v2018 = vadd.f32 %v1998, 0.5
  %v2019 = vadd.f32 %v1999, 0.5
  %v2020 = vadd.f32 %v2000, 0.5
  %v2021 = vadd.f32 %v2001, 0.5
  %v2022 = vadd.f32 %v2002, 0.5
  %v2023 = vadd.f32 %v2003, 0.5
  %v2024 = vadd.f32 %v2004, 0.5
  %v2025 = vadd.f32 %v2005, 0.5
  %v2026 = vadd.f32 %v2006, 0.5
  %v2027 = vadd.f32 %v2007, 0.5
  %v2028 = vadd.f32 %v2008, 0.5
  %v2029 = vadd.f32 %v2009, 0.5
  %v2030 = vadd.f32 %v2010, 0.5
  %v2031 = vadd.f32 %v2011, 0.5
  %v2032 = vadd.f32 %v2012, 0.5
  %v2033 = vadd.f32 %v2013, 0.5
  %v2034 = vadd.f32 %v2014, 0.5
  %v2035 = vadd.f32 %v2015, 0.5
  %v2036 = vld [vmem:[%s6] sm:$0xff]
  %v2037 = vld [vmem:[%s6 + $0x8] sm:$0xff]
  %v2038 = vld [vmem:[%s6 + $0x10] sm:$0xff]
  %v2039 = vld [vmem:[%s6 + $0x18] sm:$0xff]
  %v2040 = vld [vmem:[%s6 + $0x20] sm:$0xff]
  %v2041 = vld [vmem:[%s6 + $0x28] sm:$0xff]
  %v2042 = vld [vmem:[%s6 + $0x30] sm:$0xff]
  %v2043 = vld [vmem:[%s6 + $0x38] sm:$0xff]
  %v2044 = vld [vmem:[%s6 + $0x40] sm:$0xff]
  %v2045 = vld [vmem:[%s6 + $0x48] sm:$0xff]
  %v2046 = vld [vmem:[%s6 + $0x50] sm:$0xff]
  %v2047 = vld [vmem:[%s6 + $0x58] sm:$0xff]
  %v2048 = vld [vmem:[%s6 + $0x60] sm:$0xff]
  %v2049 = vld [vmem:[%s6 + $0x68] sm:$0xff]
  %v2050 = vld [vmem:[%s6 + $0x70] sm:$0xff]
  %v2051 = vld [vmem:[%s6 + $0x78] sm:$0xff]
  %v2052 = vld [vmem:[%s6 + $0x80] sm:$0xff]
  %v2053 = vld [vmem:[%s6 + $0x88] sm:$0xff]
  %v2054 = vld [vmem:[%s6 + $0x90] sm:$0xff]
  %v2055 = vld [vmem:[%s6 + $0x98] sm:$0xff]
  %v2057 = vsel %vm146, %v2017, 0
  %v2060 = vsel %vm146, %v2019, 0
  %v2063 = vsel %vm146, %v2021, 0
  %v2066 = vsel %vm146, %v2023, 0
  %v2069 = vsel %vm146, %v2025, 0
  %v2072 = vsel %vm146, %v2027, 0
  %v2075 = vsel %vm146, %v2029, 0
  %v2078 = vsel %vm146, %v2031, 0
  %v2081 = vsel %vm146, %v2033, 0
  %v2084 = vsel %vm146, %v2035, 0
  %2086 = vmatpush.msra.mxu0 %v2051
  %2087 = vmatpush.msra.mxu0 %v2050
  %2088 = vmatpush.msra.mxu0 %v2049
  %2089 = vmatpush.msra.mxu0 %v2048
  %2090 = vmatpush.msra.mxu0 %v2047
  %2091 = vmatpush.msra.mxu0 %v2046
  %2092 = vmatpush.msra.mxu0 %v2045
  %2093 = vmatpush.msra.mxu0 %v2044
  %2094 = vmatpush.msra.mxu0 %v2043
  %2095 = vmatpush.msra.mxu0 %v2042
  %2096 = vmatpush.msra.mxu0 %v2041
  %2097 = vmatpush.msra.mxu0 %v2040
  %2098 = vmatpush.msra.mxu0 %v2039
  %2099 = vmatpush.msra.mxu0 %v2038
  %2100 = vmatpush.msra.mxu0 %v2037
  %2101 = vmatpush.msra.mxu0 %v2036
  %2102 = vmatmul.f32.gmra.mxu0 %v2016
  %v2103 = vpop.f32.mrf.mxu0
  %v2104 = vadd.f32 0.0, %v2103
  %2105 = vmatmul.f32.gmra.mxu0 %v2018
  %v2106 = vpop.f32.mrf.mxu0
  %v2107 = vadd.f32 0.0, %v2106
  %2108 = vmatmul.f32.gmra.mxu0 %v2020
  %v2109 = vpop.f32.mrf.mxu0
  %v2110 = vadd.f32 0.0, %v2109
  %2111 = vmatmul.f32.gmra.mxu0 %v2022
  %v2112 = vpop.f32.mrf.mxu0
  %v2113 = vadd.f32 0.0, %v2112
  %2114 = vmatmul.f32.gmra.mxu0 %v2024
  %v2115 = vpop.f32.mrf.mxu0
  %v2116 = vadd.f32 0.0, %v2115
  %2117 = vmatmul.f32.gmra.mxu0 %v2026
  %v2118 = vpop.f32.mrf.mxu0
  %v2119 = vadd.f32 0.0, %v2118
  %2120 = vmatmul.f32.gmra.mxu0 %v2028
  %v2121 = vpop.f32.mrf.mxu0
  %v2122 = vadd.f32 0.0, %v2121
  %2123 = vmatmul.f32.gmra.mxu0 %v2030
  %v2124 = vpop.f32.mrf.mxu0
  %v2125 = vadd.f32 0.0, %v2124
  %2126 = vmatmul.f32.gmra.mxu0 %v2032
  %v2127 = vpop.f32.mrf.mxu0
  %v2128 = vadd.f32 0.0, %v2127
  %2129 = vmatmul.f32.gmra.mxu0 %v2034
  %v2130 = vpop.f32.mrf.mxu0
  %v2131 = vadd.f32 0.0, %v2130
  %2132 = vdwg.mxu0
  %2133 = vmatpush.msra.mxu0 0.0
  %2134 = vmatpush.msra.mxu0 0.0
  %2135 = vmatpush.msra.mxu0 0.0
  %2136 = vmatpush.msra.mxu0 0.0
  %2137 = vmatpush.msra.mxu0 0.0
  %2138 = vmatpush.msra.mxu0 0.0
  %2139 = vmatpush.msra.mxu0 0.0
  %2140 = vmatpush.msra.mxu0 0.0
  %2141 = vmatpush.msra.mxu0 0.0
  %2142 = vmatpush.msra.mxu0 0.0
  %2143 = vmatpush.msra.mxu0 0.0
  %2144 = vmatpush.msra.mxu0 0.0
  %2145 = vmatpush.msra.mxu0 %v2055
  %2146 = vmatpush.msra.mxu0 %v2054
  %2147 = vmatpush.msra.mxu0 %v2053
  %2148 = vmatpush.msra.mxu0 %v2052
  %2149 = vmatmul.f32.gmra.mxu0 %v2057
  %v2150 = vpop.f32.mrf.mxu0
  %v2151 = vadd.f32 %v2104, %v2150
  %2152 = vmatmul.f32.gmra.mxu0 %v2060
  %v2153 = vpop.f32.mrf.mxu0
  %v2154 = vadd.f32 %v2107, %v2153
  %2155 = vmatmul.f32.gmra.mxu0 %v2063
  %v2156 = vpop.f32.mrf.mxu0
  %v2157 = vadd.f32 %v2110, %v2156
  %2158 = vmatmul.f32.gmra.mxu0 %v2066
  %v2159 = vpop.f32.mrf.mxu0
  %v2160 = vadd.f32 %v2113, %v2159
  %2161 = vmatmul.f32.gmra.mxu0 %v2069
  %v2162 = vpop.f32.mrf.mxu0
  %v2163 = vadd.f32 %v2116, %v2162
  %2164 = vmatmul.f32.gmra.mxu0 %v2072
  %v2165 = vpop.f32.mrf.mxu0
  %v2166 = vadd.f32 %v2119, %v2165
  %2167 = vmatmul.f32.gmra.mxu0 %v2075
  %v2168 = vpop.f32.mrf.mxu0
  %v2169 = vadd.f32 %v2122, %v2168
  %2170 = vmatmul.f32.gmra.mxu0 %v2078
  %v2171 = vpop.f32.mrf.mxu0
  %v2172 = vadd.f32 %v2125, %v2171
  %2173 = vmatmul.f32.gmra.mxu0 %v2081
  %v2174 = vpop.f32.mrf.mxu0
  %v2175 = vadd.f32 %v2128, %v2174
  %2176 = vmatmul.f32.gmra.mxu0 %v2084
  %v2177 = vpop.f32.mrf.mxu0
  %v2178 = vadd.f32 %v2131, %v2177
  %2179 = vdwg.mxu0
  %v2180 = vadd.f32 %v2151, %v2154
  %2181 = vst [vmem:[#allocation3] sm:$0xff] %v2180
  %v2182 = vadd.f32 %v2157, %v2160
  %2183 = vst [vmem:[#allocation3 + $0x8] sm:$0xff] %v2182
  %v2184 = vadd.f32 %v2163, %v2166
  %2185 = vst [vmem:[#allocation3 + $0x10] sm:$0xff] %v2184
  %v2186 = vadd.f32 %v2169, %v2172
  %2187 = vst [vmem:[#allocation3 + $0x18] sm:$0xff] %v2186
  %v2188 = vadd.f32 %v2175, %v2178
  %2189 = vst [vmem:[#allocation3 + $0x20] sm:$0xff] %v2188
  %v2190 = vld [vmem:[#allocation3] sm:$0xff]
  %v2191 = vld [vmem:[#allocation3 + $0x8] sm:$0xff]
  %v2192 = vld [vmem:[#allocation3 + $0x10] sm:$0xff]
  %v2193 = vld [vmem:[#allocation3 + $0x18] sm:$0xff]
  %v2194 = vld [vmem:[#allocation3 + $0x20] sm:$0xff]
  %v2195 = vld [vmem:[%s7] sm:$0xff]
  %v2196 = vld [vmem:[%s7 + $0x8] sm:$0xff]
  %v2197 = vld [vmem:[%s7 + $0x10] sm:$0xff]
  %v2198 = vld [vmem:[%s7 + $0x18] sm:$0xff]
  %v2199 = vld [vmem:[%s7 + $0x20] sm:$0xff]
  %v2200 = vld [vmem:[%s7 + $0x28] sm:$0xff]
  %v2201 = vld [vmem:[%s7 + $0x30] sm:$0xff]
  %v2202 = vld [vmem:[%s7 + $0x38] sm:$0xff]
  %v2203 = vld [vmem:[%s7 + $0x40] sm:$0xff]
  %v2204 = vld [vmem:[%s7 + $0x48] sm:$0xff]
  %v2205 = vld [vmem:[%s7 + $0x50] sm:$0xff]
  %v2206 = vld [vmem:[%s7 + $0x58] sm:$0xff]
  %v2207 = vld [vmem:[%s7 + $0x60] sm:$0xff]
  %v2208 = vld [vmem:[%s7 + $0x68] sm:$0xff]
  %v2209 = vld [vmem:[%s7 + $0x70] sm:$0xff]
  %v2210 = vld [vmem:[%s7 + $0x78] sm:$0xff]
  %v2211 = vld [vmem:[%s7 + $0x80] sm:$0xff]
  %v2212 = vld [vmem:[%s7 + $0x88] sm:$0xff]
  %v2213 = vld [vmem:[%s7 + $0x90] sm:$0xff]
  %v2214 = vld [vmem:[%s7 + $0x98] sm:$0xff]
  %v2215 = vld [vmem:[%s7 + $0xa0] sm:$0xff]
  %v2216 = vld [vmem:[%s7 + $0xa8] sm:$0xff]
  %v2217 = vld [vmem:[%s7 + $0xb0] sm:$0xff]
  %v2218 = vld [vmem:[%s7 + $0xb8] sm:$0xff]
  %v2219 = vld [vmem:[%s7 + $0xc0] sm:$0xff]
  %v2220 = vld [vmem:[%s7 + $0xc8] sm:$0xff]
  %v2221 = vld [vmem:[%s7 + $0xd0] sm:$0xff]
  %v2222 = vld [vmem:[%s7 + $0xd8] sm:$0xff]
  %v2223 = vld [vmem:[%s7 + $0xe0] sm:$0xff]
  %v2224 = vld [vmem:[%s7 + $0xe8] sm:$0xff]
  %v2225 = vld [vmem:[%s7 + $0xf0] sm:$0xff]
  %v2226 = vld [vmem:[%s7 + $0xf8] sm:$0xff]
  %v2227 = vld [vmem:[%s7 + $0x100] sm:$0xff]
  %v2228 = vld [vmem:[%s7 + $0x108] sm:$0xff]
  %v2229 = vld [vmem:[%s7 + $0x110] sm:$0xff]
  %v2230 = vld [vmem:[%s7 + $0x118] sm:$0xff]
  %v2231 = vld [vmem:[%s7 + $0x120] sm:$0xff]
  %v2232 = vld [vmem:[%s7 + $0x128] sm:$0xff]
  %v2233 = vld [vmem:[%s7 + $0x130] sm:$0xff]
  %v2234 = vld [vmem:[%s7 + $0x138] sm:$0xff]
  %v2235 = vld [vmem:[%s7 + $0x140] sm:$0xff]
  %v2236 = vld [vmem:[%s7 + $0x148] sm:$0xff]
  %v2237 = vld [vmem:[%s7 + $0x150] sm:$0xff]
  %v2238 = vld [vmem:[%s7 + $0x158] sm:$0xff]
  %v2239 = vld [vmem:[%s7 + $0x160] sm:$0xff]
  %v2240 = vld [vmem:[%s7 + $0x168] sm:$0xff]
  %v2241 = vld [vmem:[%s7 + $0x170] sm:$0xff]
  %v2242 = vld [vmem:[%s7 + $0x178] sm:$0xff]
  %v2243 = vld [vmem:[%s7 + $0x180] sm:$0xff]
  %v2244 = vld [vmem:[%s7 + $0x188] sm:$0xff]
  %v2245 = vld [vmem:[%s7 + $0x190] sm:$0xff]
  %v2246 = vld [vmem:[%s7 + $0x198] sm:$0xff]
  %v2247 = vld [vmem:[%s7 + $0x1a0] sm:$0xff]
  %v2248 = vld [vmem:[%s7 + $0x1a8] sm:$0xff]
  %v2249 = vld [vmem:[%s7 + $0x1b0] sm:$0xff]
  %v2250 = vld [vmem:[%s7 + $0x1b8] sm:$0xff]
  %v2251 = vld [vmem:[%s7 + $0x1c0] sm:$0xff]
  %v2252 = vld [vmem:[%s7 + $0x1c8] sm:$0xff]
  %v2253 = vld [vmem:[%s7 + $0x1d0] sm:$0xff]
  %v2254 = vld [vmem:[%s7 + $0x1d8] sm:$0xff]
  %v2255 = vld [vmem:[%s7 + $0x1e0] sm:$0xff]
  %v2256 = vld [vmem:[%s7 + $0x1e8] sm:$0xff]
  %v2257 = vld [vmem:[%s7 + $0x1f0] sm:$0xff]
  %v2258 = vld [vmem:[%s7 + $0x1f8] sm:$0xff]
  %v2259 = vld [vmem:[%s7 + $0x200] sm:$0xff]
  %v2260 = vld [vmem:[%s7 + $0x208] sm:$0xff]
  %v2261 = vld [vmem:[%s7 + $0x210] sm:$0xff]
  %v2262 = vld [vmem:[%s7 + $0x218] sm:$0xff]
  %v2263 = vld [vmem:[%s7 + $0x220] sm:$0xff]
  %v2264 = vld [vmem:[%s7 + $0x228] sm:$0xff]
  %v2265 = vld [vmem:[%s7 + $0x230] sm:$0xff]
  %v2266 = vld [vmem:[%s7 + $0x238] sm:$0xff]
  %v2267 = vld [vmem:[%s7 + $0x240] sm:$0xff]
  %v2268 = vld [vmem:[%s7 + $0x248] sm:$0xff]
  %v2269 = vld [vmem:[%s7 + $0x250] sm:$0xff]
  %v2270 = vld [vmem:[%s7 + $0x258] sm:$0xff]
  %v2271 = vld [vmem:[%s7 + $0x260] sm:$0xff]
  %v2272 = vld [vmem:[%s7 + $0x268] sm:$0xff]
  %v2273 = vld [vmem:[%s7 + $0x270] sm:$0xff]
  %v2274 = vld [vmem:[%s7 + $0x278] sm:$0xff]
  %v2275 = vld [vmem:[%s8] sm:$0x1]
  %v2277 = vperm.slane %v2275, 0
  %2279 = vmatpush.msra.mxu0 %v2210
  %2280 = vmatpush.msra.mxu0 %v2209
  %2281 = vmatpush.msra.mxu0 %v2208
  %2282 = vmatpush.msra.mxu0 %v2207
  %2283 = vmatpush.msra.mxu0 %v2206
  %2284 = vmatpush.msra.mxu0 %v2205
  %2285 = vmatpush.msra.mxu0 %v2204
  %2286 = vmatpush.msra.mxu0 %v2203
  %2287 = vmatpush.msra.mxu0 %v2202
  %2288 = vmatpush.msra.mxu0 %v2201
  %2289 = vmatpush.msra.mxu0 %v2200
  %2290 = vmatpush.msra.mxu0 %v2199
  %2291 = vmatpush.msra.mxu0 %v2198
  %2292 = vmatpush.msra.mxu0 %v2197
  %2293 = vmatpush.msra.mxu0 %v2196
  %2294 = vmatpush.msra.mxu0 %v2195
  %2295 = vmatmul.f32.gmra.mxu0 %v2190
  %v2296 = vpop.f32.mrf.mxu0
  %v2297 = vadd.f32 %v2277, %v2296
  %2298 = vdwg.mxu0
  %2299 = vmatpush.msra.mxu0 %v2226
  %2300 = vmatpush.msra.mxu0 %v2225
  %2301 = vmatpush.msra.mxu0 %v2224
  %2302 = vmatpush.msra.mxu0 %v2223
  %2303 = vmatpush.msra.mxu0 %v2222
  %2304 = vmatpush.msra.mxu0 %v2221
  %2305 = vmatpush.msra.mxu0 %v2220
  %2306 = vmatpush.msra.mxu0 %v2219
  %2307 = vmatpush.msra.mxu0 %v2218
  %2308 = vmatpush.msra.mxu0 %v2217
  %2309 = vmatpush.msra.mxu0 %v2216
  %2310 = vmatpush.msra.mxu0 %v2215
  %2311 = vmatpush.msra.mxu0 %v2214
  %2312 = vmatpush.msra.mxu0 %v2213
  %2313 = vmatpush.msra.mxu0 %v2212
  %2314 = vmatpush.msra.mxu0 %v2211
  %2315 = vmatmul.f32.gmra.mxu0 %v2191
  %v2316 = vpop.f32.mrf.mxu0
  %v2317 = vadd.f32 %v2297, %v2316
  %2318 = vdwg.mxu0
  %2319 = vmatpush.msra.mxu0 %v2242
  %2320 = vmatpush.msra.mxu0 %v2241
  %2321 = vmatpush.msra.mxu0 %v2240
  %2322 = vmatpush.msra.mxu0 %v2239
  %2323 = vmatpush.msra.mxu0 %v2238
  %2324 = vmatpush.msra.mxu0 %v2237
  %2325 = vmatpush.msra.mxu0 %v2236
  %2326 = vmatpush.msra.mxu0 %v2235
  %2327 = vmatpush.msra.mxu0 %v2234
  %2328 = vmatpush.msra.mxu0 %v2233
  %2329 = vmatpush.msra.mxu0 %v2232
  %2330 = vmatpush.msra.mxu0 %v2231
  %2331 = vmatpush.msra.mxu0 %v2230
  %2332 = vmatpush.msra.mxu0 %v2229
  %2333 = vmatpush.msra.mxu0 %v2228
  %2334 = vmatpush.msra.mxu0 %v2227
  %2335 = vmatmul.f32.gmra.mxu0 %v2192
  %v2336 = vpop.f32.mrf.mxu0
  %v2337 = vadd.f32 %v2317, %v2336
  %2338 = vdwg.mxu0
  %2339 = vmatpush.msra.mxu0 %v2258
  %2340 = vmatpush.msra.mxu0 %v2257
  %2341 = vmatpush.msra.mxu0 %v2256
  %2342 = vmatpush.msra.mxu0 %v2255
  %2343 = vmatpush.msra.mxu0 %v2254
  %2344 = vmatpush.msra.mxu0 %v2253
  %2345 = vmatpush.msra.mxu0 %v2252
  %2346 = vmatpush.msra.mxu0 %v2251
  %2347 = vmatpush.msra.mxu0 %v2250
  %2348 = vmatpush.msra.mxu0 %v2249
  %2349 = vmatpush.msra.mxu0 %v2248
  %2350 = vmatpush.msra.mxu0 %v2247
  %2351 = vmatpush.msra.mxu0 %v2246
  %2352 = vmatpush.msra.mxu0 %v2245
  %2353 = vmatpush.msra.mxu0 %v2244
  %2354 = vmatpush.msra.mxu0 %v2243
  %2355 = vmatmul.f32.gmra.mxu0 %v2193
  %v2356 = vpop.f32.mrf.mxu0
  %v2357 = vadd.f32 %v2337, %v2356
  %2358 = vdwg.mxu0
  %2359 = vmatpush.msra.mxu0 %v2274
  %2360 = vmatpush.msra.mxu0 %v2273
  %2361 = vmatpush.msra.mxu0 %v2272
  %2362 = vmatpush.msra.mxu0 %v2271
  %2363 = vmatpush.msra.mxu0 %v2270
  %2364 = vmatpush.msra.mxu0 %v2269
  %2365 = vmatpush.msra.mxu0 %v2268
  %2366 = vmatpush.msra.mxu0 %v2267
  %2367 = vmatpush.msra.mxu0 %v2266
  %2368 = vmatpush.msra.mxu0 %v2265
  %2369 = vmatpush.msra.mxu0 %v2264
  %2370 = vmatpush.msra.mxu0 %v2263
  %2371 = vmatpush.msra.mxu0 %v2262
  %2372 = vmatpush.msra.mxu0 %v2261
  %2373 = vmatpush.msra.mxu0 %v2260
  %2374 = vmatpush.msra.mxu0 %v2259
  %2375 = vmatmul.f32.gmra.mxu0 %v2194
  %v2376 = vpop.f32.mrf.mxu0
  %v2377 = vadd.f32 %v2357, %v2376
  %2378 = vdwg.mxu0
  %v2379 = vmul.f32 %v2377, 0.5
  %v2380 = vtanh.pop %v2379
  %v2381 = vmul.f32 %v2380, 0.5
  %v2382 = vadd.f32 %v2381, 0.5
  %v2383 = vld [vmem:[%s9] sm:$0xff]
  %v2384 = vld [vmem:[%s9 + $0x8] sm:$0xff]
  %v2385 = vld [vmem:[%s9 + $0x10] sm:$0xff]
  %v2386 = vld [vmem:[%s9 + $0x18] sm:$0xff]
  %v2387 = vld [vmem:[%s9 + $0x20] sm:$0xff]
  %v2388 = vld [vmem:[%s9 + $0x28] sm:$0xff]
  %v2389 = vld [vmem:[%s9 + $0x30] sm:$0xff]
  %v2390 = vld [vmem:[%s9 + $0x38] sm:$0xff]
  %v2391 = vld [vmem:[%s9 + $0x40] sm:$0xff]
  %v2392 = vld [vmem:[%s9 + $0x48] sm:$0xff]
  %v2393 = vld [vmem:[%s9 + $0x50] sm:$0xff]
  %v2394 = vld [vmem:[%s9 + $0x58] sm:$0xff]
  %v2395 = vld [vmem:[%s9 + $0x60] sm:$0xff]
  %v2396 = vld [vmem:[%s9 + $0x68] sm:$0xff]
  %v2397 = vld [vmem:[%s9 + $0x70] sm:$0xff]
  %v2398 = vld [vmem:[%s10] sm:$0x1]
  %v2400 = vperm.slane %v2398, 0
  %vm2402 = vcmask 982016
  %v2404 = vsel %vm2402, %v2382, 0
  %2406 = vmatpush.msra.mxu0 0.0
  %2407 = vmatpush.msra.mxu0 %v2397
  %2408 = vmatpush.msra.mxu0 %v2396
  %2409 = vmatpush.msra.mxu0 %v2395
  %2410 = vmatpush.msra.mxu0 %v2394
  %2411 = vmatpush.msra.mxu0 %v2393
  %2412 = vmatpush.msra.mxu0 %v2392
  %2413 = vmatpush.msra.mxu0 %v2391
  %2414 = vmatpush.msra.mxu0 %v2390
  %2415 = vmatpush.msra.mxu0 %v2389
  %2416 = vmatpush.msra.mxu0 %v2388
  %2417 = vmatpush.msra.mxu0 %v2387
  %2418 = vmatpush.msra.mxu0 %v2386
  %2419 = vmatpush.msra.mxu0 %v2385
  %2420 = vmatpush.msra.mxu0 %v2384
  %2421 = vmatpush.msra.mxu0 %v2383
  %2422 = vmatmul.f32.gmra.mxu0 %v2404
  %v2423 = vpop.f32.mrf.mxu0
  %v2424 = vadd.f32 %v2400, %v2423
  %2425 = vdwg.mxu0
  %v2426 = vmul.f32 %v2424, 0.5
  %v2427 = vtanh.pop %v2426
  %v2428 = vmul.f32 %v2427, 0.5
  %v2429 = vadd.f32 %v2428, 0.5
  %v2430 = vld [vmem:[%s11] sm:$0xff]
  %v2431 = vld [vmem:[%s11 + $0x8] sm:$0xff]
  %v2432 = vld [vmem:[%s11 + $0x10] sm:$0xff]
  %v2433 = vld [vmem:[%s11 + $0x18] sm:$0xff]
  %v2434 = vld [vmem:[%s11 + $0x20] sm:$0xff]
  %v2435 = vld [vmem:[%s11 + $0x28] sm:$0xff]
  %v2436 = vld [vmem:[%s11 + $0x30] sm:$0xff]
  %v2437 = vld [vmem:[%s11 + $0x38] sm:$0xff]
  %v2438 = vld [vmem:[%s11 + $0x40] sm:$0xff]
  %v2439 = vld [vmem:[%s11 + $0x48] sm:$0xff]
  %v2440 = vld [vmem:[%s11 + $0x50] sm:$0xf]
  %v2441 = vld [vmem:[%s12] sm:$0x1]
  %v2443 = vperm.slane %v2441, 0
  %vm2445 = vcmask 687104
  %v2447 = vsel %vm2445, %v2429, 0
  %vm2449 = vcmask 1043456
  %v2451 = vsel %vm2449, %v2440, 0
  %2453 = vmatpush.msra.mxu0 0.0
  %2454 = vmatpush.msra.mxu0 0.0
  %2455 = vmatpush.msra.mxu0 0.0
  %2456 = vmatpush.msra.mxu0 0.0
  %2457 = vmatpush.msra.mxu0 0.0
  %2458 = vmatpush.msra.mxu0 %v2451
  %2459 = vmatpush.msra.mxu0 %v2439
  %2460 = vmatpush.msra.mxu0 %v2438
  %2461 = vmatpush.msra.mxu0 %v2437
  %2462 = vmatpush.msra.mxu0 %v2436
  %2463 = vmatpush.msra.mxu0 %v2435
  %2464 = vmatpush.msra.mxu0 %v2434
  %2465 = vmatpush.msra.mxu0 %v2433
  %2466 = vmatpush.msra.mxu0 %v2432
  %2467 = vmatpush.msra.mxu0 %v2431
  %2468 = vmatpush.msra.mxu0 %v2430
  %2469 = vmatmul.f32.gmra.mxu0 %v2447
  %v2470 = vpop.f32.mrf.mxu0
  %v2471 = vadd.f32 %v2443, %v2470
  %2472 = vdwg.mxu0
  %vm2473 = vcmask 80896
  %2474 = vst.msk [vmem:[%s13] sm:$0xff] %vm2473, %v2471
  // Predicated region
  $region54: #{lenet5_forward.1} parent=0 // pred_check
    _
  $region55: #{lenet5_forward.1} parent=0 // pred_check_branch
    %2476 = sbr.rel (0) target = $region57
  $region56: #{lenet5_forward.1} parent=0 // pred_region
    _
  $region57: #{lenet5_forward.1} parent=0 // pred_fallthru
    _
  // Predicated region
  $region58: #{lenet5_forward.1} parent=0 // pred_check
    _
  $region59: #{lenet5_forward.1} parent=0 // pred_check_branch
    %2478 = sbr.rel (0) target = $region61
  $region60: #{lenet5_forward.1} parent=0 // pred_region
    _
  $region61: #{lenet5_forward.1} parent=0 // pred_fallthru
    _

</llo_original>
